<compile_context>
chip_gen: v6e
topology: v6e:2x2x1
jax: 0.10.0
libtpu: 0.0.40
codegen_flags: <defaults>
</compile_context>

<pallas_src>
import jax
import jax.numpy as jnp
import numpy as np
from jax.experimental import pallas as pl
from jax.experimental.pallas import tpu as pltpu

# ---------------- configuration (small synthetic shapes) ----------------
B, C_IN, H, W = 2, 4, 16, 16        # images: [B, C_IN, H, W] (NCHW, PyTorch convention)
C_FEAT = 32                         # backbone feature channels (= classifier.in_features)
K = 3                               # conv kernel size, stride 1, pad 1
HID = C_FEAT // 2                   # first classifier layer: in_features // 2
OUT_CLASSES = 8                     # num classes
OUT_PAD = 128                       # lane-dense output (only dim padded to 128)

PH, PW = H + 2 * (K // 2), W + 2 * (K // 2)       # spatially padded image dims (18, 18)
RW = H * PW                                       # "working" conv rows = 288 (incl. 2 junk cols/row)
# flattened padded image rows; must cover the largest shifted window and be a sublane multiple of 8
NP = ((max(PH * PW, (K - 1) * PW + (K - 1) + RW) + 7) // 8) * 8   # = 328
assert NP >= PH * PW and (K - 1) * PW + (K - 1) + RW <= NP


# ---------------- fused Pallas kernel: conv stem -> GAP -> classifier head ----------------
def fused_kernel(xp_ref, msk_ref, wc_ref, bc_ref, w1_ref, b1_ref, w2_ref, b2_ref, o_ref):
    # grid = (B,): one step per batch element (batch axis "parallel" -> one image per TC on v7x).
    # 3x3 conv as 9 statically shifted windows of the flattened zero-padded image (in-kernel im2col):
    # window for tap (kh, kw) is rows [kh*PW + kw, kh*PW + kw + RW) of xp.
    acc = jnp.zeros((RW, C_FEAT), jnp.float32)
    for t in range(K * K):
        kh, kw = t // K, t % K
        off = kh * PW + kw                                          # static sublane offset
        win = xp_ref[pl.ds(off, RW), :]                             # (RW, C_IN) shifted view
        acc = acc + jnp.dot(win, wc_ref[t], preferred_element_type=jnp.float32)
    feat = jnp.maximum(acc + bc_ref[...], 0.0)                      # (RW, C_FEAT), bias + ReLU

    # masked global average pool in one MXU dot: mask is 1/(H*W) on real pixels, 0 on width-pad rows.
    pooled = jnp.dot(msk_ref[...], feat, preferred_element_type=jnp.float32)   # (1, C_FEAT)

    # classifier head (Dropout layers are identity at inference).
    h1 = jnp.dot(pooled, w1_ref[...], preferred_element_type=jnp.float32) + b1_ref[...]      # (1, HID)
    logits = jnp.dot(h1, w2_ref[...], preferred_element_type=jnp.float32) + b2_ref[...]      # (1, OUT_PAD)
    o_ref[...] = logits                                             # lane-dense (1, 128) store


# ---------------- parameter prep (one-time, hoisted out of the forward) ----------------
def prepare_params(params):
    """Re-layout conv weight per tap, pad only the final output dim to 128, build the pool mask."""
    # conv_w: (C_FEAT, C_IN, K, K) -> (K*K, C_IN, C_FEAT); tap index t = kh*K + kw
    wc = jnp.transpose(params['conv_w'], (2, 3, 1, 0)).reshape(K * K, C_IN, C_FEAT)
    bc = params['conv_b'].reshape(1, C_FEAT)
    w1 = params['w1']                                               # (C_FEAT, HID), unpadded
    b1 = params['b1'].reshape(1, HID)
    w2 = jnp.pad(params['w2'], ((0, 0), (0, OUT_PAD - OUT_CLASSES)))            # (HID, 128)
    b2 = jnp.pad(params['b2'].reshape(1, OUT_CLASSES), ((0, 0), (0, OUT_PAD - OUT_CLASSES)))
    # pool mask over the RW working rows: 1/(H*W) where the row is a real pixel (col < W), else 0.
    row = jnp.arange(RW, dtype=jnp.int32)
    msk = jnp.where((row % PW) < W, 1.0 / (H * W), 0.0).astype(jnp.float32).reshape(1, RW)
    return dict(msk=msk, wc=wc, bc=bc, w1=w1, b1=b1, w2=w2, b2=b2)


def init_params(key):
    ks = jax.random.split(key, 6)
    kd = C_IN * K * K
    conv_w = jax.random.normal(ks[0], (C_FEAT, C_IN, K, K), jnp.float32) * (1.0 / np.sqrt(kd))
    conv_b = jax.random.normal(ks[1], (C_FEAT,), jnp.float32) * 0.01
    # Linear weights stored as (in, out) (torch weight transposed)
    w1 = jax.random.normal(ks[2], (C_FEAT, HID), jnp.float32) * (1.0 / np.sqrt(C_FEAT))
    b1 = jax.random.normal(ks[3], (HID,), jnp.float32) * 0.01
    w2 = jax.random.normal(ks[4], (HID, OUT_CLASSES), jnp.float32) * (1.0 / np.sqrt(HID))
    b2 = jax.random.normal(ks[5], (OUT_CLASSES,), jnp.float32) * 0.01
    return dict(conv_w=conv_w, conv_b=conv_b, w1=w1, b1=b1, w2=w2, b2=b2)


# ---------------- JAX glue ----------------
@jax.jit
def patch_classifier_forward(x, prepped):
    # Raw image layout only: NCHW -> NHWC, 1-px spatial zero pad, flatten, pad rows to NP (~10 KiB total).
    xp = jnp.transpose(x, (0, 2, 3, 1))
    xp = jnp.pad(xp, ((0, 0), (K // 2, K // 2), (K // 2, K // 2), (0, 0)))
    xp = xp.reshape(B, PH * PW, C_IN)
    xp = jnp.pad(xp, ((0, 0), (0, NP - PH * PW), (0, 0)))           # (B, NP, C_IN)

    # honest hints (true, unpadded dims)
    flops = (2 * B * H * W * (C_IN * K * K) * C_FEAT
             + 2 * B * (C_FEAT * HID + HID * OUT_CLASSES))
    bytes_accessed = 4 * (xp.size + sum(int(v.size) for v in prepped.values()) + B * OUT_PAD)

    out = pl.pallas_call(
        fused_kernel,
        out_shape=jax.ShapeDtypeStruct((B, 1, OUT_PAD), jnp.float32),
        grid_spec=pltpu.PrefetchScalarGridSpec(
            num_scalar_prefetch=0,
            grid=(B,),
            in_specs=[
                pl.BlockSpec((None, NP, C_IN), lambda b: (b, 0, 0)),        # padded image (per batch)
                pl.BlockSpec((1, RW), lambda b: (0, 0)),                    # pool mask
                pl.BlockSpec((K * K, C_IN, C_FEAT), lambda b: (0, 0, 0)),   # conv weight per tap
                pl.BlockSpec((1, C_FEAT), lambda b: (0, 0)),                # conv bias
                pl.BlockSpec((C_FEAT, HID), lambda b: (0, 0)),              # head W1
                pl.BlockSpec((1, HID), lambda b: (0, 0)),                   # head b1
                pl.BlockSpec((HID, OUT_PAD), lambda b: (0, 0)),             # head W2
                pl.BlockSpec((1, OUT_PAD), lambda b: (0, 0)),               # head b2
            ],
            out_specs=pl.BlockSpec((None, 1, OUT_PAD), lambda b: (b, 0, 0)),
        ),
        compiler_params=pltpu.CompilerParams(
            dimension_semantics=("parallel",),
            vmem_limit_bytes=4 * 1024 * 1024,
        ),
        cost_estimate=pl.CostEstimate(flops=flops, transcendentals=0,
                                      bytes_accessed=bytes_accessed),
    )(xp, prepped['msk'], prepped['wc'], prepped['bc'],
      prepped['w1'], prepped['b1'], prepped['w2'], prepped['b2'])

    return out[:, 0, :OUT_CLASSES]                                   # strip lane padding


def reference_forward(x, params):
    """Pure-JAX reference for correctness checking (unpadded)."""
    kd = C_IN * K * K
    xpad = jnp.pad(x, ((0, 0), (0, 0), (1, 1), (1, 1)))
    slabs = []
    for kh in range(K):
        for kw in range(K):
            slabs.append(xpad[:, :, kh:kh + H, kw:kw + W])
    p = jnp.stack(slabs, axis=2).transpose(0, 3, 4, 1, 2).reshape(B * H * W, kd)
    wc = params['conv_w'].reshape(C_FEAT, kd).T
    feats = jnp.maximum(p @ wc + params['conv_b'][None, :], 0.0)
    pooled = feats.reshape(B, H * W, C_FEAT).mean(axis=1)
    h = pooled @ params['w1'] + params['b1'][None, :]
    return h @ params['w2'] + params['b2'][None, :]


if __name__ == "__main__":
    key = jax.random.PRNGKey(0)
    k_x, k_p = jax.random.split(key)
    images = jax.random.normal(k_x, (B, C_IN, H, W), jnp.float32)    # NCHW, like PyTorch
    params = init_params(k_p)
    prepped = prepare_params(params)                                 # one-time weight re-layout

    logits = patch_classifier_forward(images, prepped)
    logits = jax.block_until_ready(logits)

    ref = reference_forward(images, params)
    np.testing.assert_allclose(np.asarray(logits), np.asarray(ref), rtol=1e-4, atol=1e-4)

    print("KERNEL_OK")
</pallas_src>

<mosaic_0001>
module attributes {stable_mosaic.version = 11 : i64} {
  func.func @fused_kernel(%arg0: i32, %arg1: memref<1x328x4xf32, #tpu.memory_space<vmem>>, %arg2: memref<1x288xf32, #tpu.memory_space<vmem>>, %arg3: memref<9x4x32xf32, #tpu.memory_space<vmem>>, %arg4: memref<1x32xf32, #tpu.memory_space<vmem>>, %arg5: memref<32x16xf32, #tpu.memory_space<vmem>>, %arg6: memref<1x16xf32, #tpu.memory_space<vmem>>, %arg7: memref<16x128xf32, #tpu.memory_space<vmem>>, %arg8: memref<1x128xf32, #tpu.memory_space<vmem>>, %arg9: memref<1x1x128xf32, #tpu.memory_space<vmem>>) attributes {dimension_semantics = [#tpu.dimension_semantics<parallel>], iteration_bounds = array<i64: 2>, scalar_prefetch = 0 : i64, scratch_operands = 0 : i64, tpu.core_type = #tpu.core_type<tc>, window_params = [{transform_indices = @transform_0, window_bounds = array<i64: 1, 328, 4>}, {pipeline_mode = #tpu.pipeline_mode<synchronous>, transform_indices = @transform_1, window_bounds = array<i64: 1, 288>}, {pipeline_mode = #tpu.pipeline_mode<synchronous>, transform_indices = @transform_2, window_bounds = array<i64: 9, 4, 32>}, {pipeline_mode = #tpu.pipeline_mode<synchronous>, transform_indices = @transform_3, window_bounds = array<i64: 1, 32>}, {pipeline_mode = #tpu.pipeline_mode<synchronous>, transform_indices = @transform_4, window_bounds = array<i64: 32, 16>}, {pipeline_mode = #tpu.pipeline_mode<synchronous>, transform_indices = @transform_5, window_bounds = array<i64: 1, 16>}, {pipeline_mode = #tpu.pipeline_mode<synchronous>, transform_indices = @transform_6, window_bounds = array<i64: 16, 128>}, {pipeline_mode = #tpu.pipeline_mode<synchronous>, transform_indices = @transform_7, window_bounds = array<i64: 1, 128>}, {transform_indices = @transform_8, window_bounds = array<i64: 1, 1, 128>}]} {
    %cst = arith.constant 0.000000e+00 : f32
    %0 = vector.broadcast %cst : f32 to vector<288x32xf32>
    %c0 = arith.constant 0 : index
    %c0_0 = arith.constant 0 : index
    %c0_1 = arith.constant 0 : index
    %1 = vector.load %arg1[%c0, %c0_0, %c0_1] : memref<1x328x4xf32, #tpu.memory_space<vmem>>, vector<1x288x4xf32>
    %2 = vector.shape_cast %1 : vector<1x288x4xf32> to vector<288x4xf32>
    %c0_2 = arith.constant 0 : index
    %c0_3 = arith.constant 0 : index
    %c0_4 = arith.constant 0 : index
    %3 = vector.load %arg3[%c0_2, %c0_3, %c0_4] : memref<9x4x32xf32, #tpu.memory_space<vmem>>, vector<1x4x32xf32>
    %4 = vector.shape_cast %3 : vector<1x4x32xf32> to vector<4x32xf32>
    %cst_5 = arith.constant dense<0.000000e+00> : vector<288x32xf32>
    %5 = tpu.matmul %2, %4, %cst_5 {dimension_numbers = #tpu.dot_dimension_numbers<[1], [0], [0], [1], [0, 0, 1, 1], [], []>} : vector<288x4xf32>, vector<4x32xf32>, vector<288x32xf32> -> vector<288x32xf32>
    %6 = arith.addf %0, %5 : vector<288x32xf32>
    %c0_6 = arith.constant 0 : index
    %c1 = arith.constant 1 : index
    %c0_7 = arith.constant 0 : index
    %7 = vector.load %arg1[%c0_6, %c1, %c0_7] : memref<1x328x4xf32, #tpu.memory_space<vmem>>, vector<1x288x4xf32>
    %8 = vector.shape_cast %7 : vector<1x288x4xf32> to vector<288x4xf32>
    %c1_8 = arith.constant 1 : index
    %c0_9 = arith.constant 0 : index
    %c0_10 = arith.constant 0 : index
    %9 = vector.load %arg3[%c1_8, %c0_9, %c0_10] : memref<9x4x32xf32, #tpu.memory_space<vmem>>, vector<1x4x32xf32>
    %10 = vector.shape_cast %9 : vector<1x4x32xf32> to vector<4x32xf32>
    %cst_11 = arith.constant dense<0.000000e+00> : vector<288x32xf32>
    %11 = tpu.matmul %8, %10, %cst_11 {dimension_numbers = #tpu.dot_dimension_numbers<[1], [0], [0], [1], [0, 0, 1, 1], [], []>} : vector<288x4xf32>, vector<4x32xf32>, vector<288x32xf32> -> vector<288x32xf32>
    %12 = arith.addf %6, %11 : vector<288x32xf32>
    %c0_12 = arith.constant 0 : index
    %c2 = arith.constant 2 : index
    %c0_13 = arith.constant 0 : index
    %13 = vector.load %arg1[%c0_12, %c2, %c0_13] : memref<1x328x4xf32, #tpu.memory_space<vmem>>, vector<1x288x4xf32>
    %14 = vector.shape_cast %13 : vector<1x288x4xf32> to vector<288x4xf32>
    %c2_14 = arith.constant 2 : index
    %c0_15 = arith.constant 0 : index
    %c0_16 = arith.constant 0 : index
    %15 = vector.load %arg3[%c2_14, %c0_15, %c0_16] : memref<9x4x32xf32, #tpu.memory_space<vmem>>, vector<1x4x32xf32>
    %16 = vector.shape_cast %15 : vector<1x4x32xf32> to vector<4x32xf32>
    %cst_17 = arith.constant dense<0.000000e+00> : vector<288x32xf32>
    %17 = tpu.matmul %14, %16, %cst_17 {dimension_numbers = #tpu.dot_dimension_numbers<[1], [0], [0], [1], [0, 0, 1, 1], [], []>} : vector<288x4xf32>, vector<4x32xf32>, vector<288x32xf32> -> vector<288x32xf32>
    %18 = arith.addf %12, %17 : vector<288x32xf32>
    %c0_18 = arith.constant 0 : index
    %c18 = arith.constant 18 : index
    %c0_19 = arith.constant 0 : index
    %19 = vector.load %arg1[%c0_18, %c18, %c0_19] : memref<1x328x4xf32, #tpu.memory_space<vmem>>, vector<1x288x4xf32>
    %20 = vector.shape_cast %19 : vector<1x288x4xf32> to vector<288x4xf32>
    %c3 = arith.constant 3 : index
    %c0_20 = arith.constant 0 : index
    %c0_21 = arith.constant 0 : index
    %21 = vector.load %arg3[%c3, %c0_20, %c0_21] : memref<9x4x32xf32, #tpu.memory_space<vmem>>, vector<1x4x32xf32>
    %22 = vector.shape_cast %21 : vector<1x4x32xf32> to vector<4x32xf32>
    %cst_22 = arith.constant dense<0.000000e+00> : vector<288x32xf32>
    %23 = tpu.matmul %20, %22, %cst_22 {dimension_numbers = #tpu.dot_dimension_numbers<[1], [0], [0], [1], [0, 0, 1, 1], [], []>} : vector<288x4xf32>, vector<4x32xf32>, vector<288x32xf32> -> vector<288x32xf32>
    %24 = arith.addf %18, %23 : vector<288x32xf32>
    %c0_23 = arith.constant 0 : index
    %c19 = arith.constant 19 : index
    %c0_24 = arith.constant 0 : index
    %25 = vector.load %arg1[%c0_23, %c19, %c0_24] : memref<1x328x4xf32, #tpu.memory_space<vmem>>, vector<1x288x4xf32>
    %26 = vector.shape_cast %25 : vector<1x288x4xf32> to vector<288x4xf32>
    %c4 = arith.constant 4 : index
    %c0_25 = arith.constant 0 : index
    %c0_26 = arith.constant 0 : index
    %27 = vector.load %arg3[%c4, %c0_25, %c0_26] : memref<9x4x32xf32, #tpu.memory_space<vmem>>, vector<1x4x32xf32>
    %28 = vector.shape_cast %27 : vector<1x4x32xf32> to vector<4x32xf32>
    %cst_27 = arith.constant dense<0.000000e+00> : vector<288x32xf32>
    %29 = tpu.matmul %26, %28, %cst_27 {dimension_numbers = #tpu.dot_dimension_numbers<[1], [0], [0], [1], [0, 0, 1, 1], [], []>} : vector<288x4xf32>, vector<4x32xf32>, vector<288x32xf32> -> vector<288x32xf32>
    %30 = arith.addf %24, %29 : vector<288x32xf32>
    %c0_28 = arith.constant 0 : index
    %c20 = arith.constant 20 : index
    %c0_29 = arith.constant 0 : index
    %31 = vector.load %arg1[%c0_28, %c20, %c0_29] : memref<1x328x4xf32, #tpu.memory_space<vmem>>, vector<1x288x4xf32>
    %32 = vector.shape_cast %31 : vector<1x288x4xf32> to vector<288x4xf32>
    %c5 = arith.constant 5 : index
    %c0_30 = arith.constant 0 : index
    %c0_31 = arith.constant 0 : index
    %33 = vector.load %arg3[%c5, %c0_30, %c0_31] : memref<9x4x32xf32, #tpu.memory_space<vmem>>, vector<1x4x32xf32>
    %34 = vector.shape_cast %33 : vector<1x4x32xf32> to vector<4x32xf32>
    %cst_32 = arith.constant dense<0.000000e+00> : vector<288x32xf32>
    %35 = tpu.matmul %32, %34, %cst_32 {dimension_numbers = #tpu.dot_dimension_numbers<[1], [0], [0], [1], [0, 0, 1, 1], [], []>} : vector<288x4xf32>, vector<4x32xf32>, vector<288x32xf32> -> vector<288x32xf32>
    %36 = arith.addf %30, %35 : vector<288x32xf32>
    %c0_33 = arith.constant 0 : index
    %c36 = arith.constant 36 : index
    %c0_34 = arith.constant 0 : index
    %37 = vector.load %arg1[%c0_33, %c36, %c0_34] : memref<1x328x4xf32, #tpu.memory_space<vmem>>, vector<1x288x4xf32>
    %38 = vector.shape_cast %37 : vector<1x288x4xf32> to vector<288x4xf32>
    %c6 = arith.constant 6 : index
    %c0_35 = arith.constant 0 : index
    %c0_36 = arith.constant 0 : index
    %39 = vector.load %arg3[%c6, %c0_35, %c0_36] : memref<9x4x32xf32, #tpu.memory_space<vmem>>, vector<1x4x32xf32>
    %40 = vector.shape_cast %39 : vector<1x4x32xf32> to vector<4x32xf32>
    %cst_37 = arith.constant dense<0.000000e+00> : vector<288x32xf32>
    %41 = tpu.matmul %38, %40, %cst_37 {dimension_numbers = #tpu.dot_dimension_numbers<[1], [0], [0], [1], [0, 0, 1, 1], [], []>} : vector<288x4xf32>, vector<4x32xf32>, vector<288x32xf32> -> vector<288x32xf32>
    %42 = arith.addf %36, %41 : vector<288x32xf32>
    %c0_38 = arith.constant 0 : index
    %c37 = arith.constant 37 : index
    %c0_39 = arith.constant 0 : index
    %43 = vector.load %arg1[%c0_38, %c37, %c0_39] : memref<1x328x4xf32, #tpu.memory_space<vmem>>, vector<1x288x4xf32>
    %44 = vector.shape_cast %43 : vector<1x288x4xf32> to vector<288x4xf32>
    %c7 = arith.constant 7 : index
    %c0_40 = arith.constant 0 : index
    %c0_41 = arith.constant 0 : index
    %45 = vector.load %arg3[%c7, %c0_40, %c0_41] : memref<9x4x32xf32, #tpu.memory_space<vmem>>, vector<1x4x32xf32>
    %46 = vector.shape_cast %45 : vector<1x4x32xf32> to vector<4x32xf32>
    %cst_42 = arith.constant dense<0.000000e+00> : vector<288x32xf32>
    %47 = tpu.matmul %44, %46, %cst_42 {dimension_numbers = #tpu.dot_dimension_numbers<[1], [0], [0], [1], [0, 0, 1, 1], [], []>} : vector<288x4xf32>, vector<4x32xf32>, vector<288x32xf32> -> vector<288x32xf32>
    %48 = arith.addf %42, %47 : vector<288x32xf32>
    %c0_43 = arith.constant 0 : index
    %c38 = arith.constant 38 : index
    %c0_44 = arith.constant 0 : index
    %49 = vector.load %arg1[%c0_43, %c38, %c0_44] : memref<1x328x4xf32, #tpu.memory_space<vmem>>, vector<1x288x4xf32>
    %50 = vector.shape_cast %49 : vector<1x288x4xf32> to vector<288x4xf32>
    %c8 = arith.constant 8 : index
    %c0_45 = arith.constant 0 : index
    %c0_46 = arith.constant 0 : index
    %51 = vector.load %arg3[%c8, %c0_45, %c0_46] : memref<9x4x32xf32, #tpu.memory_space<vmem>>, vector<1x4x32xf32>
    %52 = vector.shape_cast %51 : vector<1x4x32xf32> to vector<4x32xf32>
    %cst_47 = arith.constant dense<0.000000e+00> : vector<288x32xf32>
    %53 = tpu.matmul %50, %52, %cst_47 {dimension_numbers = #tpu.dot_dimension_numbers<[1], [0], [0], [1], [0, 0, 1, 1], [], []>} : vector<288x4xf32>, vector<4x32xf32>, vector<288x32xf32> -> vector<288x32xf32>
    %54 = arith.addf %48, %53 : vector<288x32xf32>
    %c0_48 = arith.constant 0 : index
    %c0_49 = arith.constant 0 : index
    %55 = vector.load %arg4[%c0_48, %c0_49] : memref<1x32xf32, #tpu.memory_space<vmem>>, vector<1x32xf32>
    %56 = vector.broadcast %55 : vector<1x32xf32> to vector<288x32xf32>
    %57 = arith.addf %54, %56 : vector<288x32xf32>
    %cst_50 = arith.constant 0.000000e+00 : f32
    %58 = vector.broadcast %cst_50 : f32 to vector<288x32xf32>
    %59 = arith.maximumf %57, %58 : vector<288x32xf32>
    %c0_51 = arith.constant 0 : index
    %c0_52 = arith.constant 0 : index
    %60 = vector.load %arg2[%c0_51, %c0_52] : memref<1x288xf32, #tpu.memory_space<vmem>>, vector<1x288xf32>
    %cst_53 = arith.constant dense<0.000000e+00> : vector<1x32xf32>
    %61 = tpu.matmul %60, %59, %cst_53 {dimension_numbers = #tpu.dot_dimension_numbers<[1], [0], [0], [1], [0, 0, 1, 1], [], []>} : vector<1x288xf32>, vector<288x32xf32>, vector<1x32xf32> -> vector<1x32xf32>
    %c0_54 = arith.constant 0 : index
    %c0_55 = arith.constant 0 : index
    %62 = vector.load %arg5[%c0_54, %c0_55] : memref<32x16xf32, #tpu.memory_space<vmem>>, vector<32x16xf32>
    %cst_56 = arith.constant dense<0.000000e+00> : vector<1x16xf32>
    %63 = tpu.matmul %61, %62, %cst_56 {dimension_numbers = #tpu.dot_dimension_numbers<[1], [0], [0], [1], [0, 0, 1, 1], [], []>} : vector<1x32xf32>, vector<32x16xf32>, vector<1x16xf32> -> vector<1x16xf32>
    %c0_57 = arith.constant 0 : index
    %c0_58 = arith.constant 0 : index
    %64 = vector.load %arg6[%c0_57, %c0_58] : memref<1x16xf32, #tpu.memory_space<vmem>>, vector<1x16xf32>
    %65 = arith.addf %63, %64 : vector<1x16xf32>
    %c0_59 = arith.constant 0 : index
    %c0_60 = arith.constant 0 : index
    %66 = vector.load %arg7[%c0_59, %c0_60] : memref<16x128xf32, #tpu.memory_space<vmem>>, vector<16x128xf32>
    %cst_61 = arith.constant dense<0.000000e+00> : vector<1x128xf32>
    %67 = tpu.matmul %65, %66, %cst_61 {dimension_numbers = #tpu.dot_dimension_numbers<[1], [0], [0], [1], [0, 0, 1, 1], [], []>} : vector<1x16xf32>, vector<16x128xf32>, vector<1x128xf32> -> vector<1x128xf32>
    %c0_62 = arith.constant 0 : index
    %c0_63 = arith.constant 0 : index
    %68 = vector.load %arg8[%c0_62, %c0_63] : memref<1x128xf32, #tpu.memory_space<vmem>>, vector<1x128xf32>
    %69 = arith.addf %67, %68 : vector<1x128xf32>
    %c0_64 = arith.constant 0 : index
    %c0_65 = arith.constant 0 : index
    %c0_66 = arith.constant 0 : index
    %70 = vector.load %arg9[%c0_64, %c0_65, %c0_66] : memref<1x1x128xf32, #tpu.memory_space<vmem>>, vector<1x1x128xf32>
    %71 = vector.shape_cast %70 : vector<1x1x128xf32> to vector<1x128xf32>
    %72 = vector.shape_cast %69 : vector<1x128xf32> to vector<1x1x128xf32>
    tpu.vector_store %arg9[%c0_64, %c0_65, %c0_66], %72 {strides = array<i32>} : memref<1x1x128xf32, #tpu.memory_space<vmem>>, vector<1x1x128xf32>,
    return
  }
  func.func @transform_0(%arg0: i32) -> (i32, i32, i32) {
    %c0_i32 = arith.constant 0 : i32
    %c0_i32_0 = arith.constant 0 : i32
    %c0_i32_1 = arith.constant 0 : i32
    return %arg0, %c0_i32, %c0_i32_0 : i32, i32, i32
  }
  func.func @transform_1(%arg0: i32) -> (i32, i32) {
    %c0_i32 = arith.constant 0 : i32
    %c0_i32_0 = arith.constant 0 : i32
    %c0_i32_1 = arith.constant 0 : i32
    return %c0_i32, %c0_i32_0 : i32, i32
  }
  func.func @transform_2(%arg0: i32) -> (i32, i32, i32) {
    %c0_i32 = arith.constant 0 : i32
    %c0_i32_0 = arith.constant 0 : i32
    %c0_i32_1 = arith.constant 0 : i32
    %c0_i32_2 = arith.constant 0 : i32
    return %c0_i32, %c0_i32_0, %c0_i32_1 : i32, i32, i32
  }
  func.func @transform_3(%arg0: i32) -> (i32, i32) {
    %c0_i32 = arith.constant 0 : i32
    %c0_i32_0 = arith.constant 0 : i32
    %c0_i32_1 = arith.constant 0 : i32
    return %c0_i32, %c0_i32_0 : i32, i32
  }
  func.func @transform_4(%arg0: i32) -> (i32, i32) {
    %c0_i32 = arith.constant 0 : i32
    %c0_i32_0 = arith.constant 0 : i32
    %c0_i32_1 = arith.constant 0 : i32
    return %c0_i32, %c0_i32_0 : i32, i32
  }
  func.func @transform_5(%arg0: i32) -> (i32, i32) {
    %c0_i32 = arith.constant 0 : i32
    %c0_i32_0 = arith.constant 0 : i32
    %c0_i32_1 = arith.constant 0 : i32
    return %c0_i32, %c0_i32_0 : i32, i32
  }
  func.func @transform_6(%arg0: i32) -> (i32, i32) {
    %c0_i32 = arith.constant 0 : i32
    %c0_i32_0 = arith.constant 0 : i32
    %c0_i32_1 = arith.constant 0 : i32
    return %c0_i32, %c0_i32_0 : i32, i32
  }
  func.func @transform_7(%arg0: i32) -> (i32, i32) {
    %c0_i32 = arith.constant 0 : i32
    %c0_i32_0 = arith.constant 0 : i32
    %c0_i32_1 = arith.constant 0 : i32
    return %c0_i32, %c0_i32_0 : i32, i32
  }
  func.func @transform_8(%arg0: i32) -> (i32, i32, i32) {
    %c0_i32 = arith.constant 0 : i32
    %c0_i32_0 = arith.constant 0 : i32
    %c0_i32_1 = arith.constant 0 : i32
    return %arg0, %c0_i32, %c0_i32_0 : i32, i32, i32
  }
}

</mosaic_0001>

<llo_original>
// kernel: patch_classifier_forward.1
$region0: #{patch_classifier_forward.1}
  #allocation0 [shape = 'u32[]', space=smem, size = 0x4, offset = 0x4, fixed_abs, tag = 'smem constant byte address 0x4 - core index']
  #allocation1 [shape = 'u32[144,128]{1,0:T(1,128)}', space=vmem, size = 0x12000, scoped, tag = 'internal scratch']
  %s0 = inlined_call_operand.vmem [shape: f32[2,328,4], index: 0, kind: input, shape index: {}]
  %s1 = inlined_call_operand.vmem [shape: f32[1,288], index: 1, kind: input, shape index: {}]
  %s2 = inlined_call_operand.vmem [shape: f32[9,4,32], index: 2, kind: input, shape index: {}]
  %s3 = inlined_call_operand.vmem [shape: f32[1,32], index: 3, kind: input, shape index: {}]
  %s4 = inlined_call_operand.vmem [shape: f32[32,16], index: 4, kind: input, shape index: {}]
  %s5 = inlined_call_operand.vmem [shape: f32[1,16], index: 5, kind: input, shape index: {}]
  %s6 = inlined_call_operand.vmem [shape: f32[16,128], index: 6, kind: input, shape index: {}]
  %s7 = inlined_call_operand.vmem [shape: f32[1,128], index: 7, kind: input, shape index: {}]
  %s8 = inlined_call_operand.hbm [shape: f32[2,1,128], index: 8, kind: output, shape index: {}]
  %s9 = sld [smem:[#allocation0]]
  $region65: #{patch_classifier_forward.1} parent=0
    _
  %s11 = ssub.s32 1, %s9
  %s12 = scalar_select 0, %s11, %s9
  $region1: #{patch_classifier_forward.1} parent=0
    #allocation2 [shape = 'u8[1024]{0}', space=vmem, size = 0x400, scoped, tag = 'output window, operand 0']
    #allocation3 [shape = 's32[2]{0}', space=sflag, size = 0x8, scoped, tag = 'scoped memory for patch_classifier_forward.1']
    %13 = vsyncpa [#allocation3], 0
    %s14 = scalar_lea.sflag [#allocation3], 1
    %15 = vsyncpa %s14, 0
    loop: start=0, step=1, limit=4
    $region2: #{patch_classifier_forward.1} parent=1 // loop_pre_header
      _
    $region3: #{patch_classifier_forward.1} parent=1 // loop_header
      %s17 = sphi 0, %s21
      %p18 = scmp.ge.s32.totalorder %s17, 4
      %s27 = sphi 0, %s29
      %s30 = sphi 0, %s27
      %s31 = sphi 0, %s30
      %s47 = sphi 0, %s31
      %s51 = sphi 0, %s51
      %s53 = sphi 0, %s51
      %s54 = sphi 0, %s53
      %s68 = sphi 0, %s54
      %s72 = sphi 0, %s72
      %s74 = sphi 0, %s72
      %s75 = sphi 0, %s74
      %s89 = sphi 0, %s75
      %s93 = sphi 0, %s93
      %s95 = sphi 0, %s93
      %s96 = sphi 0, %s95
      %s110 = sphi 0, %s96
      %s114 = sphi 0, %s114
      %s116 = sphi 0, %s114
      %s117 = sphi 0, %s116
      %s131 = sphi 0, %s117
      %s135 = sphi 0, %s135
      %s137 = sphi 0, %s135
      %s138 = sphi 0, %s137
      %s152 = sphi 0, %s138
      %s156 = sphi 0, %s156
      %s158 = sphi 0, %s156
      %s159 = sphi 0, %s158
      %s173 = sphi 0, %s159
      %s177 = sphi 0, %s177
      %s179 = sphi 0, %s177
      %s180 = sphi 0, %s179
      %s194 = sphi 0, %s180
      %s200 = sphi 0, %s202
      %s203 = sphi 0, %s200
      %s204 = sphi 0, %s203
      %s220 = sphi 0, %s204
    $region4: #{patch_classifier_forward.1} parent=1 // loop_header_branch
      %20 = sbr.rel (%p18) target = $region8
    $region5: #{patch_classifier_forward.1} parent=1 // loop_body
      %s22 = ssub.s32 %s17, 1
      %s23 = ssub.s32 %s17, 2
      %s24 = sadd.s32 %s17, 1
      %s25 = ssub.s32 %s17, %s24
      %p26 = scmp.eq.s32.totalorder %s25, 0
      %s28 = sadd.s32 %s27, 1
      %s29 = scalar_select %p26, %s27, %s28
      %p32 = pneg %p26
      %p33 = scmp.eq.s32.totalorder %s17, 1
      %p34 = por %p32, %p33
      %p35 = scmp.ne.s32.totalorder %s27, %s30
      %p36 = scmp.eq.s32.totalorder %s17, 0
      %p37 = por %p35, %p36
      %p38 = scmp.ne.s32.totalorder %s27, %s30
      %p39 = scmp.eq.s32.totalorder %s22, 1
      %p40 = por %p38, %p39
      %p41 = scmp.ne.s32.totalorder %s30, %s31
      %p42 = scmp.eq.s32.totalorder %s22, 0
      %p43 = por %p41, %p42
      %p44 = scmp.ne.s32.totalorder %s30, %s31
      %p45 = scmp.eq.s32.totalorder %s23, 1
      %p46 = por %p44, %p45
      %p48 = scmp.ne.s32.totalorder %s31, %s47
      %p49 = scmp.eq.s32.totalorder %s23, 0
      %p50 = por %p48, %p49
      %s52 = sadd.s32 %s51, 1
      %p55 = scmp.eq.s32.totalorder %s17, 1
      %p56 = scmp.ne.s32.totalorder %s51, %s53
      %p57 = scmp.eq.s32.totalorder %s17, 0
      %p58 = por %p56, %p57
      %p59 = scmp.ne.s32.totalorder %s51, %s53
      %p60 = scmp.eq.s32.totalorder %s22, 1
      %p61 = por %p59, %p60
      %p62 = scmp.ne.s32.totalorder %s53, %s54
      %p63 = scmp.eq.s32.totalorder %s22, 0
      %p64 = por %p62, %p63
      %p65 = scmp.ne.s32.totalorder %s53, %s54
      %p66 = scmp.eq.s32.totalorder %s23, 1
      %p67 = por %p65, %p66
      %p69 = scmp.ne.s32.totalorder %s54, %s68
      %p70 = scmp.eq.s32.totalorder %s23, 0
      %p71 = por %p69, %p70
      %s73 = sadd.s32 %s72, 1
      %p76 = scmp.eq.s32.totalorder %s17, 1
      %p77 = scmp.ne.s32.totalorder %s72, %s74
      %p78 = scmp.eq.s32.totalorder %s17, 0
      %p79 = por %p77, %p78
      %p80 = scmp.ne.s32.totalorder %s72, %s74
      %p81 = scmp.eq.s32.totalorder %s22, 1
      %p82 = por %p80, %p81
      %p83 = scmp.ne.s32.totalorder %s74, %s75
      %p84 = scmp.eq.s32.totalorder %s22, 0
      %p85 = por %p83, %p84
      %p86 = scmp.ne.s32.totalorder %s74, %s75
      %p87 = scmp.eq.s32.totalorder %s23, 1
      %p88 = por %p86, %p87
      %p90 = scmp.ne.s32.totalorder %s75, %s89
      %p91 = scmp.eq.s32.totalorder %s23, 0
      %p92 = por %p90, %p91
      %s94 = sadd.s32 %s93, 1
      %p97 = scmp.eq.s32.totalorder %s17, 1
      %p98 = scmp.ne.s32.totalorder %s93, %s95
      %p99 = scmp.eq.s32.totalorder %s17, 0
      %p100 = por %p98, %p99
      %p101 = scmp.ne.s32.totalorder %s93, %s95
      %p102 = scmp.eq.s32.totalorder %s22, 1
      %p103 = por %p101, %p102
      %p104 = scmp.ne.s32.totalorder %s95, %s96
      %p105 = scmp.eq.s32.totalorder %s22, 0
      %p106 = por %p104, %p105
      %p107 = scmp.ne.s32.totalorder %s95, %s96
      %p108 = scmp.eq.s32.totalorder %s23, 1
      %p109 = por %p107, %p108
      %p111 = scmp.ne.s32.totalorder %s96, %s110
      %p112 = scmp.eq.s32.totalorder %s23, 0
      %p113 = por %p111, %p112
      %s115 = sadd.s32 %s114, 1
      %p118 = scmp.eq.s32.totalorder %s17, 1
      %p119 = scmp.ne.s32.totalorder %s114, %s116
      %p120 = scmp.eq.s32.totalorder %s17, 0
      %p121 = por %p119, %p120
      %p122 = scmp.ne.s32.totalorder %s114, %s116
      %p123 = scmp.eq.s32.totalorder %s22, 1
      %p124 = por %p122, %p123
      %p125 = scmp.ne.s32.totalorder %s116, %s117
      %p126 = scmp.eq.s32.totalorder %s22, 0
      %p127 = por %p125, %p126
      %p128 = scmp.ne.s32.totalorder %s116, %s117
      %p129 = scmp.eq.s32.totalorder %s23, 1
      %p130 = por %p128, %p129
      %p132 = scmp.ne.s32.totalorder %s117, %s131
      %p133 = scmp.eq.s32.totalorder %s23, 0
      %p134 = por %p132, %p133
      %s136 = sadd.s32 %s135, 1
      %p139 = scmp.eq.s32.totalorder %s17, 1
      %p140 = scmp.ne.s32.totalorder %s135, %s137
      %p141 = scmp.eq.s32.totalorder %s17, 0
      %p142 = por %p140, %p141
      %p143 = scmp.ne.s32.totalorder %s135, %s137
      %p144 = scmp.eq.s32.totalorder %s22, 1
      %p145 = por %p143, %p144
      %p146 = scmp.ne.s32.totalorder %s137, %s138
      %p147 = scmp.eq.s32.totalorder %s22, 0
      %p148 = por %p146, %p147
      %p149 = scmp.ne.s32.totalorder %s137, %s138
      %p150 = scmp.eq.s32.totalorder %s23, 1
      %p151 = por %p149, %p150
      %p153 = scmp.ne.s32.totalorder %s138, %s152
      %p154 = scmp.eq.s32.totalorder %s23, 0
      %p155 = por %p153, %p154
      %s157 = sadd.s32 %s156, 1
      %p160 = scmp.eq.s32.totalorder %s17, 1
      %p161 = scmp.ne.s32.totalorder %s156, %s158
      %p162 = scmp.eq.s32.totalorder %s17, 0
      %p163 = por %p161, %p162
      %p164 = scmp.ne.s32.totalorder %s156, %s158
      %p165 = scmp.eq.s32.totalorder %s22, 1
      %p166 = por %p164, %p165
      %p167 = scmp.ne.s32.totalorder %s158, %s159
      %p168 = scmp.eq.s32.totalorder %s22, 0
      %p169 = por %p167, %p168
      %p170 = scmp.ne.s32.totalorder %s158, %s159
      %p171 = scmp.eq.s32.totalorder %s23, 1
      %p172 = por %p170, %p171
      %p174 = scmp.ne.s32.totalorder %s159, %s173
      %p175 = scmp.eq.s32.totalorder %s23, 0
      %p176 = por %p174, %p175
      %s178 = sadd.s32 %s177, 1
      %p181 = scmp.eq.s32.totalorder %s17, 1
      %p182 = scmp.ne.s32.totalorder %s177, %s179
      %p183 = scmp.eq.s32.totalorder %s17, 0
      %p184 = por %p182, %p183
      %p185 = scmp.ne.s32.totalorder %s177, %s179
      %p186 = scmp.eq.s32.totalorder %s22, 1
      %p187 = por %p185, %p186
      %p188 = scmp.ne.s32.totalorder %s179, %s180
      %p189 = scmp.eq.s32.totalorder %s22, 0
      %p190 = por %p188, %p189
      %p191 = scmp.ne.s32.totalorder %s179, %s180
      %p192 = scmp.eq.s32.totalorder %s23, 1
      %p193 = por %p191, %p192
      %p195 = scmp.ne.s32.totalorder %s180, %s194
      %p196 = scmp.eq.s32.totalorder %s23, 0
      %p197 = por %p195, %p196
      %s198 = ssub.s32 %s17, %s24
      %p199 = scmp.eq.s32.totalorder %s198, 0
      %s201 = sadd.s32 %s200, 1
      %s202 = scalar_select %p199, %s200, %s201
      %p205 = pneg %p199
      %p206 = scmp.eq.s32.totalorder %s17, 1
      %p207 = por %p205, %p206
      %p208 = scmp.ne.s32.totalorder %s200, %s203
      %p209 = scmp.eq.s32.totalorder %s17, 0
      %p210 = por %p208, %p209
      %p211 = scmp.ne.s32.totalorder %s200, %s203
      %p212 = scmp.eq.s32.totalorder %s22, 1
      %p213 = por %p211, %p212
      %p214 = scmp.ne.s32.totalorder %s203, %s204
      %p215 = scmp.eq.s32.totalorder %s22, 0
      %p216 = por %p214, %p215
      %p217 = scmp.ne.s32.totalorder %s203, %s204
      %p218 = scmp.eq.s32.totalorder %s23, 1
      %p219 = por %p217, %p218
      %p221 = scmp.ne.s32.totalorder %s204, %s220
      %p222 = scmp.eq.s32.totalorder %s23, 0
      %p223 = por %p221, %p222
      %p224 = scmp.le.s32.totalorder 1, %s17
      %p225 = scmp.lt.s32.totalorder %s17, 3
      %p226 = pnand %p224, %p225
      %p227 = pneg %p226
      // Predicated region
      $region9: #{patch_classifier_forward.1} parent=5 // pred_check
        _
      $region10: #{patch_classifier_forward.1} parent=5 // pred_check_branch
        %229 = sbr.rel (%p226) target = $region12
      $region11: #{patch_classifier_forward.1} parent=5 // pred_region
        %s230 = ssub.s32 %s17, 1
        // Predicated region
        $region13: #{patch_classifier_forward.1} parent=11 // pred_check
          %p231 = pneg %p64
        $region14: #{patch_classifier_forward.1} parent=11 // pred_check_branch
          %233 = sbr.rel (%p231) target = $region16
        $region15: #{patch_classifier_forward.1} parent=11 // pred_region
          _
        $region16: #{patch_classifier_forward.1} parent=11 // pred_fallthru
          _
        // Predicated region
        $region17: #{patch_classifier_forward.1} parent=11 // pred_check
          %p234 = pneg %p85
        $region18: #{patch_classifier_forward.1} parent=11 // pred_check_branch
          %236 = sbr.rel (%p234) target = $region20
        $region19: #{patch_classifier_forward.1} parent=11 // pred_region
          _
        $region20: #{patch_classifier_forward.1} parent=11 // pred_fallthru
          _
        // Predicated region
        $region21: #{patch_classifier_forward.1} parent=11 // pred_check
          %p237 = pneg %p106
        $region22: #{patch_classifier_forward.1} parent=11 // pred_check_branch
          %239 = sbr.rel (%p237) target = $region24
        $region23: #{patch_classifier_forward.1} parent=11 // pred_region
          _
        $region24: #{patch_classifier_forward.1} parent=11 // pred_fallthru
          _
        // Predicated region
        $region25: #{patch_classifier_forward.1} parent=11 // pred_check
          %p240 = pneg %p127
        $region26: #{patch_classifier_forward.1} parent=11 // pred_check_branch
          %242 = sbr.rel (%p240) target = $region28
        $region27: #{patch_classifier_forward.1} parent=11 // pred_region
          _
        $region28: #{patch_classifier_forward.1} parent=11 // pred_fallthru
          _
        // Predicated region
        $region29: #{patch_classifier_forward.1} parent=11 // pred_check
          %p243 = pneg %p148
        $region30: #{patch_classifier_forward.1} parent=11 // pred_check_branch
          %245 = sbr.rel (%p243) target = $region32
        $region31: #{patch_classifier_forward.1} parent=11 // pred_region
          _
        $region32: #{patch_classifier_forward.1} parent=11 // pred_fallthru
          _
        // Predicated region
        $region33: #{patch_classifier_forward.1} parent=11 // pred_check
          %p246 = pneg %p169
        $region34: #{patch_classifier_forward.1} parent=11 // pred_check_branch
          %248 = sbr.rel (%p246) target = $region36
        $region35: #{patch_classifier_forward.1} parent=11 // pred_region
          _
        $region36: #{patch_classifier_forward.1} parent=11 // pred_fallthru
          _
        // Predicated region
        $region37: #{patch_classifier_forward.1} parent=11 // pred_check
          %p249 = pneg %p190
        $region38: #{patch_classifier_forward.1} parent=11 // pred_check_branch
          %251 = sbr.rel (%p249) target = $region40
        $region39: #{patch_classifier_forward.1} parent=11 // pred_region
          _
        $region40: #{patch_classifier_forward.1} parent=11 // pred_fallthru
          _
      $region12: #{patch_classifier_forward.1} parent=5 // pred_fallthru
        _
      %p252 = scmp.lt.s32.totalorder %s17, 2
      // Predicated region
      $region41: #{patch_classifier_forward.1} parent=5 // pred_check
        %p253 = pneg %p252
      $region42: #{patch_classifier_forward.1} parent=5 // pred_check_branch
        %255 = sbr.rel (%p253) target = $region44
      $region43: #{patch_classifier_forward.1} parent=5 // pred_region
        // Predicated region
        $region45: #{patch_classifier_forward.1} parent=43 // pred_check
          %p256 = pneg %p37
        $region46: #{patch_classifier_forward.1} parent=43 // pred_check_branch
          %258 = sbr.rel (%p256) target = $region48
        $region47: #{patch_classifier_forward.1} parent=43 // pred_region
          %p259 = scmp.lt.s32.totalorder %s17, 1
          %s260 = scalar_select %p259, %s17, 1
          %s261 = smul.addr %s260, 41
          %s262 = smul.addr %s261, 8
          %s263 = scalar_lea.vmem %s0, %s262
        $region48: #{patch_classifier_forward.1} parent=43 // pred_fallthru
          _
      $region44: #{patch_classifier_forward.1} parent=5 // pred_fallthru
        _
      %p264 = scmp.le.s32.totalorder 1, %s17
      %p265 = scmp.lt.s32.totalorder %s17, 3
      %p266 = pnand %p264, %p265
      %p267 = pneg %p266
      // Predicated region
      $region49: #{patch_classifier_forward.1} parent=5 // pred_check
        _
      $region50: #{patch_classifier_forward.1} parent=5 // pred_check_branch
        %269 = sbr.rel (%p266) target = $region52
      $region51: #{patch_classifier_forward.1} parent=5 // pred_region
        %s270 = ssub.s32 %s17, 1
        %p271 = scmp.lt.s32.totalorder %s22, 1
        %s272 = scalar_select %p271, %s22, 1
        %s273 = smul.addr %s272, 41
        %s274 = smul.addr %s273, 8
        %s275 = scalar_lea.vmem %s0, %s274
        %p276 = pneg %p43
        %p277 = pneg %p40
        %p278 = pneg %p64
        %p279 = pneg %p61
        %p280 = pneg %p85
        %p281 = pneg %p82
        %p282 = pneg %p106
        %p283 = pneg %p103
        %p284 = pneg %p127
        %p285 = pneg %p124
        %p286 = pneg %p148
        %p287 = pneg %p145
        %p288 = pneg %p169
        %p289 = pneg %p166
        %p290 = pneg %p190
        %p291 = pneg %p187
        %p292 = pneg %p216
        %p293 = pneg %p213
        %s294 = sand.u32 %s203, 1
        %s295 = scalar_lea.sflag [#allocation3], %s294
        %s296 = sand.u32 %s203, 1
        %s297 = scalar_lea.vmem [#allocation2], %s296
        %p298 = scmp.lt.s32.totalorder %s22, 1
        %s299 = scalar_select %p298, %s22, 1
        %s300 = smul.addr %s299, 41
        %s301 = smul.addr %s300, 8
        %s302 = scalar_lea.vmem %s0, %s301
        %v303 = vld [vmem:[%s302] sm:$0xff]
        %v304 = vld [vmem:[%s302 + $0x8] sm:$0xff]
        %v305 = vld [vmem:[%s302 + $0x10] sm:$0xff]
        %v306 = vld [vmem:[%s302 + $0x18] sm:$0xff]
        %v307 = vld [vmem:[%s302 + $0x20] sm:$0xff]
        %v308 = vld [vmem:[%s302 + $0x28] sm:$0xff]
        %v309 = vld [vmem:[%s302 + $0x30] sm:$0xff]
        %v310 = vld [vmem:[%s302 + $0x38] sm:$0xff]
        %v311 = vld [vmem:[%s302 + $0x40] sm:$0xff]
        %v312 = vld [vmem:[%s302 + $0x48] sm:$0xff]
        %v313 = vld [vmem:[%s302 + $0x50] sm:$0xff]
        %v314 = vld [vmem:[%s302 + $0x58] sm:$0xff]
        %v315 = vld [vmem:[%s302 + $0x60] sm:$0xff]
        %v316 = vld [vmem:[%s302 + $0x68] sm:$0xff]
        %v317 = vld [vmem:[%s302 + $0x70] sm:$0xff]
        %v318 = vld [vmem:[%s302 + $0x78] sm:$0xff]
        %v319 = vld [vmem:[%s302 + $0x80] sm:$0xff]
        %v320 = vld [vmem:[%s302 + $0x88] sm:$0xff]
        %v321 = vld [vmem:[%s302 + $0x90] sm:$0xff]
        %v322 = vld [vmem:[%s302 + $0x98] sm:$0xff]
        %v323 = vld [vmem:[%s302 + $0xa0] sm:$0xff]
        %v324 = vld [vmem:[%s302 + $0xa8] sm:$0xff]
        %v325 = vld [vmem:[%s302 + $0xb0] sm:$0xff]
        %v326 = vld [vmem:[%s302 + $0xb8] sm:$0xff]
        %v327 = vld [vmem:[%s302 + $0xc0] sm:$0xff]
        %v328 = vld [vmem:[%s302 + $0xc8] sm:$0xff]
        %v329 = vld [vmem:[%s302 + $0xd0] sm:$0xff]
        %v330 = vld [vmem:[%s302 + $0xd8] sm:$0xff]
        %v331 = vld [vmem:[%s302 + $0xe0] sm:$0xff]
        %v332 = vld [vmem:[%s302 + $0xe8] sm:$0xff]
        %v333 = vld [vmem:[%s302 + $0xf0] sm:$0xff]
        %v334 = vld [vmem:[%s302 + $0xf8] sm:$0xff]
        %v335 = vld [vmem:[%s302 + $0x100] sm:$0xff]
        %v336 = vld [vmem:[%s302 + $0x108] sm:$0xff]
        %v337 = vld [vmem:[%s302 + $0x110] sm:$0xff]
        %v338 = vld [vmem:[%s302 + $0x118] sm:$0xff]
        %v339 = vld [vmem:[%s2] sm:$0xf]
        %v340 = vld [vmem:[%s302 + $0x1] sm:$0xff]
        %v341 = vld [vmem:[%s302 + $0x9] sm:$0xff]
        %v342 = vld [vmem:[%s302 + $0x11] sm:$0xff]
        %v343 = vld [vmem:[%s302 + $0x19] sm:$0xff]
        %v344 = vld [vmem:[%s302 + $0x21] sm:$0xff]
        %v345 = vld [vmem:[%s302 + $0x29] sm:$0xff]
        %v346 = vld [vmem:[%s302 + $0x31] sm:$0xff]
        %v347 = vld [vmem:[%s302 + $0x39] sm:$0xff]
        %v348 = vld [vmem:[%s302 + $0x41] sm:$0xff]
        %v349 = vld [vmem:[%s302 + $0x49] sm:$0xff]
        %v350 = vld [vmem:[%s302 + $0x51] sm:$0xff]
        %v351 = vld [vmem:[%s302 + $0x59] sm:$0xff]
        %v352 = vld [vmem:[%s302 + $0x61] sm:$0xff]
        %v353 = vld [vmem:[%s302 + $0x69] sm:$0xff]
        %v354 = vld [vmem:[%s302 + $0x71] sm:$0xff]
        %v355 = vld [vmem:[%s302 + $0x79] sm:$0xff]
        %v356 = vld [vmem:[%s302 + $0x81] sm:$0xff]
        %v357 = vld [vmem:[%s302 + $0x89] sm:$0xff]
        %v358 = vld [vmem:[%s302 + $0x91] sm:$0xff]
        %v359 = vld [vmem:[%s302 + $0x99] sm:$0xff]
        %v360 = vld [vmem:[%s302 + $0xa1] sm:$0xff]
        %v361 = vld [vmem:[%s302 + $0xa9] sm:$0xff]
        %v362 = vld [vmem:[%s302 + $0xb1] sm:$0xff]
        %v363 = vld [vmem:[%s302 + $0xb9] sm:$0xff]
        %v364 = vld [vmem:[%s302 + $0xc1] sm:$0xff]
        %v365 = vld [vmem:[%s302 + $0xc9] sm:$0xff]
        %v366 = vld [vmem:[%s302 + $0xd1] sm:$0xff]
        %v367 = vld [vmem:[%s302 + $0xd9] sm:$0xff]
        %v368 = vld [vmem:[%s302 + $0xe1] sm:$0xff]
        %v369 = vld [vmem:[%s302 + $0xe9] sm:$0xff]
        %v370 = vld [vmem:[%s302 + $0xf1] sm:$0xff]
        %v371 = vld [vmem:[%s302 + $0xf9] sm:$0xff]
        %v372 = vld [vmem:[%s302 + $0x101] sm:$0xff]
        %v373 = vld [vmem:[%s302 + $0x109] sm:$0xff]
        %v374 = vld [vmem:[%s302 + $0x111] sm:$0xff]
        %v375 = vld [vmem:[%s302 + $0x119] sm:$0xff]
        %s376 = scalar_lea.vmem %s2, 4
        %v377 = vld [vmem:[%s376] sm:$0xf]
        %vm378 = vcmask 31744
        %v380 = vsel %vm378, %v340, 0
        %v383 = vsel %vm378, %v341, 0
        %v386 = vsel %vm378, %v342, 0
        %v389 = vsel %vm378, %v343, 0
        %v392 = vsel %vm378, %v344, 0
        %v395 = vsel %vm378, %v345, 0
        %v398 = vsel %vm378, %v346, 0
        %v401 = vsel %vm378, %v347, 0
        %v404 = vsel %vm378, %v348, 0
        %v407 = vsel %vm378, %v349, 0
        %v410 = vsel %vm378, %v350, 0
        %v413 = vsel %vm378, %v351, 0
        %v416 = vsel %vm378, %v352, 0
        %v419 = vsel %vm378, %v353, 0
        %v422 = vsel %vm378, %v354, 0
        %v425 = vsel %vm378, %v355, 0
        %v428 = vsel %vm378, %v356, 0
        %v431 = vsel %vm378, %v357, 0
        %v434 = vsel %vm378, %v358, 0
        %v437 = vsel %vm378, %v359, 0
        %v440 = vsel %vm378, %v360, 0
        %v443 = vsel %vm378, %v361, 0
        %v446 = vsel %vm378, %v362, 0
        %v449 = vsel %vm378, %v363, 0
        %v452 = vsel %vm378, %v364, 0
        %v455 = vsel %vm378, %v365, 0
        %v458 = vsel %vm378, %v366, 0
        %v461 = vsel %vm378, %v367, 0
        %v464 = vsel %vm378, %v368, 0
        %v467 = vsel %vm378, %v369, 0
        %v470 = vsel %vm378, %v370, 0
        %v473 = vsel %vm378, %v371, 0
        %v476 = vsel %vm378, %v372, 0
        %v479 = vsel %vm378, %v373, 0
        %v482 = vsel %vm378, %v374, 0
        %v485 = vsel %vm378, %v375, 0
        %vm487 = vcmask 1043456
        %v489 = vsel %vm487, %v377, 0
        %491 = vmatprep.subr.mxu0 0.0
        %492 = vmatpush1.msra.mxu0 0.0
        %493 = vmatprep.subr.mxu0 0.0
        %494 = vmatpush1.msra.mxu0 0.0
        %495 = vmatprep.subr.mxu0 0.0
        %496 = vmatpush1.msra.mxu0 0.0
        %497 = vmatprep.subr.mxu0 0.0
        %498 = vmatpush1.msra.mxu0 0.0
        %499 = vmatprep.subr.mxu0 0.0
        %500 = vmatpush1.msra.mxu0 0.0
        %501 = vmatprep.subr.mxu0 0.0
        %502 = vmatpush1.msra.mxu0 0.0
        %503 = vmatprep.subr.mxu0 0.0
        %504 = vmatpush1.msra.mxu0 0.0
        %505 = vmatprep.subr.mxu0 0.0
        %506 = vmatpush1.msra.mxu0 0.0
        %507 = vmatprep.subr.mxu0 0.0
        %508 = vmatpush1.msra.mxu0 0.0
        %509 = vmatprep.subr.mxu0 0.0
        %510 = vmatpush1.msra.mxu0 0.0
        %511 = vmatprep.subr.mxu0 0.0
        %512 = vmatpush1.msra.mxu0 0.0
        %513 = vmatprep.subr.mxu0 0.0
        %514 = vmatpush1.msra.mxu0 0.0
        %515 = vmatprep.subr.mxu0 0.0
        %516 = vmatpush1.msra.mxu0 0.0
        %517 = vmatprep.subr.mxu0 0.0
        %518 = vmatpush1.msra.mxu0 0.0
        %519 = vmatprep.subr.mxu0 0.0
        %520 = vmatpush1.msra.mxu0 0.0
        %521 = vmatprep.subr.mxu0 0.0
        %522 = vmatpush1.msra.mxu0 %v489
        %523 = vmatprep.subr.mxu0 0.0
        %524 = vmatpush2.msra.mxu0 0.0
        %525 = vmatprep.subr.mxu0 0.0
        %526 = vmatpush2.msra.mxu0 0.0
        %527 = vmatprep.subr.mxu0 0.0
        %528 = vmatpush2.msra.mxu0 0.0
        %529 = vmatprep.subr.mxu0 0.0
        %530 = vmatpush2.msra.mxu0 0.0
        %531 = vmatprep.subr.mxu0 0.0
        %532 = vmatpush2.msra.mxu0 0.0
        %533 = vmatprep.subr.mxu0 0.0
        %534 = vmatpush2.msra.mxu0 0.0
        %535 = vmatprep.subr.mxu0 0.0
        %536 = vmatpush2.msra.mxu0 0.0
        %537 = vmatprep.subr.mxu0 0.0
        %538 = vmatpush2.msra.mxu0 0.0
        %539 = vmatprep.subr.mxu0 0.0
        %540 = vmatpush2.msra.mxu0 0.0
        %541 = vmatprep.subr.mxu0 0.0
        %542 = vmatpush2.msra.mxu0 0.0
        %543 = vmatprep.subr.mxu0 0.0
        %544 = vmatpush2.msra.mxu0 0.0
        %545 = vmatprep.subr.mxu0 0.0
        %546 = vmatpush2.msra.mxu0 0.0
        %547 = vmatprep.subr.mxu0 0.0
        %548 = vmatpush2.msra.mxu0 0.0
        %549 = vmatprep.subr.mxu0 0.0
        %550 = vmatpush2.msra.mxu0 0.0
        %551 = vmatprep.subr.mxu0 0.0
        %552 = vmatpush2.msra.mxu0 0.0
        %553 = vmatprep.subr.mxu0 0.0
        %554 = vmatpush2.msra.mxu0 0.0
        %555 = vmatprep.mubr.f32.mxu0 0.0
        %556 = vmatmul.mubr.f32.gmra.mxu0 %v380
        %v557 = vpop.f32.mrf.mxu0
        %v558 = vadd.f32 0.0, %v557
        %v559 = vpop.f32.mrf.mxu0
        %560 = vmatprep.mubr.f32.mxu0 0.0
        %561 = vmatmul.mubr.f32.gmra.mxu0 %v383
        %v562 = vpop.f32.mrf.mxu0
        %v563 = vadd.f32 0.0, %v562
        %v564 = vpop.f32.mrf.mxu0
        %565 = vmatprep.mubr.f32.mxu0 0.0
        %566 = vmatmul.mubr.f32.gmra.mxu0 %v386
        %v567 = vpop.f32.mrf.mxu0
        %v568 = vadd.f32 0.0, %v567
        %v569 = vpop.f32.mrf.mxu0
        %570 = vmatprep.mubr.f32.mxu0 0.0
        %571 = vmatmul.mubr.f32.gmra.mxu0 %v389
        %v572 = vpop.f32.mrf.mxu0
        %v573 = vadd.f32 0.0, %v572
        %v574 = vpop.f32.mrf.mxu0
        %575 = vmatprep.mubr.f32.mxu0 0.0
        %576 = vmatmul.mubr.f32.gmra.mxu0 %v392
        %v577 = vpop.f32.mrf.mxu0
        %v578 = vadd.f32 0.0, %v577
        %v579 = vpop.f32.mrf.mxu0
        %580 = vmatprep.mubr.f32.mxu0 0.0
        %581 = vmatmul.mubr.f32.gmra.mxu0 %v395
        %v582 = vpop.f32.mrf.mxu0
        %v583 = vadd.f32 0.0, %v582
        %v584 = vpop.f32.mrf.mxu0
        %585 = vmatprep.mubr.f32.mxu0 0.0
        %586 = vmatmul.mubr.f32.gmra.mxu0 %v398
        %v587 = vpop.f32.mrf.mxu0
        %v588 = vadd.f32 0.0, %v587
        %v589 = vpop.f32.mrf.mxu0
        %590 = vmatprep.mubr.f32.mxu0 0.0
        %591 = vmatmul.mubr.f32.gmra.mxu0 %v401
        %v592 = vpop.f32.mrf.mxu0
        %v593 = vadd.f32 0.0, %v592
        %v594 = vpop.f32.mrf.mxu0
        %595 = vmatprep.mubr.f32.mxu0 0.0
        %596 = vmatmul.mubr.f32.gmra.mxu0 %v404
        %v597 = vpop.f32.mrf.mxu0
        %v598 = vadd.f32 0.0, %v597
        %v599 = vpop.f32.mrf.mxu0
        %600 = vmatprep.mubr.f32.mxu0 0.0
        %601 = vmatmul.mubr.f32.gmra.mxu0 %v407
        %v602 = vpop.f32.mrf.mxu0
        %v603 = vadd.f32 0.0, %v602
        %v604 = vpop.f32.mrf.mxu0
        %605 = vmatprep.mubr.f32.mxu0 0.0
        %606 = vmatmul.mubr.f32.gmra.mxu0 %v410
        %v607 = vpop.f32.mrf.mxu0
        %v608 = vadd.f32 0.0, %v607
        %v609 = vpop.f32.mrf.mxu0
        %610 = vmatprep.mubr.f32.mxu0 0.0
        %611 = vmatmul.mubr.f32.gmra.mxu0 %v413
        %v612 = vpop.f32.mrf.mxu0
        %v613 = vadd.f32 0.0, %v612
        %v614 = vpop.f32.mrf.mxu0
        %615 = vmatprep.mubr.f32.mxu0 0.0
        %616 = vmatmul.mubr.f32.gmra.mxu0 %v416
        %v617 = vpop.f32.mrf.mxu0
        %v618 = vadd.f32 0.0, %v617
        %v619 = vpop.f32.mrf.mxu0
        %620 = vmatprep.mubr.f32.mxu0 0.0
        %621 = vmatmul.mubr.f32.gmra.mxu0 %v419
        %v622 = vpop.f32.mrf.mxu0
        %v623 = vadd.f32 0.0, %v622
        %v624 = vpop.f32.mrf.mxu0
        %625 = vmatprep.mubr.f32.mxu0 0.0
        %626 = vmatmul.mubr.f32.gmra.mxu0 %v422
        %v627 = vpop.f32.mrf.mxu0
        %v628 = vadd.f32 0.0, %v627
        %v629 = vpop.f32.mrf.mxu0
        %630 = vmatprep.mubr.f32.mxu0 0.0
        %631 = vmatmul.mubr.f32.gmra.mxu0 %v425
        %v632 = vpop.f32.mrf.mxu0
        %v633 = vadd.f32 0.0, %v632
        %v634 = vpop.f32.mrf.mxu0
        %635 = vmatprep.mubr.f32.mxu0 0.0
        %636 = vmatmul.mubr.f32.gmra.mxu0 %v428
        %v637 = vpop.f32.mrf.mxu0
        %v638 = vadd.f32 0.0, %v637
        %v639 = vpop.f32.mrf.mxu0
        %640 = vmatprep.mubr.f32.mxu0 0.0
        %641 = vmatmul.mubr.f32.gmra.mxu0 %v431
        %v642 = vpop.f32.mrf.mxu0
        %v643 = vadd.f32 0.0, %v642
        %v644 = vpop.f32.mrf.mxu0
        %645 = vmatprep.mubr.f32.mxu0 0.0
        %646 = vmatmul.mubr.f32.gmra.mxu0 %v434
        %v647 = vpop.f32.mrf.mxu0
        %v648 = vadd.f32 0.0, %v647
        %v649 = vpop.f32.mrf.mxu0
        %650 = vmatprep.mubr.f32.mxu0 0.0
        %651 = vmatmul.mubr.f32.gmra.mxu0 %v437
        %v652 = vpop.f32.mrf.mxu0
        %v653 = vadd.f32 0.0, %v652
        %v654 = vpop.f32.mrf.mxu0
        %655 = vmatprep.mubr.f32.mxu0 0.0
        %656 = vmatmul.mubr.f32.gmra.mxu0 %v440
        %v657 = vpop.f32.mrf.mxu0
        %v658 = vadd.f32 0.0, %v657
        %v659 = vpop.f32.mrf.mxu0
        %660 = vmatprep.mubr.f32.mxu0 0.0
        %661 = vmatmul.mubr.f32.gmra.mxu0 %v443
        %v662 = vpop.f32.mrf.mxu0
        %v663 = vadd.f32 0.0, %v662
        %v664 = vpop.f32.mrf.mxu0
        %665 = vmatprep.mubr.f32.mxu0 0.0
        %666 = vmatmul.mubr.f32.gmra.mxu0 %v446
        %v667 = vpop.f32.mrf.mxu0
        %v668 = vadd.f32 0.0, %v667
        %v669 = vpop.f32.mrf.mxu0
        %670 = vmatprep.mubr.f32.mxu0 0.0
        %671 = vmatmul.mubr.f32.gmra.mxu0 %v449
        %v672 = vpop.f32.mrf.mxu0
        %v673 = vadd.f32 0.0, %v672
        %v674 = vpop.f32.mrf.mxu0
        %675 = vmatprep.mubr.f32.mxu0 0.0
        %676 = vmatmul.mubr.f32.gmra.mxu0 %v452
        %v677 = vpop.f32.mrf.mxu0
        %v678 = vadd.f32 0.0, %v677
        %v679 = vpop.f32.mrf.mxu0
        %680 = vmatprep.mubr.f32.mxu0 0.0
        %681 = vmatmul.mubr.f32.gmra.mxu0 %v455
        %v682 = vpop.f32.mrf.mxu0
        %v683 = vadd.f32 0.0, %v682
        %v684 = vpop.f32.mrf.mxu0
        %685 = vmatprep.mubr.f32.mxu0 0.0
        %686 = vmatmul.mubr.f32.gmra.mxu0 %v458
        %v687 = vpop.f32.mrf.mxu0
        %v688 = vadd.f32 0.0, %v687
        %v689 = vpop.f32.mrf.mxu0
        %690 = vmatprep.mubr.f32.mxu0 0.0
        %691 = vmatmul.mubr.f32.gmra.mxu0 %v461
        %v692 = vpop.f32.mrf.mxu0
        %v693 = vadd.f32 0.0, %v692
        %v694 = vpop.f32.mrf.mxu0
        %695 = vmatprep.mubr.f32.mxu0 0.0
        %696 = vmatmul.mubr.f32.gmra.mxu0 %v464
        %v697 = vpop.f32.mrf.mxu0
        %v698 = vadd.f32 0.0, %v697
        %v699 = vpop.f32.mrf.mxu0
        %700 = vmatprep.mubr.f32.mxu0 0.0
        %701 = vmatmul.mubr.f32.gmra.mxu0 %v467
        %v702 = vpop.f32.mrf.mxu0
        %v703 = vadd.f32 0.0, %v702
        %v704 = vpop.f32.mrf.mxu0
        %705 = vmatprep.mubr.f32.mxu0 0.0
        %706 = vmatmul.mubr.f32.gmra.mxu0 %v470
        %v707 = vpop.f32.mrf.mxu0
        %v708 = vadd.f32 0.0, %v707
        %v709 = vpop.f32.mrf.mxu0
        %710 = vmatprep.mubr.f32.mxu0 0.0
        %711 = vmatmul.mubr.f32.gmra.mxu0 %v473
        %v712 = vpop.f32.mrf.mxu0
        %v713 = vadd.f32 0.0, %v712
        %v714 = vpop.f32.mrf.mxu0
        %715 = vmatprep.mubr.f32.mxu0 0.0
        %716 = vmatmul.mubr.f32.gmra.mxu0 %v476
        %v717 = vpop.f32.mrf.mxu0
        %v718 = vadd.f32 0.0, %v717
        %v719 = vpop.f32.mrf.mxu0
        %720 = vmatprep.mubr.f32.mxu0 0.0
        %721 = vmatmul.mubr.f32.gmra.mxu0 %v479
        %v722 = vpop.f32.mrf.mxu0
        %v723 = vadd.f32 0.0, %v722
        %v724 = vpop.f32.mrf.mxu0
        %725 = vmatprep.mubr.f32.mxu0 0.0
        %726 = vmatmul.mubr.f32.gmra.mxu0 %v482
        %v727 = vpop.f32.mrf.mxu0
        %v728 = vadd.f32 0.0, %v727
        %v729 = vpop.f32.mrf.mxu0
        %730 = vmatprep.mubr.f32.mxu0 0.0
        %731 = vmatmul.mubr.f32.gmra.mxu0 %v485
        %v732 = vpop.f32.mrf.mxu0
        %v733 = vadd.f32 0.0, %v732
        %v734 = vpop.f32.mrf.mxu0
        %735 = vdwg.mxu0
        %v737 = vsel %vm378, %v303, 0
        %v740 = vsel %vm378, %v304, 0
        %v743 = vsel %vm378, %v305, 0
        %v746 = vsel %vm378, %v306, 0
        %v749 = vsel %vm378, %v307, 0
        %v752 = vsel %vm378, %v308, 0
        %v755 = vsel %vm378, %v309, 0
        %v758 = vsel %vm378, %v310, 0
        %v761 = vsel %vm378, %v311, 0
        %v764 = vsel %vm378, %v312, 0
        %v767 = vsel %vm378, %v313, 0
        %v770 = vsel %vm378, %v314, 0
        %v773 = vsel %vm378, %v315, 0
        %v776 = vsel %vm378, %v316, 0
        %v779 = vsel %vm378, %v317, 0
        %v782 = vsel %vm378, %v318, 0
        %v785 = vsel %vm378, %v319, 0
        %v788 = vsel %vm378, %v320, 0
        %v791 = vsel %vm378, %v321, 0
        %v794 = vsel %vm378, %v322, 0
        %v797 = vsel %vm378, %v323, 0
        %v800 = vsel %vm378, %v324, 0
        %v803 = vsel %vm378, %v325, 0
        %v806 = vsel %vm378, %v326, 0
        %v809 = vsel %vm378, %v327, 0
        %v812 = vsel %vm378, %v328, 0
        %v815 = vsel %vm378, %v329, 0
        %v818 = vsel %vm378, %v330, 0
        %v821 = vsel %vm378, %v331, 0
        %v824 = vsel %vm378, %v332, 0
        %v827 = vsel %vm378, %v333, 0
        %v830 = vsel %vm378, %v334, 0
        %v833 = vsel %vm378, %v335, 0
        %v836 = vsel %vm378, %v336, 0
        %v839 = vsel %vm378, %v337, 0
        %v842 = vsel %vm378, %v338, 0
        %v845 = vsel %vm487, %v339, 0
        %847 = vmatprep.subr.mxu0 0.0
        %848 = vmatpush1.msra.mxu0 0.0
        %849 = vmatprep.subr.mxu0 0.0
        %850 = vmatpush1.msra.mxu0 0.0
        %851 = vmatprep.subr.mxu0 0.0
        %852 = vmatpush1.msra.mxu0 0.0
        %853 = vmatprep.subr.mxu0 0.0
        %854 = vmatpush1.msra.mxu0 0.0
        %855 = vmatprep.subr.mxu0 0.0
        %856 = vmatpush1.msra.mxu0 0.0
        %857 = vmatprep.subr.mxu0 0.0
        %858 = vmatpush1.msra.mxu0 0.0
        %859 = vmatprep.subr.mxu0 0.0
        %860 = vmatpush1.msra.mxu0 0.0
        %861 = vmatprep.subr.mxu0 0.0
        %862 = vmatpush1.msra.mxu0 0.0
        %863 = vmatprep.subr.mxu0 0.0
        %864 = vmatpush1.msra.mxu0 0.0
        %865 = vmatprep.subr.mxu0 0.0
        %866 = vmatpush1.msra.mxu0 0.0
        %867 = vmatprep.subr.mxu0 0.0
        %868 = vmatpush1.msra.mxu0 0.0
        %869 = vmatprep.subr.mxu0 0.0
        %870 = vmatpush1.msra.mxu0 0.0
        %871 = vmatprep.subr.mxu0 0.0
        %872 = vmatpush1.msra.mxu0 0.0
        %873 = vmatprep.subr.mxu0 0.0
        %874 = vmatpush1.msra.mxu0 0.0
        %875 = vmatprep.subr.mxu0 0.0
        %876 = vmatpush1.msra.mxu0 0.0
        %877 = vmatprep.subr.mxu0 0.0
        %878 = vmatpush1.msra.mxu0 %v845
        %879 = vmatprep.subr.mxu0 0.0
        %880 = vmatpush2.msra.mxu0 0.0
        %881 = vmatprep.subr.mxu0 0.0
        %882 = vmatpush2.msra.mxu0 0.0
        %883 = vmatprep.subr.mxu0 0.0
        %884 = vmatpush2.msra.mxu0 0.0
        %885 = vmatprep.subr.mxu0 0.0
        %886 = vmatpush2.msra.mxu0 0.0
        %887 = vmatprep.subr.mxu0 0.0
        %888 = vmatpush2.msra.mxu0 0.0
        %889 = vmatprep.subr.mxu0 0.0
        %890 = vmatpush2.msra.mxu0 0.0
        %891 = vmatprep.subr.mxu0 0.0
        %892 = vmatpush2.msra.mxu0 0.0
        %893 = vmatprep.subr.mxu0 0.0
        %894 = vmatpush2.msra.mxu0 0.0
        %895 = vmatprep.subr.mxu0 0.0
        %896 = vmatpush2.msra.mxu0 0.0
        %897 = vmatprep.subr.mxu0 0.0
        %898 = vmatpush2.msra.mxu0 0.0
        %899 = vmatprep.subr.mxu0 0.0
        %900 = vmatpush2.msra.mxu0 0.0
        %901 = vmatprep.subr.mxu0 0.0
        %902 = vmatpush2.msra.mxu0 0.0
        %903 = vmatprep.subr.mxu0 0.0
        %904 = vmatpush2.msra.mxu0 0.0
        %905 = vmatprep.subr.mxu0 0.0
        %906 = vmatpush2.msra.mxu0 0.0
        %907 = vmatprep.subr.mxu0 0.0
        %908 = vmatpush2.msra.mxu0 0.0
        %909 = vmatprep.subr.mxu0 0.0
        %910 = vmatpush2.msra.mxu0 0.0
        %911 = vmatprep.mubr.f32.mxu0 0.0
        %912 = vmatmul.mubr.f32.gmra.mxu0 %v737
        %v913 = vpop.f32.mrf.mxu0
        %v914 = vadd.f32 %v558, %v913
        %v915 = vpop.f32.mrf.mxu0
        %916 = vmatprep.mubr.f32.mxu0 0.0
        %917 = vmatmul.mubr.f32.gmra.mxu0 %v740
        %v918 = vpop.f32.mrf.mxu0
        %v919 = vadd.f32 %v563, %v918
        %v920 = vpop.f32.mrf.mxu0
        %921 = vmatprep.mubr.f32.mxu0 0.0
        %922 = vmatmul.mubr.f32.gmra.mxu0 %v743
        %v923 = vpop.f32.mrf.mxu0
        %v924 = vadd.f32 %v568, %v923
        %v925 = vpop.f32.mrf.mxu0
        %926 = vmatprep.mubr.f32.mxu0 0.0
        %927 = vmatmul.mubr.f32.gmra.mxu0 %v746
        %v928 = vpop.f32.mrf.mxu0
        %v929 = vadd.f32 %v573, %v928
        %v930 = vpop.f32.mrf.mxu0
        %931 = vmatprep.mubr.f32.mxu0 0.0
        %932 = vmatmul.mubr.f32.gmra.mxu0 %v749
        %v933 = vpop.f32.mrf.mxu0
        %v934 = vadd.f32 %v578, %v933
        %v935 = vpop.f32.mrf.mxu0
        %936 = vmatprep.mubr.f32.mxu0 0.0
        %937 = vmatmul.mubr.f32.gmra.mxu0 %v752
        %v938 = vpop.f32.mrf.mxu0
        %v939 = vadd.f32 %v583, %v938
        %v940 = vpop.f32.mrf.mxu0
        %941 = vmatprep.mubr.f32.mxu0 0.0
        %942 = vmatmul.mubr.f32.gmra.mxu0 %v755
        %v943 = vpop.f32.mrf.mxu0
        %v944 = vadd.f32 %v588, %v943
        %v945 = vpop.f32.mrf.mxu0
        %946 = vmatprep.mubr.f32.mxu0 0.0
        %947 = vmatmul.mubr.f32.gmra.mxu0 %v758
        %v948 = vpop.f32.mrf.mxu0
        %v949 = vadd.f32 %v593, %v948
        %v950 = vpop.f32.mrf.mxu0
        %951 = vmatprep.mubr.f32.mxu0 0.0
        %952 = vmatmul.mubr.f32.gmra.mxu0 %v761
        %v953 = vpop.f32.mrf.mxu0
        %v954 = vadd.f32 %v598, %v953
        %v955 = vpop.f32.mrf.mxu0
        %956 = vmatprep.mubr.f32.mxu0 0.0
        %957 = vmatmul.mubr.f32.gmra.mxu0 %v764
        %v958 = vpop.f32.mrf.mxu0
        %v959 = vadd.f32 %v603, %v958
        %v960 = vpop.f32.mrf.mxu0
        %961 = vmatprep.mubr.f32.mxu0 0.0
        %962 = vmatmul.mubr.f32.gmra.mxu0 %v767
        %v963 = vpop.f32.mrf.mxu0
        %v964 = vadd.f32 %v608, %v963
        %v965 = vpop.f32.mrf.mxu0
        %966 = vmatprep.mubr.f32.mxu0 0.0
        %967 = vmatmul.mubr.f32.gmra.mxu0 %v770
        %v968 = vpop.f32.mrf.mxu0
        %v969 = vadd.f32 %v613, %v968
        %v970 = vpop.f32.mrf.mxu0
        %971 = vmatprep.mubr.f32.mxu0 0.0
        %972 = vmatmul.mubr.f32.gmra.mxu0 %v773
        %v973 = vpop.f32.mrf.mxu0
        %v974 = vadd.f32 %v618, %v973
        %v975 = vpop.f32.mrf.mxu0
        %976 = vmatprep.mubr.f32.mxu0 0.0
        %977 = vmatmul.mubr.f32.gmra.mxu0 %v776
        %v978 = vpop.f32.mrf.mxu0
        %v979 = vadd.f32 %v623, %v978
        %v980 = vpop.f32.mrf.mxu0
        %981 = vmatprep.mubr.f32.mxu0 0.0
        %982 = vmatmul.mubr.f32.gmra.mxu0 %v779
        %v983 = vpop.f32.mrf.mxu0
        %v984 = vadd.f32 %v628, %v983
        %v985 = vpop.f32.mrf.mxu0
        %986 = vmatprep.mubr.f32.mxu0 0.0
        %987 = vmatmul.mubr.f32.gmra.mxu0 %v782
        %v988 = vpop.f32.mrf.mxu0
        %v989 = vadd.f32 %v633, %v988
        %v990 = vpop.f32.mrf.mxu0
        %991 = vmatprep.mubr.f32.mxu0 0.0
        %992 = vmatmul.mubr.f32.gmra.mxu0 %v785
        %v993 = vpop.f32.mrf.mxu0
        %v994 = vadd.f32 %v638, %v993
        %v995 = vpop.f32.mrf.mxu0
        %996 = vmatprep.mubr.f32.mxu0 0.0
        %997 = vmatmul.mubr.f32.gmra.mxu0 %v788
        %v998 = vpop.f32.mrf.mxu0
        %v999 = vadd.f32 %v643, %v998
        %v1000 = vpop.f32.mrf.mxu0
        %1001 = vmatprep.mubr.f32.mxu0 0.0
        %1002 = vmatmul.mubr.f32.gmra.mxu0 %v791
        %v1003 = vpop.f32.mrf.mxu0
        %v1004 = vadd.f32 %v648, %v1003
        %v1005 = vpop.f32.mrf.mxu0
        %1006 = vmatprep.mubr.f32.mxu0 0.0
        %1007 = vmatmul.mubr.f32.gmra.mxu0 %v794
        %v1008 = vpop.f32.mrf.mxu0
        %v1009 = vadd.f32 %v653, %v1008
        %v1010 = vpop.f32.mrf.mxu0
        %1011 = vmatprep.mubr.f32.mxu0 0.0
        %1012 = vmatmul.mubr.f32.gmra.mxu0 %v797
        %v1013 = vpop.f32.mrf.mxu0
        %v1014 = vadd.f32 %v658, %v1013
        %v1015 = vpop.f32.mrf.mxu0
        %1016 = vmatprep.mubr.f32.mxu0 0.0
        %1017 = vmatmul.mubr.f32.gmra.mxu0 %v800
        %v1018 = vpop.f32.mrf.mxu0
        %v1019 = vadd.f32 %v663, %v1018
        %v1020 = vpop.f32.mrf.mxu0
        %1021 = vmatprep.mubr.f32.mxu0 0.0
        %1022 = vmatmul.mubr.f32.gmra.mxu0 %v803
        %v1023 = vpop.f32.mrf.mxu0
        %v1024 = vadd.f32 %v668, %v1023
        %v1025 = vpop.f32.mrf.mxu0
        %1026 = vmatprep.mubr.f32.mxu0 0.0
        %1027 = vmatmul.mubr.f32.gmra.mxu0 %v806
        %v1028 = vpop.f32.mrf.mxu0
        %v1029 = vadd.f32 %v673, %v1028
        %v1030 = vpop.f32.mrf.mxu0
        %1031 = vmatprep.mubr.f32.mxu0 0.0
        %1032 = vmatmul.mubr.f32.gmra.mxu0 %v809
        %v1033 = vpop.f32.mrf.mxu0
        %v1034 = vadd.f32 %v678, %v1033
        %v1035 = vpop.f32.mrf.mxu0
        %1036 = vmatprep.mubr.f32.mxu0 0.0
        %1037 = vmatmul.mubr.f32.gmra.mxu0 %v812
        %v1038 = vpop.f32.mrf.mxu0
        %v1039 = vadd.f32 %v683, %v1038
        %v1040 = vpop.f32.mrf.mxu0
        %1041 = vmatprep.mubr.f32.mxu0 0.0
        %1042 = vmatmul.mubr.f32.gmra.mxu0 %v815
        %v1043 = vpop.f32.mrf.mxu0
        %v1044 = vadd.f32 %v688, %v1043
        %v1045 = vpop.f32.mrf.mxu0
        %1046 = vmatprep.mubr.f32.mxu0 0.0
        %1047 = vmatmul.mubr.f32.gmra.mxu0 %v818
        %v1048 = vpop.f32.mrf.mxu0
        %v1049 = vadd.f32 %v693, %v1048
        %v1050 = vpop.f32.mrf.mxu0
        %1051 = vmatprep.mubr.f32.mxu0 0.0
        %1052 = vmatmul.mubr.f32.gmra.mxu0 %v821
        %v1053 = vpop.f32.mrf.mxu0
        %v1054 = vadd.f32 %v698, %v1053
        %v1055 = vpop.f32.mrf.mxu0
        %1056 = vmatprep.mubr.f32.mxu0 0.0
        %1057 = vmatmul.mubr.f32.gmra.mxu0 %v824
        %v1058 = vpop.f32.mrf.mxu0
        %v1059 = vadd.f32 %v703, %v1058
        %v1060 = vpop.f32.mrf.mxu0
        %1061 = vmatprep.mubr.f32.mxu0 0.0
        %1062 = vmatmul.mubr.f32.gmra.mxu0 %v827
        %v1063 = vpop.f32.mrf.mxu0
        %v1064 = vadd.f32 %v708, %v1063
        %v1065 = vpop.f32.mrf.mxu0
        %1066 = vmatprep.mubr.f32.mxu0 0.0
        %1067 = vmatmul.mubr.f32.gmra.mxu0 %v830
        %v1068 = vpop.f32.mrf.mxu0
        %v1069 = vadd.f32 %v713, %v1068
        %v1070 = vpop.f32.mrf.mxu0
        %1071 = vmatprep.mubr.f32.mxu0 0.0
        %1072 = vmatmul.mubr.f32.gmra.mxu0 %v833
        %v1073 = vpop.f32.mrf.mxu0
        %v1074 = vadd.f32 %v718, %v1073
        %v1075 = vpop.f32.mrf.mxu0
        %1076 = vmatprep.mubr.f32.mxu0 0.0
        %1077 = vmatmul.mubr.f32.gmra.mxu0 %v836
        %v1078 = vpop.f32.mrf.mxu0
        %v1079 = vadd.f32 %v723, %v1078
        %v1080 = vpop.f32.mrf.mxu0
        %1081 = vmatprep.mubr.f32.mxu0 0.0
        %1082 = vmatmul.mubr.f32.gmra.mxu0 %v839
        %v1083 = vpop.f32.mrf.mxu0
        %v1084 = vadd.f32 %v728, %v1083
        %v1085 = vpop.f32.mrf.mxu0
        %1086 = vmatprep.mubr.f32.mxu0 0.0
        %1087 = vmatmul.mubr.f32.gmra.mxu0 %v842
        %v1088 = vpop.f32.mrf.mxu0
        %v1089 = vadd.f32 %v733, %v1088
        %v1090 = vpop.f32.mrf.mxu0
        %1091 = vdwg.mxu0
        %v1092 = vld [vmem:[%s302 + $0x2] sm:$0xff]
        %v1093 = vld [vmem:[%s302 + $0xa] sm:$0xff]
        %v1094 = vld [vmem:[%s302 + $0x12] sm:$0xff]
        %v1095 = vld [vmem:[%s302 + $0x1a] sm:$0xff]
        %v1096 = vld [vmem:[%s302 + $0x22] sm:$0xff]
        %v1097 = vld [vmem:[%s302 + $0x2a] sm:$0xff]
        %v1098 = vld [vmem:[%s302 + $0x32] sm:$0xff]
        %v1099 = vld [vmem:[%s302 + $0x3a] sm:$0xff]
        %v1100 = vld [vmem:[%s302 + $0x42] sm:$0xff]
        %v1101 = vld [vmem:[%s302 + $0x4a] sm:$0xff]
        %v1102 = vld [vmem:[%s302 + $0x52] sm:$0xff]
        %v1103 = vld [vmem:[%s302 + $0x5a] sm:$0xff]
        %v1104 = vld [vmem:[%s302 + $0x62] sm:$0xff]
        %v1105 = vld [vmem:[%s302 + $0x6a] sm:$0xff]
        %v1106 = vld [vmem:[%s302 + $0x72] sm:$0xff]
        %v1107 = vld [vmem:[%s302 + $0x7a] sm:$0xff]
        %v1108 = vld [vmem:[%s302 + $0x82] sm:$0xff]
        %v1109 = vld [vmem:[%s302 + $0x8a] sm:$0xff]
        %v1110 = vld [vmem:[%s302 + $0x92] sm:$0xff]
        %v1111 = vld [vmem:[%s302 + $0x9a] sm:$0xff]
        %v1112 = vld [vmem:[%s302 + $0xa2] sm:$0xff]
        %v1113 = vld [vmem:[%s302 + $0xaa] sm:$0xff]
        %v1114 = vld [vmem:[%s302 + $0xb2] sm:$0xff]
        %v1115 = vld [vmem:[%s302 + $0xba] sm:$0xff]
        %v1116 = vld [vmem:[%s302 + $0xc2] sm:$0xff]
        %v1117 = vld [vmem:[%s302 + $0xca] sm:$0xff]
        %v1118 = vld [vmem:[%s302 + $0xd2] sm:$0xff]
        %v1119 = vld [vmem:[%s302 + $0xda] sm:$0xff]
        %v1120 = vld [vmem:[%s302 + $0xe2] sm:$0xff]
        %v1121 = vld [vmem:[%s302 + $0xea] sm:$0xff]
        %v1122 = vld [vmem:[%s302 + $0xf2] sm:$0xff]
        %v1123 = vld [vmem:[%s302 + $0xfa] sm:$0xff]
        %v1124 = vld [vmem:[%s302 + $0x102] sm:$0xff]
        %v1125 = vld [vmem:[%s302 + $0x10a] sm:$0xff]
        %v1126 = vld [vmem:[%s302 + $0x112] sm:$0xff]
        %v1127 = vld [vmem:[%s302 + $0x11a] sm:$0xff]
        %s1128 = scalar_lea.vmem %s2, 8
        %v1129 = vld [vmem:[%s1128] sm:$0xf]
        %v1131 = vsel %vm378, %v1092, 0
        %v1134 = vsel %vm378, %v1093, 0
        %v1137 = vsel %vm378, %v1094, 0
        %v1140 = vsel %vm378, %v1095, 0
        %v1143 = vsel %vm378, %v1096, 0
        %v1146 = vsel %vm378, %v1097, 0
        %v1149 = vsel %vm378, %v1098, 0
        %v1152 = vsel %vm378, %v1099, 0
        %v1155 = vsel %vm378, %v1100, 0
        %v1158 = vsel %vm378, %v1101, 0
        %v1161 = vsel %vm378, %v1102, 0
        %v1164 = vsel %vm378, %v1103, 0
        %v1167 = vsel %vm378, %v1104, 0
        %v1170 = vsel %vm378, %v1105, 0
        %v1173 = vsel %vm378, %v1106, 0
        %v1176 = vsel %vm378, %v1107, 0
        %v1179 = vsel %vm378, %v1108, 0
        %v1182 = vsel %vm378, %v1109, 0
        %v1185 = vsel %vm378, %v1110, 0
        %v1188 = vsel %vm378, %v1111, 0
        %v1191 = vsel %vm378, %v1112, 0
        %v1194 = vsel %vm378, %v1113, 0
        %v1197 = vsel %vm378, %v1114, 0
        %v1200 = vsel %vm378, %v1115, 0
        %v1203 = vsel %vm378, %v1116, 0
        %v1206 = vsel %vm378, %v1117, 0
        %v1209 = vsel %vm378, %v1118, 0
        %v1212 = vsel %vm378, %v1119, 0
        %v1215 = vsel %vm378, %v1120, 0
        %v1218 = vsel %vm378, %v1121, 0
        %v1221 = vsel %vm378, %v1122, 0
        %v1224 = vsel %vm378, %v1123, 0
        %v1227 = vsel %vm378, %v1124, 0
        %v1230 = vsel %vm378, %v1125, 0
        %v1233 = vsel %vm378, %v1126, 0
        %v1236 = vsel %vm378, %v1127, 0
        %v1239 = vsel %vm487, %v1129, 0
        %1241 = vmatprep.subr.mxu0 0.0
        %1242 = vmatpush1.msra.mxu0 0.0
        %1243 = vmatprep.subr.mxu0 0.0
        %1244 = vmatpush1.msra.mxu0 0.0
        %1245 = vmatprep.subr.mxu0 0.0
        %1246 = vmatpush1.msra.mxu0 0.0
        %1247 = vmatprep.subr.mxu0 0.0
        %1248 = vmatpush1.msra.mxu0 0.0
        %1249 = vmatprep.subr.mxu0 0.0
        %1250 = vmatpush1.msra.mxu0 0.0
        %1251 = vmatprep.subr.mxu0 0.0
        %1252 = vmatpush1.msra.mxu0 0.0
        %1253 = vmatprep.subr.mxu0 0.0
        %1254 = vmatpush1.msra.mxu0 0.0
        %1255 = vmatprep.subr.mxu0 0.0
        %1256 = vmatpush1.msra.mxu0 0.0
        %1257 = vmatprep.subr.mxu0 0.0
        %1258 = vmatpush1.msra.mxu0 0.0
        %1259 = vmatprep.subr.mxu0 0.0
        %1260 = vmatpush1.msra.mxu0 0.0
        %1261 = vmatprep.subr.mxu0 0.0
        %1262 = vmatpush1.msra.mxu0 0.0
        %1263 = vmatprep.subr.mxu0 0.0
        %1264 = vmatpush1.msra.mxu0 0.0
        %1265 = vmatprep.subr.mxu0 0.0
        %1266 = vmatpush1.msra.mxu0 0.0
        %1267 = vmatprep.subr.mxu0 0.0
        %1268 = vmatpush1.msra.mxu0 0.0
        %1269 = vmatprep.subr.mxu0 0.0
        %1270 = vmatpush1.msra.mxu0 0.0
        %1271 = vmatprep.subr.mxu0 0.0
        %1272 = vmatpush1.msra.mxu0 %v1239
        %1273 = vmatprep.subr.mxu0 0.0
        %1274 = vmatpush2.msra.mxu0 0.0
        %1275 = vmatprep.subr.mxu0 0.0
        %1276 = vmatpush2.msra.mxu0 0.0
        %1277 = vmatprep.subr.mxu0 0.0
        %1278 = vmatpush2.msra.mxu0 0.0
        %1279 = vmatprep.subr.mxu0 0.0
        %1280 = vmatpush2.msra.mxu0 0.0
        %1281 = vmatprep.subr.mxu0 0.0
        %1282 = vmatpush2.msra.mxu0 0.0
        %1283 = vmatprep.subr.mxu0 0.0
        %1284 = vmatpush2.msra.mxu0 0.0
        %1285 = vmatprep.subr.mxu0 0.0
        %1286 = vmatpush2.msra.mxu0 0.0
        %1287 = vmatprep.subr.mxu0 0.0
        %1288 = vmatpush2.msra.mxu0 0.0
        %1289 = vmatprep.subr.mxu0 0.0
        %1290 = vmatpush2.msra.mxu0 0.0
        %1291 = vmatprep.subr.mxu0 0.0
        %1292 = vmatpush2.msra.mxu0 0.0
        %1293 = vmatprep.subr.mxu0 0.0
        %1294 = vmatpush2.msra.mxu0 0.0
        %1295 = vmatprep.subr.mxu0 0.0
        %1296 = vmatpush2.msra.mxu0 0.0
        %1297 = vmatprep.subr.mxu0 0.0
        %1298 = vmatpush2.msra.mxu0 0.0
        %1299 = vmatprep.subr.mxu0 0.0
        %1300 = vmatpush2.msra.mxu0 0.0
        %1301 = vmatprep.subr.mxu0 0.0
        %1302 = vmatpush2.msra.mxu0 0.0
        %1303 = vmatprep.subr.mxu0 0.0
        %1304 = vmatpush2.msra.mxu0 0.0
        %1305 = vmatprep.mubr.f32.mxu0 0.0
        %1306 = vmatmul.mubr.f32.gmra.mxu0 %v1131
        %v1307 = vpop.f32.mrf.mxu0
        %v1308 = vadd.f32 0.0, %v1307
        %v1309 = vpop.f32.mrf.mxu0
        %1310 = vmatprep.mubr.f32.mxu0 0.0
        %1311 = vmatmul.mubr.f32.gmra.mxu0 %v1134
        %v1312 = vpop.f32.mrf.mxu0
        %v1313 = vadd.f32 0.0, %v1312
        %v1314 = vpop.f32.mrf.mxu0
        %1315 = vmatprep.mubr.f32.mxu0 0.0
        %1316 = vmatmul.mubr.f32.gmra.mxu0 %v1137
        %v1317 = vpop.f32.mrf.mxu0
        %v1318 = vadd.f32 0.0, %v1317
        %v1319 = vpop.f32.mrf.mxu0
        %1320 = vmatprep.mubr.f32.mxu0 0.0
        %1321 = vmatmul.mubr.f32.gmra.mxu0 %v1140
        %v1322 = vpop.f32.mrf.mxu0
        %v1323 = vadd.f32 0.0, %v1322
        %v1324 = vpop.f32.mrf.mxu0
        %1325 = vmatprep.mubr.f32.mxu0 0.0
        %1326 = vmatmul.mubr.f32.gmra.mxu0 %v1143
        %v1327 = vpop.f32.mrf.mxu0
        %v1328 = vadd.f32 0.0, %v1327
        %v1329 = vpop.f32.mrf.mxu0
        %1330 = vmatprep.mubr.f32.mxu0 0.0
        %1331 = vmatmul.mubr.f32.gmra.mxu0 %v1146
        %v1332 = vpop.f32.mrf.mxu0
        %v1333 = vadd.f32 0.0, %v1332
        %v1334 = vpop.f32.mrf.mxu0
        %1335 = vmatprep.mubr.f32.mxu0 0.0
        %1336 = vmatmul.mubr.f32.gmra.mxu0 %v1149
        %v1337 = vpop.f32.mrf.mxu0
        %v1338 = vadd.f32 0.0, %v1337
        %v1339 = vpop.f32.mrf.mxu0
        %1340 = vmatprep.mubr.f32.mxu0 0.0
        %1341 = vmatmul.mubr.f32.gmra.mxu0 %v1152
        %v1342 = vpop.f32.mrf.mxu0
        %v1343 = vadd.f32 0.0, %v1342
        %v1344 = vpop.f32.mrf.mxu0
        %1345 = vmatprep.mubr.f32.mxu0 0.0
        %1346 = vmatmul.mubr.f32.gmra.mxu0 %v1155
        %v1347 = vpop.f32.mrf.mxu0
        %v1348 = vadd.f32 0.0, %v1347
        %v1349 = vpop.f32.mrf.mxu0
        %1350 = vmatprep.mubr.f32.mxu0 0.0
        %1351 = vmatmul.mubr.f32.gmra.mxu0 %v1158
        %v1352 = vpop.f32.mrf.mxu0
        %v1353 = vadd.f32 0.0, %v1352
        %v1354 = vpop.f32.mrf.mxu0
        %1355 = vmatprep.mubr.f32.mxu0 0.0
        %1356 = vmatmul.mubr.f32.gmra.mxu0 %v1161
        %v1357 = vpop.f32.mrf.mxu0
        %v1358 = vadd.f32 0.0, %v1357
        %v1359 = vpop.f32.mrf.mxu0
        %1360 = vmatprep.mubr.f32.mxu0 0.0
        %1361 = vmatmul.mubr.f32.gmra.mxu0 %v1164
        %v1362 = vpop.f32.mrf.mxu0
        %v1363 = vadd.f32 0.0, %v1362
        %v1364 = vpop.f32.mrf.mxu0
        %1365 = vmatprep.mubr.f32.mxu0 0.0
        %1366 = vmatmul.mubr.f32.gmra.mxu0 %v1167
        %v1367 = vpop.f32.mrf.mxu0
        %v1368 = vadd.f32 0.0, %v1367
        %v1369 = vpop.f32.mrf.mxu0
        %1370 = vmatprep.mubr.f32.mxu0 0.0
        %1371 = vmatmul.mubr.f32.gmra.mxu0 %v1170
        %v1372 = vpop.f32.mrf.mxu0
        %v1373 = vadd.f32 0.0, %v1372
        %v1374 = vpop.f32.mrf.mxu0
        %1375 = vmatprep.mubr.f32.mxu0 0.0
        %1376 = vmatmul.mubr.f32.gmra.mxu0 %v1173
        %v1377 = vpop.f32.mrf.mxu0
        %v1378 = vadd.f32 0.0, %v1377
        %v1379 = vpop.f32.mrf.mxu0
        %1380 = vmatprep.mubr.f32.mxu0 0.0
        %1381 = vmatmul.mubr.f32.gmra.mxu0 %v1176
        %v1382 = vpop.f32.mrf.mxu0
        %v1383 = vadd.f32 0.0, %v1382
        %v1384 = vpop.f32.mrf.mxu0
        %1385 = vmatprep.mubr.f32.mxu0 0.0
        %1386 = vmatmul.mubr.f32.gmra.mxu0 %v1179
        %v1387 = vpop.f32.mrf.mxu0
        %v1388 = vadd.f32 0.0, %v1387
        %v1389 = vpop.f32.mrf.mxu0
        %1390 = vmatprep.mubr.f32.mxu0 0.0
        %1391 = vmatmul.mubr.f32.gmra.mxu0 %v1182
        %v1392 = vpop.f32.mrf.mxu0
        %v1393 = vadd.f32 0.0, %v1392
        %v1394 = vpop.f32.mrf.mxu0
        %1395 = vmatprep.mubr.f32.mxu0 0.0
        %1396 = vmatmul.mubr.f32.gmra.mxu0 %v1185
        %v1397 = vpop.f32.mrf.mxu0
        %v1398 = vadd.f32 0.0, %v1397
        %v1399 = vpop.f32.mrf.mxu0
        %1400 = vmatprep.mubr.f32.mxu0 0.0
        %1401 = vmatmul.mubr.f32.gmra.mxu0 %v1188
        %v1402 = vpop.f32.mrf.mxu0
        %v1403 = vadd.f32 0.0, %v1402
        %v1404 = vpop.f32.mrf.mxu0
        %1405 = vmatprep.mubr.f32.mxu0 0.0
        %1406 = vmatmul.mubr.f32.gmra.mxu0 %v1191
        %v1407 = vpop.f32.mrf.mxu0
        %v1408 = vadd.f32 0.0, %v1407
        %v1409 = vpop.f32.mrf.mxu0
        %1410 = vmatprep.mubr.f32.mxu0 0.0
        %1411 = vmatmul.mubr.f32.gmra.mxu0 %v1194
        %v1412 = vpop.f32.mrf.mxu0
        %v1413 = vadd.f32 0.0, %v1412
        %v1414 = vpop.f32.mrf.mxu0
        %1415 = vmatprep.mubr.f32.mxu0 0.0
        %1416 = vmatmul.mubr.f32.gmra.mxu0 %v1197
        %v1417 = vpop.f32.mrf.mxu0
        %v1418 = vadd.f32 0.0, %v1417
        %v1419 = vpop.f32.mrf.mxu0
        %1420 = vmatprep.mubr.f32.mxu0 0.0
        %1421 = vmatmul.mubr.f32.gmra.mxu0 %v1200
        %v1422 = vpop.f32.mrf.mxu0
        %v1423 = vadd.f32 0.0, %v1422
        %v1424 = vpop.f32.mrf.mxu0
        %1425 = vmatprep.mubr.f32.mxu0 0.0
        %1426 = vmatmul.mubr.f32.gmra.mxu0 %v1203
        %v1427 = vpop.f32.mrf.mxu0
        %v1428 = vadd.f32 0.0, %v1427
        %v1429 = vpop.f32.mrf.mxu0
        %1430 = vmatprep.mubr.f32.mxu0 0.0
        %1431 = vmatmul.mubr.f32.gmra.mxu0 %v1206
        %v1432 = vpop.f32.mrf.mxu0
        %v1433 = vadd.f32 0.0, %v1432
        %v1434 = vpop.f32.mrf.mxu0
        %1435 = vmatprep.mubr.f32.mxu0 0.0
        %1436 = vmatmul.mubr.f32.gmra.mxu0 %v1209
        %v1437 = vpop.f32.mrf.mxu0
        %v1438 = vadd.f32 0.0, %v1437
        %v1439 = vpop.f32.mrf.mxu0
        %1440 = vmatprep.mubr.f32.mxu0 0.0
        %1441 = vmatmul.mubr.f32.gmra.mxu0 %v1212
        %v1442 = vpop.f32.mrf.mxu0
        %v1443 = vadd.f32 0.0, %v1442
        %v1444 = vpop.f32.mrf.mxu0
        %1445 = vmatprep.mubr.f32.mxu0 0.0
        %1446 = vmatmul.mubr.f32.gmra.mxu0 %v1215
        %v1447 = vpop.f32.mrf.mxu0
        %v1448 = vadd.f32 0.0, %v1447
        %v1449 = vpop.f32.mrf.mxu0
        %1450 = vmatprep.mubr.f32.mxu0 0.0
        %1451 = vmatmul.mubr.f32.gmra.mxu0 %v1218
        %v1452 = vpop.f32.mrf.mxu0
        %v1453 = vadd.f32 0.0, %v1452
        %v1454 = vpop.f32.mrf.mxu0
        %1455 = vmatprep.mubr.f32.mxu0 0.0
        %1456 = vmatmul.mubr.f32.gmra.mxu0 %v1221
        %v1457 = vpop.f32.mrf.mxu0
        %v1458 = vadd.f32 0.0, %v1457
        %v1459 = vpop.f32.mrf.mxu0
        %1460 = vmatprep.mubr.f32.mxu0 0.0
        %1461 = vmatmul.mubr.f32.gmra.mxu0 %v1224
        %v1462 = vpop.f32.mrf.mxu0
        %v1463 = vadd.f32 0.0, %v1462
        %v1464 = vpop.f32.mrf.mxu0
        %1465 = vmatprep.mubr.f32.mxu0 0.0
        %1466 = vmatmul.mubr.f32.gmra.mxu0 %v1227
        %v1467 = vpop.f32.mrf.mxu0
        %v1468 = vadd.f32 0.0, %v1467
        %v1469 = vpop.f32.mrf.mxu0
        %1470 = vmatprep.mubr.f32.mxu0 0.0
        %1471 = vmatmul.mubr.f32.gmra.mxu0 %v1230
        %v1472 = vpop.f32.mrf.mxu0
        %v1473 = vadd.f32 0.0, %v1472
        %v1474 = vpop.f32.mrf.mxu0
        %1475 = vmatprep.mubr.f32.mxu0 0.0
        %1476 = vmatmul.mubr.f32.gmra.mxu0 %v1233
        %v1477 = vpop.f32.mrf.mxu0
        %v1478 = vadd.f32 0.0, %v1477
        %v1479 = vpop.f32.mrf.mxu0
        %1480 = vmatprep.mubr.f32.mxu0 0.0
        %1481 = vmatmul.mubr.f32.gmra.mxu0 %v1236
        %v1482 = vpop.f32.mrf.mxu0
        %v1483 = vadd.f32 0.0, %v1482
        %v1484 = vpop.f32.mrf.mxu0
        %1485 = vdwg.mxu0
        %v1486 = vadd.f32 %v914, %v1308
        %v1487 = vadd.f32 %v919, %v1313
        %v1488 = vadd.f32 %v924, %v1318
        %v1489 = vadd.f32 %v929, %v1323
        %v1490 = vadd.f32 %v934, %v1328
        %v1491 = vadd.f32 %v939, %v1333
        %v1492 = vadd.f32 %v944, %v1338
        %v1493 = vadd.f32 %v949, %v1343
        %v1494 = vadd.f32 %v954, %v1348
        %v1495 = vadd.f32 %v959, %v1353
        %v1496 = vadd.f32 %v964, %v1358
        %v1497 = vadd.f32 %v969, %v1363
        %v1498 = vadd.f32 %v974, %v1368
        %v1499 = vadd.f32 %v979, %v1373
        %v1500 = vadd.f32 %v984, %v1378
        %v1501 = vadd.f32 %v989, %v1383
        %v1502 = vadd.f32 %v994, %v1388
        %v1503 = vadd.f32 %v999, %v1393
        %v1504 = vadd.f32 %v1004, %v1398
        %v1505 = vadd.f32 %v1009, %v1403
        %v1506 = vadd.f32 %v1014, %v1408
        %v1507 = vadd.f32 %v1019, %v1413
        %v1508 = vadd.f32 %v1024, %v1418
        %v1509 = vadd.f32 %v1029, %v1423
        %v1510 = vadd.f32 %v1034, %v1428
        %v1511 = vadd.f32 %v1039, %v1433
        %v1512 = vadd.f32 %v1044, %v1438
        %v1513 = vadd.f32 %v1049, %v1443
        %v1514 = vadd.f32 %v1054, %v1448
        %v1515 = vadd.f32 %v1059, %v1453
        %v1516 = vadd.f32 %v1064, %v1458
        %v1517 = vadd.f32 %v1069, %v1463
        %v1518 = vadd.f32 %v1074, %v1468
        %v1519 = vadd.f32 %v1079, %v1473
        %v1520 = vadd.f32 %v1084, %v1478
        %v1521 = vadd.f32 %v1089, %v1483
        %v1522 = vld [vmem:[%s302 + $0x12] sm:$0xff]
        %v1523 = vld [vmem:[%s302 + $0x1a] sm:$0xff]
        %v1524 = vld [vmem:[%s302 + $0x22] sm:$0xff]
        %v1525 = vld [vmem:[%s302 + $0x2a] sm:$0xff]
        %v1526 = vld [vmem:[%s302 + $0x32] sm:$0xff]
        %v1527 = vld [vmem:[%s302 + $0x3a] sm:$0xff]
        %v1528 = vld [vmem:[%s302 + $0x42] sm:$0xff]
        %v1529 = vld [vmem:[%s302 + $0x4a] sm:$0xff]
        %v1530 = vld [vmem:[%s302 + $0x52] sm:$0xff]
        %v1531 = vld [vmem:[%s302 + $0x5a] sm:$0xff]
        %v1532 = vld [vmem:[%s302 + $0x62] sm:$0xff]
        %v1533 = vld [vmem:[%s302 + $0x6a] sm:$0xff]
        %v1534 = vld [vmem:[%s302 + $0x72] sm:$0xff]
        %v1535 = vld [vmem:[%s302 + $0x7a] sm:$0xff]
        %v1536 = vld [vmem:[%s302 + $0x82] sm:$0xff]
        %v1537 = vld [vmem:[%s302 + $0x8a] sm:$0xff]
        %v1538 = vld [vmem:[%s302 + $0x92] sm:$0xff]
        %v1539 = vld [vmem:[%s302 + $0x9a] sm:$0xff]
        %v1540 = vld [vmem:[%s302 + $0xa2] sm:$0xff]
        %v1541 = vld [vmem:[%s302 + $0xaa] sm:$0xff]
        %v1542 = vld [vmem:[%s302 + $0xb2] sm:$0xff]
        %v1543 = vld [vmem:[%s302 + $0xba] sm:$0xff]
        %v1544 = vld [vmem:[%s302 + $0xc2] sm:$0xff]
        %v1545 = vld [vmem:[%s302 + $0xca] sm:$0xff]
        %v1546 = vld [vmem:[%s302 + $0xd2] sm:$0xff]
        %v1547 = vld [vmem:[%s302 + $0xda] sm:$0xff]
        %v1548 = vld [vmem:[%s302 + $0xe2] sm:$0xff]
        %v1549 = vld [vmem:[%s302 + $0xea] sm:$0xff]
        %v1550 = vld [vmem:[%s302 + $0xf2] sm:$0xff]
        %v1551 = vld [vmem:[%s302 + $0xfa] sm:$0xff]
        %v1552 = vld [vmem:[%s302 + $0x102] sm:$0xff]
        %v1553 = vld [vmem:[%s302 + $0x10a] sm:$0xff]
        %v1554 = vld [vmem:[%s302 + $0x112] sm:$0xff]
        %v1555 = vld [vmem:[%s302 + $0x11a] sm:$0xff]
        %v1556 = vld [vmem:[%s302 + $0x122] sm:$0xff]
        %v1557 = vld [vmem:[%s302 + $0x12a] sm:$0xff]
        %s1558 = scalar_lea.vmem %s2, 12
        %v1559 = vld [vmem:[%s1558] sm:$0xf]
        %v1561 = vsel %vm378, %v1522, 0
        %v1564 = vsel %vm378, %v1523, 0
        %v1567 = vsel %vm378, %v1524, 0
        %v1570 = vsel %vm378, %v1525, 0
        %v1573 = vsel %vm378, %v1526, 0
        %v1576 = vsel %vm378, %v1527, 0
        %v1579 = vsel %vm378, %v1528, 0
        %v1582 = vsel %vm378, %v1529, 0
        %v1585 = vsel %vm378, %v1530, 0
        %v1588 = vsel %vm378, %v1531, 0
        %v1591 = vsel %vm378, %v1532, 0
        %v1594 = vsel %vm378, %v1533, 0
        %v1597 = vsel %vm378, %v1534, 0
        %v1600 = vsel %vm378, %v1535, 0
        %v1603 = vsel %vm378, %v1536, 0
        %v1606 = vsel %vm378, %v1537, 0
        %v1609 = vsel %vm378, %v1538, 0
        %v1612 = vsel %vm378, %v1539, 0
        %v1615 = vsel %vm378, %v1540, 0
        %v1618 = vsel %vm378, %v1541, 0
        %v1621 = vsel %vm378, %v1542, 0
        %v1624 = vsel %vm378, %v1543, 0
        %v1627 = vsel %vm378, %v1544, 0
        %v1630 = vsel %vm378, %v1545, 0
        %v1633 = vsel %vm378, %v1546, 0
        %v1636 = vsel %vm378, %v1547, 0
        %v1639 = vsel %vm378, %v1548, 0
        %v1642 = vsel %vm378, %v1549, 0
        %v1645 = vsel %vm378, %v1550, 0
        %v1648 = vsel %vm378, %v1551, 0
        %v1651 = vsel %vm378, %v1552, 0
        %v1654 = vsel %vm378, %v1553, 0
        %v1657 = vsel %vm378, %v1554, 0
        %v1660 = vsel %vm378, %v1555, 0
        %v1663 = vsel %vm378, %v1556, 0
        %v1666 = vsel %vm378, %v1557, 0
        %v1669 = vsel %vm487, %v1559, 0
        %1671 = vmatprep.subr.mxu0 0.0
        %1672 = vmatpush1.msra.mxu0 0.0
        %1673 = vmatprep.subr.mxu0 0.0
        %1674 = vmatpush1.msra.mxu0 0.0
        %1675 = vmatprep.subr.mxu0 0.0
        %1676 = vmatpush1.msra.mxu0 0.0
        %1677 = vmatprep.subr.mxu0 0.0
        %1678 = vmatpush1.msra.mxu0 0.0
        %1679 = vmatprep.subr.mxu0 0.0
        %1680 = vmatpush1.msra.mxu0 0.0
        %1681 = vmatprep.subr.mxu0 0.0
        %1682 = vmatpush1.msra.mxu0 0.0
        %1683 = vmatprep.subr.mxu0 0.0
        %1684 = vmatpush1.msra.mxu0 0.0
        %1685 = vmatprep.subr.mxu0 0.0
        %1686 = vmatpush1.msra.mxu0 0.0
        %1687 = vmatprep.subr.mxu0 0.0
        %1688 = vmatpush1.msra.mxu0 0.0
        %1689 = vmatprep.subr.mxu0 0.0
        %1690 = vmatpush1.msra.mxu0 0.0
        %1691 = vmatprep.subr.mxu0 0.0
        %1692 = vmatpush1.msra.mxu0 0.0
        %1693 = vmatprep.subr.mxu0 0.0
        %1694 = vmatpush1.msra.mxu0 0.0
        %1695 = vmatprep.subr.mxu0 0.0
        %1696 = vmatpush1.msra.mxu0 0.0
        %1697 = vmatprep.subr.mxu0 0.0
        %1698 = vmatpush1.msra.mxu0 0.0
        %1699 = vmatprep.subr.mxu0 0.0
        %1700 = vmatpush1.msra.mxu0 0.0
        %1701 = vmatprep.subr.mxu0 0.0
        %1702 = vmatpush1.msra.mxu0 %v1669
        %1703 = vmatprep.subr.mxu0 0.0
        %1704 = vmatpush2.msra.mxu0 0.0
        %1705 = vmatprep.subr.mxu0 0.0
        %1706 = vmatpush2.msra.mxu0 0.0
        %1707 = vmatprep.subr.mxu0 0.0
        %1708 = vmatpush2.msra.mxu0 0.0
        %1709 = vmatprep.subr.mxu0 0.0
        %1710 = vmatpush2.msra.mxu0 0.0
        %1711 = vmatprep.subr.mxu0 0.0
        %1712 = vmatpush2.msra.mxu0 0.0
        %1713 = vmatprep.subr.mxu0 0.0
        %1714 = vmatpush2.msra.mxu0 0.0
        %1715 = vmatprep.subr.mxu0 0.0
        %1716 = vmatpush2.msra.mxu0 0.0
        %1717 = vmatprep.subr.mxu0 0.0
        %1718 = vmatpush2.msra.mxu0 0.0
        %1719 = vmatprep.subr.mxu0 0.0
        %1720 = vmatpush2.msra.mxu0 0.0
        %1721 = vmatprep.subr.mxu0 0.0
        %1722 = vmatpush2.msra.mxu0 0.0
        %1723 = vmatprep.subr.mxu0 0.0
        %1724 = vmatpush2.msra.mxu0 0.0
        %1725 = vmatprep.subr.mxu0 0.0
        %1726 = vmatpush2.msra.mxu0 0.0
        %1727 = vmatprep.subr.mxu0 0.0
        %1728 = vmatpush2.msra.mxu0 0.0
        %1729 = vmatprep.subr.mxu0 0.0
        %1730 = vmatpush2.msra.mxu0 0.0
        %1731 = vmatprep.subr.mxu0 0.0
        %1732 = vmatpush2.msra.mxu0 0.0
        %1733 = vmatprep.subr.mxu0 0.0
        %1734 = vmatpush2.msra.mxu0 0.0
        %1735 = vmatprep.mubr.f32.mxu0 0.0
        %1736 = vmatmul.mubr.f32.gmra.mxu0 %v1561
        %v1737 = vpop.f32.mrf.mxu0
        %v1738 = vadd.f32 0.0, %v1737
        %v1739 = vpop.f32.mrf.mxu0
        %1740 = vmatprep.mubr.f32.mxu0 0.0
        %1741 = vmatmul.mubr.f32.gmra.mxu0 %v1564
        %v1742 = vpop.f32.mrf.mxu0
        %v1743 = vadd.f32 0.0, %v1742
        %v1744 = vpop.f32.mrf.mxu0
        %1745 = vmatprep.mubr.f32.mxu0 0.0
        %1746 = vmatmul.mubr.f32.gmra.mxu0 %v1567
        %v1747 = vpop.f32.mrf.mxu0
        %v1748 = vadd.f32 0.0, %v1747
        %v1749 = vpop.f32.mrf.mxu0
        %1750 = vmatprep.mubr.f32.mxu0 0.0
        %1751 = vmatmul.mubr.f32.gmra.mxu0 %v1570
        %v1752 = vpop.f32.mrf.mxu0
        %v1753 = vadd.f32 0.0, %v1752
        %v1754 = vpop.f32.mrf.mxu0
        %1755 = vmatprep.mubr.f32.mxu0 0.0
        %1756 = vmatmul.mubr.f32.gmra.mxu0 %v1573
        %v1757 = vpop.f32.mrf.mxu0
        %v1758 = vadd.f32 0.0, %v1757
        %v1759 = vpop.f32.mrf.mxu0
        %1760 = vmatprep.mubr.f32.mxu0 0.0
        %1761 = vmatmul.mubr.f32.gmra.mxu0 %v1576
        %v1762 = vpop.f32.mrf.mxu0
        %v1763 = vadd.f32 0.0, %v1762
        %v1764 = vpop.f32.mrf.mxu0
        %1765 = vmatprep.mubr.f32.mxu0 0.0
        %1766 = vmatmul.mubr.f32.gmra.mxu0 %v1579
        %v1767 = vpop.f32.mrf.mxu0
        %v1768 = vadd.f32 0.0, %v1767
        %v1769 = vpop.f32.mrf.mxu0
        %1770 = vmatprep.mubr.f32.mxu0 0.0
        %1771 = vmatmul.mubr.f32.gmra.mxu0 %v1582
        %v1772 = vpop.f32.mrf.mxu0
        %v1773 = vadd.f32 0.0, %v1772
        %v1774 = vpop.f32.mrf.mxu0
        %1775 = vmatprep.mubr.f32.mxu0 0.0
        %1776 = vmatmul.mubr.f32.gmra.mxu0 %v1585
        %v1777 = vpop.f32.mrf.mxu0
        %v1778 = vadd.f32 0.0, %v1777
        %v1779 = vpop.f32.mrf.mxu0
        %1780 = vmatprep.mubr.f32.mxu0 0.0
        %1781 = vmatmul.mubr.f32.gmra.mxu0 %v1588
        %v1782 = vpop.f32.mrf.mxu0
        %v1783 = vadd.f32 0.0, %v1782
        %v1784 = vpop.f32.mrf.mxu0
        %1785 = vmatprep.mubr.f32.mxu0 0.0
        %1786 = vmatmul.mubr.f32.gmra.mxu0 %v1591
        %v1787 = vpop.f32.mrf.mxu0
        %v1788 = vadd.f32 0.0, %v1787
        %v1789 = vpop.f32.mrf.mxu0
        %1790 = vmatprep.mubr.f32.mxu0 0.0
        %1791 = vmatmul.mubr.f32.gmra.mxu0 %v1594
        %v1792 = vpop.f32.mrf.mxu0
        %v1793 = vadd.f32 0.0, %v1792
        %v1794 = vpop.f32.mrf.mxu0
        %1795 = vmatprep.mubr.f32.mxu0 0.0
        %1796 = vmatmul.mubr.f32.gmra.mxu0 %v1597
        %v1797 = vpop.f32.mrf.mxu0
        %v1798 = vadd.f32 0.0, %v1797
        %v1799 = vpop.f32.mrf.mxu0
        %1800 = vmatprep.mubr.f32.mxu0 0.0
        %1801 = vmatmul.mubr.f32.gmra.mxu0 %v1600
        %v1802 = vpop.f32.mrf.mxu0
        %v1803 = vadd.f32 0.0, %v1802
        %v1804 = vpop.f32.mrf.mxu0
        %1805 = vmatprep.mubr.f32.mxu0 0.0
        %1806 = vmatmul.mubr.f32.gmra.mxu0 %v1603
        %v1807 = vpop.f32.mrf.mxu0
        %v1808 = vadd.f32 0.0, %v1807
        %v1809 = vpop.f32.mrf.mxu0
        %1810 = vmatprep.mubr.f32.mxu0 0.0
        %1811 = vmatmul.mubr.f32.gmra.mxu0 %v1606
        %v1812 = vpop.f32.mrf.mxu0
        %v1813 = vadd.f32 0.0, %v1812
        %v1814 = vpop.f32.mrf.mxu0
        %1815 = vmatprep.mubr.f32.mxu0 0.0
        %1816 = vmatmul.mubr.f32.gmra.mxu0 %v1609
        %v1817 = vpop.f32.mrf.mxu0
        %v1818 = vadd.f32 0.0, %v1817
        %v1819 = vpop.f32.mrf.mxu0
        %1820 = vmatprep.mubr.f32.mxu0 0.0
        %1821 = vmatmul.mubr.f32.gmra.mxu0 %v1612
        %v1822 = vpop.f32.mrf.mxu0
        %v1823 = vadd.f32 0.0, %v1822
        %v1824 = vpop.f32.mrf.mxu0
        %1825 = vmatprep.mubr.f32.mxu0 0.0
        %1826 = vmatmul.mubr.f32.gmra.mxu0 %v1615
        %v1827 = vpop.f32.mrf.mxu0
        %v1828 = vadd.f32 0.0, %v1827
        %v1829 = vpop.f32.mrf.mxu0
        %1830 = vmatprep.mubr.f32.mxu0 0.0
        %1831 = vmatmul.mubr.f32.gmra.mxu0 %v1618
        %v1832 = vpop.f32.mrf.mxu0
        %v1833 = vadd.f32 0.0, %v1832
        %v1834 = vpop.f32.mrf.mxu0
        %1835 = vmatprep.mubr.f32.mxu0 0.0
        %1836 = vmatmul.mubr.f32.gmra.mxu0 %v1621
        %v1837 = vpop.f32.mrf.mxu0
        %v1838 = vadd.f32 0.0, %v1837
        %v1839 = vpop.f32.mrf.mxu0
        %1840 = vmatprep.mubr.f32.mxu0 0.0
        %1841 = vmatmul.mubr.f32.gmra.mxu0 %v1624
        %v1842 = vpop.f32.mrf.mxu0
        %v1843 = vadd.f32 0.0, %v1842
        %v1844 = vpop.f32.mrf.mxu0
        %1845 = vmatprep.mubr.f32.mxu0 0.0
        %1846 = vmatmul.mubr.f32.gmra.mxu0 %v1627
        %v1847 = vpop.f32.mrf.mxu0
        %v1848 = vadd.f32 0.0, %v1847
        %v1849 = vpop.f32.mrf.mxu0
        %1850 = vmatprep.mubr.f32.mxu0 0.0
        %1851 = vmatmul.mubr.f32.gmra.mxu0 %v1630
        %v1852 = vpop.f32.mrf.mxu0
        %v1853 = vadd.f32 0.0, %v1852
        %v1854 = vpop.f32.mrf.mxu0
        %1855 = vmatprep.mubr.f32.mxu0 0.0
        %1856 = vmatmul.mubr.f32.gmra.mxu0 %v1633
        %v1857 = vpop.f32.mrf.mxu0
        %v1858 = vadd.f32 0.0, %v1857
        %v1859 = vpop.f32.mrf.mxu0
        %1860 = vmatprep.mubr.f32.mxu0 0.0
        %1861 = vmatmul.mubr.f32.gmra.mxu0 %v1636
        %v1862 = vpop.f32.mrf.mxu0
        %v1863 = vadd.f32 0.0, %v1862
        %v1864 = vpop.f32.mrf.mxu0
        %1865 = vmatprep.mubr.f32.mxu0 0.0
        %1866 = vmatmul.mubr.f32.gmra.mxu0 %v1639
        %v1867 = vpop.f32.mrf.mxu0
        %v1868 = vadd.f32 0.0, %v1867
        %v1869 = vpop.f32.mrf.mxu0
        %1870 = vmatprep.mubr.f32.mxu0 0.0
        %1871 = vmatmul.mubr.f32.gmra.mxu0 %v1642
        %v1872 = vpop.f32.mrf.mxu0
        %v1873 = vadd.f32 0.0, %v1872
        %v1874 = vpop.f32.mrf.mxu0
        %1875 = vmatprep.mubr.f32.mxu0 0.0
        %1876 = vmatmul.mubr.f32.gmra.mxu0 %v1645
        %v1877 = vpop.f32.mrf.mxu0
        %v1878 = vadd.f32 0.0, %v1877
        %v1879 = vpop.f32.mrf.mxu0
        %1880 = vmatprep.mubr.f32.mxu0 0.0
        %1881 = vmatmul.mubr.f32.gmra.mxu0 %v1648
        %v1882 = vpop.f32.mrf.mxu0
        %v1883 = vadd.f32 0.0, %v1882
        %v1884 = vpop.f32.mrf.mxu0
        %1885 = vmatprep.mubr.f32.mxu0 0.0
        %1886 = vmatmul.mubr.f32.gmra.mxu0 %v1651
        %v1887 = vpop.f32.mrf.mxu0
        %v1888 = vadd.f32 0.0, %v1887
        %v1889 = vpop.f32.mrf.mxu0
        %1890 = vmatprep.mubr.f32.mxu0 0.0
        %1891 = vmatmul.mubr.f32.gmra.mxu0 %v1654
        %v1892 = vpop.f32.mrf.mxu0
        %v1893 = vadd.f32 0.0, %v1892
        %v1894 = vpop.f32.mrf.mxu0
        %1895 = vmatprep.mubr.f32.mxu0 0.0
        %1896 = vmatmul.mubr.f32.gmra.mxu0 %v1657
        %v1897 = vpop.f32.mrf.mxu0
        %v1898 = vadd.f32 0.0, %v1897
        %v1899 = vpop.f32.mrf.mxu0
        %1900 = vmatprep.mubr.f32.mxu0 0.0
        %1901 = vmatmul.mubr.f32.gmra.mxu0 %v1660
        %v1902 = vpop.f32.mrf.mxu0
        %v1903 = vadd.f32 0.0, %v1902
        %v1904 = vpop.f32.mrf.mxu0
        %1905 = vmatprep.mubr.f32.mxu0 0.0
        %1906 = vmatmul.mubr.f32.gmra.mxu0 %v1663
        %v1907 = vpop.f32.mrf.mxu0
        %v1908 = vadd.f32 0.0, %v1907
        %v1909 = vpop.f32.mrf.mxu0
        %1910 = vmatprep.mubr.f32.mxu0 0.0
        %1911 = vmatmul.mubr.f32.gmra.mxu0 %v1666
        %v1912 = vpop.f32.mrf.mxu0
        %v1913 = vadd.f32 0.0, %v1912
        %v1914 = vpop.f32.mrf.mxu0
        %1915 = vdwg.mxu0
        %v1916 = vadd.f32 %v1486, %v1738
        %v1917 = vadd.f32 %v1487, %v1743
        %v1918 = vadd.f32 %v1488, %v1748
        %v1919 = vadd.f32 %v1489, %v1753
        %v1920 = vadd.f32 %v1490, %v1758
        %v1921 = vadd.f32 %v1491, %v1763
        %v1922 = vadd.f32 %v1492, %v1768
        %v1923 = vadd.f32 %v1493, %v1773
        %v1924 = vadd.f32 %v1494, %v1778
        %v1925 = vadd.f32 %v1495, %v1783
        %v1926 = vadd.f32 %v1496, %v1788
        %v1927 = vadd.f32 %v1497, %v1793
        %v1928 = vadd.f32 %v1498, %v1798
        %v1929 = vadd.f32 %v1499, %v1803
        %v1930 = vadd.f32 %v1500, %v1808
        %v1931 = vadd.f32 %v1501, %v1813
        %v1932 = vadd.f32 %v1502, %v1818
        %v1933 = vadd.f32 %v1503, %v1823
        %v1934 = vadd.f32 %v1504, %v1828
        %v1935 = vadd.f32 %v1505, %v1833
        %v1936 = vadd.f32 %v1506, %v1838
        %v1937 = vadd.f32 %v1507, %v1843
        %v1938 = vadd.f32 %v1508, %v1848
        %v1939 = vadd.f32 %v1509, %v1853
        %v1940 = vadd.f32 %v1510, %v1858
        %v1941 = vadd.f32 %v1511, %v1863
        %v1942 = vadd.f32 %v1512, %v1868
        %v1943 = vadd.f32 %v1513, %v1873
        %v1944 = vadd.f32 %v1514, %v1878
        %v1945 = vadd.f32 %v1515, %v1883
        %v1946 = vadd.f32 %v1516, %v1888
        %v1947 = vadd.f32 %v1517, %v1893
        %v1948 = vadd.f32 %v1518, %v1898
        %v1949 = vadd.f32 %v1519, %v1903
        %v1950 = vadd.f32 %v1520, %v1908
        %v1951 = vadd.f32 %v1521, %v1913
        %v1952 = vld [vmem:[%s302 + $0x13] sm:$0xff]
        %v1953 = vld [vmem:[%s302 + $0x1b] sm:$0xff]
        %v1954 = vld [vmem:[%s302 + $0x23] sm:$0xff]
        %v1955 = vld [vmem:[%s302 + $0x2b] sm:$0xff]
        %v1956 = vld [vmem:[%s302 + $0x33] sm:$0xff]
        %v1957 = vld [vmem:[%s302 + $0x3b] sm:$0xff]
        %v1958 = vld [vmem:[%s302 + $0x43] sm:$0xff]
        %v1959 = vld [vmem:[%s302 + $0x4b] sm:$0xff]
        %v1960 = vld [vmem:[%s302 + $0x53] sm:$0xff]
        %v1961 = vld [vmem:[%s302 + $0x5b] sm:$0xff]
        %v1962 = vld [vmem:[%s302 + $0x63] sm:$0xff]
        %v1963 = vld [vmem:[%s302 + $0x6b] sm:$0xff]
        %v1964 = vld [vmem:[%s302 + $0x73] sm:$0xff]
        %v1965 = vld [vmem:[%s302 + $0x7b] sm:$0xff]
        %v1966 = vld [vmem:[%s302 + $0x83] sm:$0xff]
        %v1967 = vld [vmem:[%s302 + $0x8b] sm:$0xff]
        %v1968 = vld [vmem:[%s302 + $0x93] sm:$0xff]
        %v1969 = vld [vmem:[%s302 + $0x9b] sm:$0xff]
        %v1970 = vld [vmem:[%s302 + $0xa3] sm:$0xff]
        %v1971 = vld [vmem:[%s302 + $0xab] sm:$0xff]
        %v1972 = vld [vmem:[%s302 + $0xb3] sm:$0xff]
        %v1973 = vld [vmem:[%s302 + $0xbb] sm:$0xff]
        %v1974 = vld [vmem:[%s302 + $0xc3] sm:$0xff]
        %v1975 = vld [vmem:[%s302 + $0xcb] sm:$0xff]
        %v1976 = vld [vmem:[%s302 + $0xd3] sm:$0xff]
        %v1977 = vld [vmem:[%s302 + $0xdb] sm:$0xff]
        %v1978 = vld [vmem:[%s302 + $0xe3] sm:$0xff]
        %v1979 = vld [vmem:[%s302 + $0xeb] sm:$0xff]
        %v1980 = vld [vmem:[%s302 + $0xf3] sm:$0xff]
        %v1981 = vld [vmem:[%s302 + $0xfb] sm:$0xff]
        %v1982 = vld [vmem:[%s302 + $0x103] sm:$0xff]
        %v1983 = vld [vmem:[%s302 + $0x10b] sm:$0xff]
        %v1984 = vld [vmem:[%s302 + $0x113] sm:$0xff]
        %v1985 = vld [vmem:[%s302 + $0x11b] sm:$0xff]
        %v1986 = vld [vmem:[%s302 + $0x123] sm:$0xff]
        %v1987 = vld [vmem:[%s302 + $0x12b] sm:$0xff]
        %s1988 = scalar_lea.vmem %s2, 16
        %v1989 = vld [vmem:[%s1988] sm:$0xf]
        %v1991 = vsel %vm378, %v1952, 0
        %v1994 = vsel %vm378, %v1953, 0
        %v1997 = vsel %vm378, %v1954, 0
        %v2000 = vsel %vm378, %v1955, 0
        %v2003 = vsel %vm378, %v1956, 0
        %v2006 = vsel %vm378, %v1957, 0
        %v2009 = vsel %vm378, %v1958, 0
        %v2012 = vsel %vm378, %v1959, 0
        %v2015 = vsel %vm378, %v1960, 0
        %v2018 = vsel %vm378, %v1961, 0
        %v2021 = vsel %vm378, %v1962, 0
        %v2024 = vsel %vm378, %v1963, 0
        %v2027 = vsel %vm378, %v1964, 0
        %v2030 = vsel %vm378, %v1965, 0
        %v2033 = vsel %vm378, %v1966, 0
        %v2036 = vsel %vm378, %v1967, 0
        %v2039 = vsel %vm378, %v1968, 0
        %v2042 = vsel %vm378, %v1969, 0
        %v2045 = vsel %vm378, %v1970, 0
        %v2048 = vsel %vm378, %v1971, 0
        %v2051 = vsel %vm378, %v1972, 0
        %v2054 = vsel %vm378, %v1973, 0
        %v2057 = vsel %vm378, %v1974, 0
        %v2060 = vsel %vm378, %v1975, 0
        %v2063 = vsel %vm378, %v1976, 0
        %v2066 = vsel %vm378, %v1977, 0
        %v2069 = vsel %vm378, %v1978, 0
        %v2072 = vsel %vm378, %v1979, 0
        %v2075 = vsel %vm378, %v1980, 0
        %v2078 = vsel %vm378, %v1981, 0
        %v2081 = vsel %vm378, %v1982, 0
        %v2084 = vsel %vm378, %v1983, 0
        %v2087 = vsel %vm378, %v1984, 0
        %v2090 = vsel %vm378, %v1985, 0
        %v2093 = vsel %vm378, %v1986, 0
        %v2096 = vsel %vm378, %v1987, 0
        %v2099 = vsel %vm487, %v1989, 0
        %2101 = vmatprep.subr.mxu0 0.0
        %2102 = vmatpush1.msra.mxu0 0.0
        %2103 = vmatprep.subr.mxu0 0.0
        %2104 = vmatpush1.msra.mxu0 0.0
        %2105 = vmatprep.subr.mxu0 0.0
        %2106 = vmatpush1.msra.mxu0 0.0
        %2107 = vmatprep.subr.mxu0 0.0
        %2108 = vmatpush1.msra.mxu0 0.0
        %2109 = vmatprep.subr.mxu0 0.0
        %2110 = vmatpush1.msra.mxu0 0.0
        %2111 = vmatprep.subr.mxu0 0.0
        %2112 = vmatpush1.msra.mxu0 0.0
        %2113 = vmatprep.subr.mxu0 0.0
        %2114 = vmatpush1.msra.mxu0 0.0
        %2115 = vmatprep.subr.mxu0 0.0
        %2116 = vmatpush1.msra.mxu0 0.0
        %2117 = vmatprep.subr.mxu0 0.0
        %2118 = vmatpush1.msra.mxu0 0.0
        %2119 = vmatprep.subr.mxu0 0.0
        %2120 = vmatpush1.msra.mxu0 0.0
        %2121 = vmatprep.subr.mxu0 0.0
        %2122 = vmatpush1.msra.mxu0 0.0
        %2123 = vmatprep.subr.mxu0 0.0
        %2124 = vmatpush1.msra.mxu0 0.0
        %2125 = vmatprep.subr.mxu0 0.0
        %2126 = vmatpush1.msra.mxu0 0.0
        %2127 = vmatprep.subr.mxu0 0.0
        %2128 = vmatpush1.msra.mxu0 0.0
        %2129 = vmatprep.subr.mxu0 0.0
        %2130 = vmatpush1.msra.mxu0 0.0
        %2131 = vmatprep.subr.mxu0 0.0
        %2132 = vmatpush1.msra.mxu0 %v2099
        %2133 = vmatprep.subr.mxu0 0.0
        %2134 = vmatpush2.msra.mxu0 0.0
        %2135 = vmatprep.subr.mxu0 0.0
        %2136 = vmatpush2.msra.mxu0 0.0
        %2137 = vmatprep.subr.mxu0 0.0
        %2138 = vmatpush2.msra.mxu0 0.0
        %2139 = vmatprep.subr.mxu0 0.0
        %2140 = vmatpush2.msra.mxu0 0.0
        %2141 = vmatprep.subr.mxu0 0.0
        %2142 = vmatpush2.msra.mxu0 0.0
        %2143 = vmatprep.subr.mxu0 0.0
        %2144 = vmatpush2.msra.mxu0 0.0
        %2145 = vmatprep.subr.mxu0 0.0
        %2146 = vmatpush2.msra.mxu0 0.0
        %2147 = vmatprep.subr.mxu0 0.0
        %2148 = vmatpush2.msra.mxu0 0.0
        %2149 = vmatprep.subr.mxu0 0.0
        %2150 = vmatpush2.msra.mxu0 0.0
        %2151 = vmatprep.subr.mxu0 0.0
        %2152 = vmatpush2.msra.mxu0 0.0
        %2153 = vmatprep.subr.mxu0 0.0
        %2154 = vmatpush2.msra.mxu0 0.0
        %2155 = vmatprep.subr.mxu0 0.0
        %2156 = vmatpush2.msra.mxu0 0.0
        %2157 = vmatprep.subr.mxu0 0.0
        %2158 = vmatpush2.msra.mxu0 0.0
        %2159 = vmatprep.subr.mxu0 0.0
        %2160 = vmatpush2.msra.mxu0 0.0
        %2161 = vmatprep.subr.mxu0 0.0
        %2162 = vmatpush2.msra.mxu0 0.0
        %2163 = vmatprep.subr.mxu0 0.0
        %2164 = vmatpush2.msra.mxu0 0.0
        %2165 = vmatprep.mubr.f32.mxu0 0.0
        %2166 = vmatmul.mubr.f32.gmra.mxu0 %v1991
        %v2167 = vpop.f32.mrf.mxu0
        %v2168 = vadd.f32 0.0, %v2167
        %v2169 = vpop.f32.mrf.mxu0
        %2170 = vmatprep.mubr.f32.mxu0 0.0
        %2171 = vmatmul.mubr.f32.gmra.mxu0 %v1994
        %v2172 = vpop.f32.mrf.mxu0
        %v2173 = vadd.f32 0.0, %v2172
        %v2174 = vpop.f32.mrf.mxu0
        %2175 = vmatprep.mubr.f32.mxu0 0.0
        %2176 = vmatmul.mubr.f32.gmra.mxu0 %v1997
        %v2177 = vpop.f32.mrf.mxu0
        %v2178 = vadd.f32 0.0, %v2177
        %v2179 = vpop.f32.mrf.mxu0
        %2180 = vmatprep.mubr.f32.mxu0 0.0
        %2181 = vmatmul.mubr.f32.gmra.mxu0 %v2000
        %v2182 = vpop.f32.mrf.mxu0
        %v2183 = vadd.f32 0.0, %v2182
        %v2184 = vpop.f32.mrf.mxu0
        %2185 = vmatprep.mubr.f32.mxu0 0.0
        %2186 = vmatmul.mubr.f32.gmra.mxu0 %v2003
        %v2187 = vpop.f32.mrf.mxu0
        %v2188 = vadd.f32 0.0, %v2187
        %v2189 = vpop.f32.mrf.mxu0
        %2190 = vmatprep.mubr.f32.mxu0 0.0
        %2191 = vmatmul.mubr.f32.gmra.mxu0 %v2006
        %v2192 = vpop.f32.mrf.mxu0
        %v2193 = vadd.f32 0.0, %v2192
        %v2194 = vpop.f32.mrf.mxu0
        %2195 = vmatprep.mubr.f32.mxu0 0.0
        %2196 = vmatmul.mubr.f32.gmra.mxu0 %v2009
        %v2197 = vpop.f32.mrf.mxu0
        %v2198 = vadd.f32 0.0, %v2197
        %v2199 = vpop.f32.mrf.mxu0
        %2200 = vmatprep.mubr.f32.mxu0 0.0
        %2201 = vmatmul.mubr.f32.gmra.mxu0 %v2012
        %v2202 = vpop.f32.mrf.mxu0
        %v2203 = vadd.f32 0.0, %v2202
        %v2204 = vpop.f32.mrf.mxu0
        %2205 = vmatprep.mubr.f32.mxu0 0.0
        %2206 = vmatmul.mubr.f32.gmra.mxu0 %v2015
        %v2207 = vpop.f32.mrf.mxu0
        %v2208 = vadd.f32 0.0, %v2207
        %v2209 = vpop.f32.mrf.mxu0
        %2210 = vmatprep.mubr.f32.mxu0 0.0
        %2211 = vmatmul.mubr.f32.gmra.mxu0 %v2018
        %v2212 = vpop.f32.mrf.mxu0
        %v2213 = vadd.f32 0.0, %v2212
        %v2214 = vpop.f32.mrf.mxu0
        %2215 = vmatprep.mubr.f32.mxu0 0.0
        %2216 = vmatmul.mubr.f32.gmra.mxu0 %v2021
        %v2217 = vpop.f32.mrf.mxu0
        %v2218 = vadd.f32 0.0, %v2217
        %v2219 = vpop.f32.mrf.mxu0
        %2220 = vmatprep.mubr.f32.mxu0 0.0
        %2221 = vmatmul.mubr.f32.gmra.mxu0 %v2024
        %v2222 = vpop.f32.mrf.mxu0
        %v2223 = vadd.f32 0.0, %v2222
        %v2224 = vpop.f32.mrf.mxu0
        %2225 = vmatprep.mubr.f32.mxu0 0.0
        %2226 = vmatmul.mubr.f32.gmra.mxu0 %v2027
        %v2227 = vpop.f32.mrf.mxu0
        %v2228 = vadd.f32 0.0, %v2227
        %v2229 = vpop.f32.mrf.mxu0
        %2230 = vmatprep.mubr.f32.mxu0 0.0
        %2231 = vmatmul.mubr.f32.gmra.mxu0 %v2030
        %v2232 = vpop.f32.mrf.mxu0
        %v2233 = vadd.f32 0.0, %v2232
        %v2234 = vpop.f32.mrf.mxu0
        %2235 = vmatprep.mubr.f32.mxu0 0.0
        %2236 = vmatmul.mubr.f32.gmra.mxu0 %v2033
        %v2237 = vpop.f32.mrf.mxu0
        %v2238 = vadd.f32 0.0, %v2237
        %v2239 = vpop.f32.mrf.mxu0
        %2240 = vmatprep.mubr.f32.mxu0 0.0
        %2241 = vmatmul.mubr.f32.gmra.mxu0 %v2036
        %v2242 = vpop.f32.mrf.mxu0
        %v2243 = vadd.f32 0.0, %v2242
        %v2244 = vpop.f32.mrf.mxu0
        %2245 = vmatprep.mubr.f32.mxu0 0.0
        %2246 = vmatmul.mubr.f32.gmra.mxu0 %v2039
        %v2247 = vpop.f32.mrf.mxu0
        %v2248 = vadd.f32 0.0, %v2247
        %v2249 = vpop.f32.mrf.mxu0
        %2250 = vmatprep.mubr.f32.mxu0 0.0
        %2251 = vmatmul.mubr.f32.gmra.mxu0 %v2042
        %v2252 = vpop.f32.mrf.mxu0
        %v2253 = vadd.f32 0.0, %v2252
        %v2254 = vpop.f32.mrf.mxu0
        %2255 = vmatprep.mubr.f32.mxu0 0.0
        %2256 = vmatmul.mubr.f32.gmra.mxu0 %v2045
        %v2257 = vpop.f32.mrf.mxu0
        %v2258 = vadd.f32 0.0, %v2257
        %v2259 = vpop.f32.mrf.mxu0
        %2260 = vmatprep.mubr.f32.mxu0 0.0
        %2261 = vmatmul.mubr.f32.gmra.mxu0 %v2048
        %v2262 = vpop.f32.mrf.mxu0
        %v2263 = vadd.f32 0.0, %v2262
        %v2264 = vpop.f32.mrf.mxu0
        %2265 = vmatprep.mubr.f32.mxu0 0.0
        %2266 = vmatmul.mubr.f32.gmra.mxu0 %v2051
        %v2267 = vpop.f32.mrf.mxu0
        %v2268 = vadd.f32 0.0, %v2267
        %v2269 = vpop.f32.mrf.mxu0
        %2270 = vmatprep.mubr.f32.mxu0 0.0
        %2271 = vmatmul.mubr.f32.gmra.mxu0 %v2054
        %v2272 = vpop.f32.mrf.mxu0
        %v2273 = vadd.f32 0.0, %v2272
        %v2274 = vpop.f32.mrf.mxu0
        %2275 = vmatprep.mubr.f32.mxu0 0.0
        %2276 = vmatmul.mubr.f32.gmra.mxu0 %v2057
        %v2277 = vpop.f32.mrf.mxu0
        %v2278 = vadd.f32 0.0, %v2277
        %v2279 = vpop.f32.mrf.mxu0
        %2280 = vmatprep.mubr.f32.mxu0 0.0
        %2281 = vmatmul.mubr.f32.gmra.mxu0 %v2060
        %v2282 = vpop.f32.mrf.mxu0
        %v2283 = vadd.f32 0.0, %v2282
        %v2284 = vpop.f32.mrf.mxu0
        %2285 = vmatprep.mubr.f32.mxu0 0.0
        %2286 = vmatmul.mubr.f32.gmra.mxu0 %v2063
        %v2287 = vpop.f32.mrf.mxu0
        %v2288 = vadd.f32 0.0, %v2287
        %v2289 = vpop.f32.mrf.mxu0
        %2290 = vmatprep.mubr.f32.mxu0 0.0
        %2291 = vmatmul.mubr.f32.gmra.mxu0 %v2066
        %v2292 = vpop.f32.mrf.mxu0
        %v2293 = vadd.f32 0.0, %v2292
        %v2294 = vpop.f32.mrf.mxu0
        %2295 = vmatprep.mubr.f32.mxu0 0.0
        %2296 = vmatmul.mubr.f32.gmra.mxu0 %v2069
        %v2297 = vpop.f32.mrf.mxu0
        %v2298 = vadd.f32 0.0, %v2297
        %v2299 = vpop.f32.mrf.mxu0
        %2300 = vmatprep.mubr.f32.mxu0 0.0
        %2301 = vmatmul.mubr.f32.gmra.mxu0 %v2072
        %v2302 = vpop.f32.mrf.mxu0
        %v2303 = vadd.f32 0.0, %v2302
        %v2304 = vpop.f32.mrf.mxu0
        %2305 = vmatprep.mubr.f32.mxu0 0.0
        %2306 = vmatmul.mubr.f32.gmra.mxu0 %v2075
        %v2307 = vpop.f32.mrf.mxu0
        %v2308 = vadd.f32 0.0, %v2307
        %v2309 = vpop.f32.mrf.mxu0
        %2310 = vmatprep.mubr.f32.mxu0 0.0
        %2311 = vmatmul.mubr.f32.gmra.mxu0 %v2078
        %v2312 = vpop.f32.mrf.mxu0
        %v2313 = vadd.f32 0.0, %v2312
        %v2314 = vpop.f32.mrf.mxu0
        %2315 = vmatprep.mubr.f32.mxu0 0.0
        %2316 = vmatmul.mubr.f32.gmra.mxu0 %v2081
        %v2317 = vpop.f32.mrf.mxu0
        %v2318 = vadd.f32 0.0, %v2317
        %v2319 = vpop.f32.mrf.mxu0
        %2320 = vmatprep.mubr.f32.mxu0 0.0
        %2321 = vmatmul.mubr.f32.gmra.mxu0 %v2084
        %v2322 = vpop.f32.mrf.mxu0
        %v2323 = vadd.f32 0.0, %v2322
        %v2324 = vpop.f32.mrf.mxu0
        %2325 = vmatprep.mubr.f32.mxu0 0.0
        %2326 = vmatmul.mubr.f32.gmra.mxu0 %v2087
        %v2327 = vpop.f32.mrf.mxu0
        %v2328 = vadd.f32 0.0, %v2327
        %v2329 = vpop.f32.mrf.mxu0
        %2330 = vmatprep.mubr.f32.mxu0 0.0
        %2331 = vmatmul.mubr.f32.gmra.mxu0 %v2090
        %v2332 = vpop.f32.mrf.mxu0
        %v2333 = vadd.f32 0.0, %v2332
        %v2334 = vpop.f32.mrf.mxu0
        %2335 = vmatprep.mubr.f32.mxu0 0.0
        %2336 = vmatmul.mubr.f32.gmra.mxu0 %v2093
        %v2337 = vpop.f32.mrf.mxu0
        %v2338 = vadd.f32 0.0, %v2337
        %v2339 = vpop.f32.mrf.mxu0
        %2340 = vmatprep.mubr.f32.mxu0 0.0
        %2341 = vmatmul.mubr.f32.gmra.mxu0 %v2096
        %v2342 = vpop.f32.mrf.mxu0
        %v2343 = vadd.f32 0.0, %v2342
        %v2344 = vpop.f32.mrf.mxu0
        %2345 = vdwg.mxu0
        %v2346 = vadd.f32 %v1916, %v2168
        %v2347 = vadd.f32 %v1917, %v2173
        %v2348 = vadd.f32 %v1918, %v2178
        %v2349 = vadd.f32 %v1919, %v2183
        %v2350 = vadd.f32 %v1920, %v2188
        %v2351 = vadd.f32 %v1921, %v2193
        %v2352 = vadd.f32 %v1922, %v2198
        %v2353 = vadd.f32 %v1923, %v2203
        %v2354 = vadd.f32 %v1924, %v2208
        %v2355 = vadd.f32 %v1925, %v2213
        %v2356 = vadd.f32 %v1926, %v2218
        %v2357 = vadd.f32 %v1927, %v2223
        %v2358 = vadd.f32 %v1928, %v2228
        %v2359 = vadd.f32 %v1929, %v2233
        %v2360 = vadd.f32 %v1930, %v2238
        %v2361 = vadd.f32 %v1931, %v2243
        %v2362 = vadd.f32 %v1932, %v2248
        %v2363 = vadd.f32 %v1933, %v2253
        %v2364 = vadd.f32 %v1934, %v2258
        %v2365 = vadd.f32 %v1935, %v2263
        %v2366 = vadd.f32 %v1936, %v2268
        %v2367 = vadd.f32 %v1937, %v2273
        %v2368 = vadd.f32 %v1938, %v2278
        %v2369 = vadd.f32 %v1939, %v2283
        %v2370 = vadd.f32 %v1940, %v2288
        %v2371 = vadd.f32 %v1941, %v2293
        %v2372 = vadd.f32 %v1942, %v2298
        %v2373 = vadd.f32 %v1943, %v2303
        %v2374 = vadd.f32 %v1944, %v2308
        %v2375 = vadd.f32 %v1945, %v2313
        %v2376 = vadd.f32 %v1946, %v2318
        %v2377 = vadd.f32 %v1947, %v2323
        %v2378 = vadd.f32 %v1948, %v2328
        %v2379 = vadd.f32 %v1949, %v2333
        %v2380 = vadd.f32 %v1950, %v2338
        %v2381 = vadd.f32 %v1951, %v2343
        %v2382 = vld [vmem:[%s302 + $0x14] sm:$0xff]
        %v2383 = vld [vmem:[%s302 + $0x1c] sm:$0xff]
        %v2384 = vld [vmem:[%s302 + $0x24] sm:$0xff]
        %v2385 = vld [vmem:[%s302 + $0x2c] sm:$0xff]
        %v2386 = vld [vmem:[%s302 + $0x34] sm:$0xff]
        %v2387 = vld [vmem:[%s302 + $0x3c] sm:$0xff]
        %v2388 = vld [vmem:[%s302 + $0x44] sm:$0xff]
        %v2389 = vld [vmem:[%s302 + $0x4c] sm:$0xff]
        %v2390 = vld [vmem:[%s302 + $0x54] sm:$0xff]
        %v2391 = vld [vmem:[%s302 + $0x5c] sm:$0xff]
        %v2392 = vld [vmem:[%s302 + $0x64] sm:$0xff]
        %v2393 = vld [vmem:[%s302 + $0x6c] sm:$0xff]
        %v2394 = vld [vmem:[%s302 + $0x74] sm:$0xff]
        %v2395 = vld [vmem:[%s302 + $0x7c] sm:$0xff]
        %v2396 = vld [vmem:[%s302 + $0x84] sm:$0xff]
        %v2397 = vld [vmem:[%s302 + $0x8c] sm:$0xff]
        %v2398 = vld [vmem:[%s302 + $0x94] sm:$0xff]
        %v2399 = vld [vmem:[%s302 + $0x9c] sm:$0xff]
        %v2400 = vld [vmem:[%s302 + $0xa4] sm:$0xff]
        %v2401 = vld [vmem:[%s302 + $0xac] sm:$0xff]
        %v2402 = vld [vmem:[%s302 + $0xb4] sm:$0xff]
        %v2403 = vld [vmem:[%s302 + $0xbc] sm:$0xff]
        %v2404 = vld [vmem:[%s302 + $0xc4] sm:$0xff]
        %v2405 = vld [vmem:[%s302 + $0xcc] sm:$0xff]
        %v2406 = vld [vmem:[%s302 + $0xd4] sm:$0xff]
        %v2407 = vld [vmem:[%s302 + $0xdc] sm:$0xff]
        %v2408 = vld [vmem:[%s302 + $0xe4] sm:$0xff]
        %v2409 = vld [vmem:[%s302 + $0xec] sm:$0xff]
        %v2410 = vld [vmem:[%s302 + $0xf4] sm:$0xff]
        %v2411 = vld [vmem:[%s302 + $0xfc] sm:$0xff]
        %v2412 = vld [vmem:[%s302 + $0x104] sm:$0xff]
        %v2413 = vld [vmem:[%s302 + $0x10c] sm:$0xff]
        %v2414 = vld [vmem:[%s302 + $0x114] sm:$0xff]
        %v2415 = vld [vmem:[%s302 + $0x11c] sm:$0xff]
        %v2416 = vld [vmem:[%s302 + $0x124] sm:$0xff]
        %v2417 = vld [vmem:[%s302 + $0x12c] sm:$0xff]
        %s2418 = scalar_lea.vmem %s2, 20
        %v2419 = vld [vmem:[%s2418] sm:$0xf]
        %v2421 = vsel %vm378, %v2382, 0
        %v2424 = vsel %vm378, %v2383, 0
        %v2427 = vsel %vm378, %v2384, 0
        %v2430 = vsel %vm378, %v2385, 0
        %v2433 = vsel %vm378, %v2386, 0
        %v2436 = vsel %vm378, %v2387, 0
        %v2439 = vsel %vm378, %v2388, 0
        %v2442 = vsel %vm378, %v2389, 0
        %v2445 = vsel %vm378, %v2390, 0
        %v2448 = vsel %vm378, %v2391, 0
        %v2451 = vsel %vm378, %v2392, 0
        %v2454 = vsel %vm378, %v2393, 0
        %v2457 = vsel %vm378, %v2394, 0
        %v2460 = vsel %vm378, %v2395, 0
        %v2463 = vsel %vm378, %v2396, 0
        %v2466 = vsel %vm378, %v2397, 0
        %v2469 = vsel %vm378, %v2398, 0
        %v2472 = vsel %vm378, %v2399, 0
        %v2475 = vsel %vm378, %v2400, 0
        %v2478 = vsel %vm378, %v2401, 0
        %v2481 = vsel %vm378, %v2402, 0
        %v2484 = vsel %vm378, %v2403, 0
        %v2487 = vsel %vm378, %v2404, 0
        %v2490 = vsel %vm378, %v2405, 0
        %v2493 = vsel %vm378, %v2406, 0
        %v2496 = vsel %vm378, %v2407, 0
        %v2499 = vsel %vm378, %v2408, 0
        %v2502 = vsel %vm378, %v2409, 0
        %v2505 = vsel %vm378, %v2410, 0
        %v2508 = vsel %vm378, %v2411, 0
        %v2511 = vsel %vm378, %v2412, 0
        %v2514 = vsel %vm378, %v2413, 0
        %v2517 = vsel %vm378, %v2414, 0
        %v2520 = vsel %vm378, %v2415, 0
        %v2523 = vsel %vm378, %v2416, 0
        %v2526 = vsel %vm378, %v2417, 0
        %v2529 = vsel %vm487, %v2419, 0
        %2531 = vmatprep.subr.mxu0 0.0
        %2532 = vmatpush1.msra.mxu0 0.0
        %2533 = vmatprep.subr.mxu0 0.0
        %2534 = vmatpush1.msra.mxu0 0.0
        %2535 = vmatprep.subr.mxu0 0.0
        %2536 = vmatpush1.msra.mxu0 0.0
        %2537 = vmatprep.subr.mxu0 0.0
        %2538 = vmatpush1.msra.mxu0 0.0
        %2539 = vmatprep.subr.mxu0 0.0
        %2540 = vmatpush1.msra.mxu0 0.0
        %2541 = vmatprep.subr.mxu0 0.0
        %2542 = vmatpush1.msra.mxu0 0.0
        %2543 = vmatprep.subr.mxu0 0.0
        %2544 = vmatpush1.msra.mxu0 0.0
        %2545 = vmatprep.subr.mxu0 0.0
        %2546 = vmatpush1.msra.mxu0 0.0
        %2547 = vmatprep.subr.mxu0 0.0
        %2548 = vmatpush1.msra.mxu0 0.0
        %2549 = vmatprep.subr.mxu0 0.0
        %2550 = vmatpush1.msra.mxu0 0.0
        %2551 = vmatprep.subr.mxu0 0.0
        %2552 = vmatpush1.msra.mxu0 0.0
        %2553 = vmatprep.subr.mxu0 0.0
        %2554 = vmatpush1.msra.mxu0 0.0
        %2555 = vmatprep.subr.mxu0 0.0
        %2556 = vmatpush1.msra.mxu0 0.0
        %2557 = vmatprep.subr.mxu0 0.0
        %2558 = vmatpush1.msra.mxu0 0.0
        %2559 = vmatprep.subr.mxu0 0.0
        %2560 = vmatpush1.msra.mxu0 0.0
        %2561 = vmatprep.subr.mxu0 0.0
        %2562 = vmatpush1.msra.mxu0 %v2529
        %2563 = vmatprep.subr.mxu0 0.0
        %2564 = vmatpush2.msra.mxu0 0.0
        %2565 = vmatprep.subr.mxu0 0.0
        %2566 = vmatpush2.msra.mxu0 0.0
        %2567 = vmatprep.subr.mxu0 0.0
        %2568 = vmatpush2.msra.mxu0 0.0
        %2569 = vmatprep.subr.mxu0 0.0
        %2570 = vmatpush2.msra.mxu0 0.0
        %2571 = vmatprep.subr.mxu0 0.0
        %2572 = vmatpush2.msra.mxu0 0.0
        %2573 = vmatprep.subr.mxu0 0.0
        %2574 = vmatpush2.msra.mxu0 0.0
        %2575 = vmatprep.subr.mxu0 0.0
        %2576 = vmatpush2.msra.mxu0 0.0
        %2577 = vmatprep.subr.mxu0 0.0
        %2578 = vmatpush2.msra.mxu0 0.0
        %2579 = vmatprep.subr.mxu0 0.0
        %2580 = vmatpush2.msra.mxu0 0.0
        %2581 = vmatprep.subr.mxu0 0.0
        %2582 = vmatpush2.msra.mxu0 0.0
        %2583 = vmatprep.subr.mxu0 0.0
        %2584 = vmatpush2.msra.mxu0 0.0
        %2585 = vmatprep.subr.mxu0 0.0
        %2586 = vmatpush2.msra.mxu0 0.0
        %2587 = vmatprep.subr.mxu0 0.0
        %2588 = vmatpush2.msra.mxu0 0.0
        %2589 = vmatprep.subr.mxu0 0.0
        %2590 = vmatpush2.msra.mxu0 0.0
        %2591 = vmatprep.subr.mxu0 0.0
        %2592 = vmatpush2.msra.mxu0 0.0
        %2593 = vmatprep.subr.mxu0 0.0
        %2594 = vmatpush2.msra.mxu0 0.0
        %2595 = vmatprep.mubr.f32.mxu0 0.0
        %2596 = vmatmul.mubr.f32.gmra.mxu0 %v2421
        %v2597 = vpop.f32.mrf.mxu0
        %v2598 = vadd.f32 0.0, %v2597
        %v2599 = vpop.f32.mrf.mxu0
        %2600 = vmatprep.mubr.f32.mxu0 0.0
        %2601 = vmatmul.mubr.f32.gmra.mxu0 %v2424
        %v2602 = vpop.f32.mrf.mxu0
        %v2603 = vadd.f32 0.0, %v2602
        %v2604 = vpop.f32.mrf.mxu0
        %2605 = vmatprep.mubr.f32.mxu0 0.0
        %2606 = vmatmul.mubr.f32.gmra.mxu0 %v2427
        %v2607 = vpop.f32.mrf.mxu0
        %v2608 = vadd.f32 0.0, %v2607
        %v2609 = vpop.f32.mrf.mxu0
        %2610 = vmatprep.mubr.f32.mxu0 0.0
        %2611 = vmatmul.mubr.f32.gmra.mxu0 %v2430
        %v2612 = vpop.f32.mrf.mxu0
        %v2613 = vadd.f32 0.0, %v2612
        %v2614 = vpop.f32.mrf.mxu0
        %2615 = vmatprep.mubr.f32.mxu0 0.0
        %2616 = vmatmul.mubr.f32.gmra.mxu0 %v2433
        %v2617 = vpop.f32.mrf.mxu0
        %v2618 = vadd.f32 0.0, %v2617
        %v2619 = vpop.f32.mrf.mxu0
        %2620 = vmatprep.mubr.f32.mxu0 0.0
        %2621 = vmatmul.mubr.f32.gmra.mxu0 %v2436
        %v2622 = vpop.f32.mrf.mxu0
        %v2623 = vadd.f32 0.0, %v2622
        %v2624 = vpop.f32.mrf.mxu0
        %2625 = vmatprep.mubr.f32.mxu0 0.0
        %2626 = vmatmul.mubr.f32.gmra.mxu0 %v2439
        %v2627 = vpop.f32.mrf.mxu0
        %v2628 = vadd.f32 0.0, %v2627
        %v2629 = vpop.f32.mrf.mxu0
        %2630 = vmatprep.mubr.f32.mxu0 0.0
        %2631 = vmatmul.mubr.f32.gmra.mxu0 %v2442
        %v2632 = vpop.f32.mrf.mxu0
        %v2633 = vadd.f32 0.0, %v2632
        %v2634 = vpop.f32.mrf.mxu0
        %2635 = vmatprep.mubr.f32.mxu0 0.0
        %2636 = vmatmul.mubr.f32.gmra.mxu0 %v2445
        %v2637 = vpop.f32.mrf.mxu0
        %v2638 = vadd.f32 0.0, %v2637
        %v2639 = vpop.f32.mrf.mxu0
        %2640 = vmatprep.mubr.f32.mxu0 0.0
        %2641 = vmatmul.mubr.f32.gmra.mxu0 %v2448
        %v2642 = vpop.f32.mrf.mxu0
        %v2643 = vadd.f32 0.0, %v2642
        %v2644 = vpop.f32.mrf.mxu0
        %2645 = vmatprep.mubr.f32.mxu0 0.0
        %2646 = vmatmul.mubr.f32.gmra.mxu0 %v2451
        %v2647 = vpop.f32.mrf.mxu0
        %v2648 = vadd.f32 0.0, %v2647
        %v2649 = vpop.f32.mrf.mxu0
        %2650 = vmatprep.mubr.f32.mxu0 0.0
        %2651 = vmatmul.mubr.f32.gmra.mxu0 %v2454
        %v2652 = vpop.f32.mrf.mxu0
        %v2653 = vadd.f32 0.0, %v2652
        %v2654 = vpop.f32.mrf.mxu0
        %2655 = vmatprep.mubr.f32.mxu0 0.0
        %2656 = vmatmul.mubr.f32.gmra.mxu0 %v2457
        %v2657 = vpop.f32.mrf.mxu0
        %v2658 = vadd.f32 0.0, %v2657
        %v2659 = vpop.f32.mrf.mxu0
        %2660 = vmatprep.mubr.f32.mxu0 0.0
        %2661 = vmatmul.mubr.f32.gmra.mxu0 %v2460
        %v2662 = vpop.f32.mrf.mxu0
        %v2663 = vadd.f32 0.0, %v2662
        %v2664 = vpop.f32.mrf.mxu0
        %2665 = vmatprep.mubr.f32.mxu0 0.0
        %2666 = vmatmul.mubr.f32.gmra.mxu0 %v2463
        %v2667 = vpop.f32.mrf.mxu0
        %v2668 = vadd.f32 0.0, %v2667
        %v2669 = vpop.f32.mrf.mxu0
        %2670 = vmatprep.mubr.f32.mxu0 0.0
        %2671 = vmatmul.mubr.f32.gmra.mxu0 %v2466
        %v2672 = vpop.f32.mrf.mxu0
        %v2673 = vadd.f32 0.0, %v2672
        %v2674 = vpop.f32.mrf.mxu0
        %2675 = vmatprep.mubr.f32.mxu0 0.0
        %2676 = vmatmul.mubr.f32.gmra.mxu0 %v2469
        %v2677 = vpop.f32.mrf.mxu0
        %v2678 = vadd.f32 0.0, %v2677
        %v2679 = vpop.f32.mrf.mxu0
        %2680 = vmatprep.mubr.f32.mxu0 0.0
        %2681 = vmatmul.mubr.f32.gmra.mxu0 %v2472
        %v2682 = vpop.f32.mrf.mxu0
        %v2683 = vadd.f32 0.0, %v2682
        %v2684 = vpop.f32.mrf.mxu0
        %2685 = vmatprep.mubr.f32.mxu0 0.0
        %2686 = vmatmul.mubr.f32.gmra.mxu0 %v2475
        %v2687 = vpop.f32.mrf.mxu0
        %v2688 = vadd.f32 0.0, %v2687
        %v2689 = vpop.f32.mrf.mxu0
        %2690 = vmatprep.mubr.f32.mxu0 0.0
        %2691 = vmatmul.mubr.f32.gmra.mxu0 %v2478
        %v2692 = vpop.f32.mrf.mxu0
        %v2693 = vadd.f32 0.0, %v2692
        %v2694 = vpop.f32.mrf.mxu0
        %2695 = vmatprep.mubr.f32.mxu0 0.0
        %2696 = vmatmul.mubr.f32.gmra.mxu0 %v2481
        %v2697 = vpop.f32.mrf.mxu0
        %v2698 = vadd.f32 0.0, %v2697
        %v2699 = vpop.f32.mrf.mxu0
        %2700 = vmatprep.mubr.f32.mxu0 0.0
        %2701 = vmatmul.mubr.f32.gmra.mxu0 %v2484
        %v2702 = vpop.f32.mrf.mxu0
        %v2703 = vadd.f32 0.0, %v2702
        %v2704 = vpop.f32.mrf.mxu0
        %2705 = vmatprep.mubr.f32.mxu0 0.0
        %2706 = vmatmul.mubr.f32.gmra.mxu0 %v2487
        %v2707 = vpop.f32.mrf.mxu0
        %v2708 = vadd.f32 0.0, %v2707
        %v2709 = vpop.f32.mrf.mxu0
        %2710 = vmatprep.mubr.f32.mxu0 0.0
        %2711 = vmatmul.mubr.f32.gmra.mxu0 %v2490
        %v2712 = vpop.f32.mrf.mxu0
        %v2713 = vadd.f32 0.0, %v2712
        %v2714 = vpop.f32.mrf.mxu0
        %2715 = vmatprep.mubr.f32.mxu0 0.0
        %2716 = vmatmul.mubr.f32.gmra.mxu0 %v2493
        %v2717 = vpop.f32.mrf.mxu0
        %v2718 = vadd.f32 0.0, %v2717
        %v2719 = vpop.f32.mrf.mxu0
        %2720 = vmatprep.mubr.f32.mxu0 0.0
        %2721 = vmatmul.mubr.f32.gmra.mxu0 %v2496
        %v2722 = vpop.f32.mrf.mxu0
        %v2723 = vadd.f32 0.0, %v2722
        %v2724 = vpop.f32.mrf.mxu0
        %2725 = vmatprep.mubr.f32.mxu0 0.0
        %2726 = vmatmul.mubr.f32.gmra.mxu0 %v2499
        %v2727 = vpop.f32.mrf.mxu0
        %v2728 = vadd.f32 0.0, %v2727
        %v2729 = vpop.f32.mrf.mxu0
        %2730 = vmatprep.mubr.f32.mxu0 0.0
        %2731 = vmatmul.mubr.f32.gmra.mxu0 %v2502
        %v2732 = vpop.f32.mrf.mxu0
        %v2733 = vadd.f32 0.0, %v2732
        %v2734 = vpop.f32.mrf.mxu0
        %2735 = vmatprep.mubr.f32.mxu0 0.0
        %2736 = vmatmul.mubr.f32.gmra.mxu0 %v2505
        %v2737 = vpop.f32.mrf.mxu0
        %v2738 = vadd.f32 0.0, %v2737
        %v2739 = vpop.f32.mrf.mxu0
        %2740 = vmatprep.mubr.f32.mxu0 0.0
        %2741 = vmatmul.mubr.f32.gmra.mxu0 %v2508
        %v2742 = vpop.f32.mrf.mxu0
        %v2743 = vadd.f32 0.0, %v2742
        %v2744 = vpop.f32.mrf.mxu0
        %2745 = vmatprep.mubr.f32.mxu0 0.0
        %2746 = vmatmul.mubr.f32.gmra.mxu0 %v2511
        %v2747 = vpop.f32.mrf.mxu0
        %v2748 = vadd.f32 0.0, %v2747
        %v2749 = vpop.f32.mrf.mxu0
        %2750 = vmatprep.mubr.f32.mxu0 0.0
        %2751 = vmatmul.mubr.f32.gmra.mxu0 %v2514
        %v2752 = vpop.f32.mrf.mxu0
        %v2753 = vadd.f32 0.0, %v2752
        %v2754 = vpop.f32.mrf.mxu0
        %2755 = vmatprep.mubr.f32.mxu0 0.0
        %2756 = vmatmul.mubr.f32.gmra.mxu0 %v2517
        %v2757 = vpop.f32.mrf.mxu0
        %v2758 = vadd.f32 0.0, %v2757
        %v2759 = vpop.f32.mrf.mxu0
        %2760 = vmatprep.mubr.f32.mxu0 0.0
        %2761 = vmatmul.mubr.f32.gmra.mxu0 %v2520
        %v2762 = vpop.f32.mrf.mxu0
        %v2763 = vadd.f32 0.0, %v2762
        %v2764 = vpop.f32.mrf.mxu0
        %2765 = vmatprep.mubr.f32.mxu0 0.0
        %2766 = vmatmul.mubr.f32.gmra.mxu0 %v2523
        %v2767 = vpop.f32.mrf.mxu0
        %v2768 = vadd.f32 0.0, %v2767
        %v2769 = vpop.f32.mrf.mxu0
        %2770 = vmatprep.mubr.f32.mxu0 0.0
        %2771 = vmatmul.mubr.f32.gmra.mxu0 %v2526
        %v2772 = vpop.f32.mrf.mxu0
        %v2773 = vadd.f32 0.0, %v2772
        %v2774 = vpop.f32.mrf.mxu0
        %2775 = vdwg.mxu0
        %v2776 = vadd.f32 %v2346, %v2598
        %v2777 = vadd.f32 %v2347, %v2603
        %v2778 = vadd.f32 %v2348, %v2608
        %v2779 = vadd.f32 %v2349, %v2613
        %v2780 = vadd.f32 %v2350, %v2618
        %v2781 = vadd.f32 %v2351, %v2623
        %v2782 = vadd.f32 %v2352, %v2628
        %v2783 = vadd.f32 %v2353, %v2633
        %v2784 = vadd.f32 %v2354, %v2638
        %v2785 = vadd.f32 %v2355, %v2643
        %v2786 = vadd.f32 %v2356, %v2648
        %v2787 = vadd.f32 %v2357, %v2653
        %v2788 = vadd.f32 %v2358, %v2658
        %v2789 = vadd.f32 %v2359, %v2663
        %v2790 = vadd.f32 %v2360, %v2668
        %v2791 = vadd.f32 %v2361, %v2673
        %v2792 = vadd.f32 %v2362, %v2678
        %v2793 = vadd.f32 %v2363, %v2683
        %v2794 = vadd.f32 %v2364, %v2688
        %v2795 = vadd.f32 %v2365, %v2693
        %v2796 = vadd.f32 %v2366, %v2698
        %v2797 = vadd.f32 %v2367, %v2703
        %v2798 = vadd.f32 %v2368, %v2708
        %v2799 = vadd.f32 %v2369, %v2713
        %v2800 = vadd.f32 %v2370, %v2718
        %v2801 = vadd.f32 %v2371, %v2723
        %v2802 = vadd.f32 %v2372, %v2728
        %v2803 = vadd.f32 %v2373, %v2733
        %v2804 = vadd.f32 %v2374, %v2738
        %v2805 = vadd.f32 %v2375, %v2743
        %v2806 = vadd.f32 %v2376, %v2748
        %v2807 = vadd.f32 %v2377, %v2753
        %v2808 = vadd.f32 %v2378, %v2758
        %v2809 = vadd.f32 %v2379, %v2763
        %v2810 = vadd.f32 %v2380, %v2768
        %v2811 = vadd.f32 %v2381, %v2773
        %v2812 = vld [vmem:[%s302 + $0x24] sm:$0xff]
        %v2813 = vld [vmem:[%s302 + $0x2c] sm:$0xff]
        %v2814 = vld [vmem:[%s302 + $0x34] sm:$0xff]
        %v2815 = vld [vmem:[%s302 + $0x3c] sm:$0xff]
        %v2816 = vld [vmem:[%s302 + $0x44] sm:$0xff]
        %v2817 = vld [vmem:[%s302 + $0x4c] sm:$0xff]
        %v2818 = vld [vmem:[%s302 + $0x54] sm:$0xff]
        %v2819 = vld [vmem:[%s302 + $0x5c] sm:$0xff]
        %v2820 = vld [vmem:[%s302 + $0x64] sm:$0xff]
        %v2821 = vld [vmem:[%s302 + $0x6c] sm:$0xff]
        %v2822 = vld [vmem:[%s302 + $0x74] sm:$0xff]
        %v2823 = vld [vmem:[%s302 + $0x7c] sm:$0xff]
        %v2824 = vld [vmem:[%s302 + $0x84] sm:$0xff]
        %v2825 = vld [vmem:[%s302 + $0x8c] sm:$0xff]
        %v2826 = vld [vmem:[%s302 + $0x94] sm:$0xff]
        %v2827 = vld [vmem:[%s302 + $0x9c] sm:$0xff]
        %v2828 = vld [vmem:[%s302 + $0xa4] sm:$0xff]
        %v2829 = vld [vmem:[%s302 + $0xac] sm:$0xff]
        %v2830 = vld [vmem:[%s302 + $0xb4] sm:$0xff]
        %v2831 = vld [vmem:[%s302 + $0xbc] sm:$0xff]
        %v2832 = vld [vmem:[%s302 + $0xc4] sm:$0xff]
        %v2833 = vld [vmem:[%s302 + $0xcc] sm:$0xff]
        %v2834 = vld [vmem:[%s302 + $0xd4] sm:$0xff]
        %v2835 = vld [vmem:[%s302 + $0xdc] sm:$0xff]
        %v2836 = vld [vmem:[%s302 + $0xe4] sm:$0xff]
        %v2837 = vld [vmem:[%s302 + $0xec] sm:$0xff]
        %v2838 = vld [vmem:[%s302 + $0xf4] sm:$0xff]
        %v2839 = vld [vmem:[%s302 + $0xfc] sm:$0xff]
        %v2840 = vld [vmem:[%s302 + $0x104] sm:$0xff]
        %v2841 = vld [vmem:[%s302 + $0x10c] sm:$0xff]
        %v2842 = vld [vmem:[%s302 + $0x114] sm:$0xff]
        %v2843 = vld [vmem:[%s302 + $0x11c] sm:$0xff]
        %v2844 = vld [vmem:[%s302 + $0x124] sm:$0xff]
        %v2845 = vld [vmem:[%s302 + $0x12c] sm:$0xff]
        %v2846 = vld [vmem:[%s302 + $0x134] sm:$0xff]
        %v2847 = vld [vmem:[%s302 + $0x13c] sm:$0xff]
        %s2848 = scalar_lea.vmem %s2, 24
        %v2849 = vld [vmem:[%s2848] sm:$0xf]
        %v2851 = vsel %vm378, %v2812, 0
        %v2854 = vsel %vm378, %v2813, 0
        %v2857 = vsel %vm378, %v2814, 0
        %v2860 = vsel %vm378, %v2815, 0
        %v2863 = vsel %vm378, %v2816, 0
        %v2866 = vsel %vm378, %v2817, 0
        %v2869 = vsel %vm378, %v2818, 0
        %v2872 = vsel %vm378, %v2819, 0
        %v2875 = vsel %vm378, %v2820, 0
        %v2878 = vsel %vm378, %v2821, 0
        %v2881 = vsel %vm378, %v2822, 0
        %v2884 = vsel %vm378, %v2823, 0
        %v2887 = vsel %vm378, %v2824, 0
        %v2890 = vsel %vm378, %v2825, 0
        %v2893 = vsel %vm378, %v2826, 0
        %v2896 = vsel %vm378, %v2827, 0
        %v2899 = vsel %vm378, %v2828, 0
        %v2902 = vsel %vm378, %v2829, 0
        %v2905 = vsel %vm378, %v2830, 0
        %v2908 = vsel %vm378, %v2831, 0
        %v2911 = vsel %vm378, %v2832, 0
        %v2914 = vsel %vm378, %v2833, 0
        %v2917 = vsel %vm378, %v2834, 0
        %v2920 = vsel %vm378, %v2835, 0
        %v2923 = vsel %vm378, %v2836, 0
        %v2926 = vsel %vm378, %v2837, 0
        %v2929 = vsel %vm378, %v2838, 0
        %v2932 = vsel %vm378, %v2839, 0
        %v2935 = vsel %vm378, %v2840, 0
        %v2938 = vsel %vm378, %v2841, 0
        %v2941 = vsel %vm378, %v2842, 0
        %v2944 = vsel %vm378, %v2843, 0
        %v2947 = vsel %vm378, %v2844, 0
        %v2950 = vsel %vm378, %v2845, 0
        %v2953 = vsel %vm378, %v2846, 0
        %v2956 = vsel %vm378, %v2847, 0
        %v2959 = vsel %vm487, %v2849, 0
        %2961 = vmatprep.subr.mxu0 0.0
        %2962 = vmatpush1.msra.mxu0 0.0
        %2963 = vmatprep.subr.mxu0 0.0
        %2964 = vmatpush1.msra.mxu0 0.0
        %2965 = vmatprep.subr.mxu0 0.0
        %2966 = vmatpush1.msra.mxu0 0.0
        %2967 = vmatprep.subr.mxu0 0.0
        %2968 = vmatpush1.msra.mxu0 0.0
        %2969 = vmatprep.subr.mxu0 0.0
        %2970 = vmatpush1.msra.mxu0 0.0
        %2971 = vmatprep.subr.mxu0 0.0
        %2972 = vmatpush1.msra.mxu0 0.0
        %2973 = vmatprep.subr.mxu0 0.0
        %2974 = vmatpush1.msra.mxu0 0.0
        %2975 = vmatprep.subr.mxu0 0.0
        %2976 = vmatpush1.msra.mxu0 0.0
        %2977 = vmatprep.subr.mxu0 0.0
        %2978 = vmatpush1.msra.mxu0 0.0
        %2979 = vmatprep.subr.mxu0 0.0
        %2980 = vmatpush1.msra.mxu0 0.0
        %2981 = vmatprep.subr.mxu0 0.0
        %2982 = vmatpush1.msra.mxu0 0.0
        %2983 = vmatprep.subr.mxu0 0.0
        %2984 = vmatpush1.msra.mxu0 0.0
        %2985 = vmatprep.subr.mxu0 0.0
        %2986 = vmatpush1.msra.mxu0 0.0
        %2987 = vmatprep.subr.mxu0 0.0
        %2988 = vmatpush1.msra.mxu0 0.0
        %2989 = vmatprep.subr.mxu0 0.0
        %2990 = vmatpush1.msra.mxu0 0.0
        %2991 = vmatprep.subr.mxu0 0.0
        %2992 = vmatpush1.msra.mxu0 %v2959
        %2993 = vmatprep.subr.mxu0 0.0
        %2994 = vmatpush2.msra.mxu0 0.0
        %2995 = vmatprep.subr.mxu0 0.0
        %2996 = vmatpush2.msra.mxu0 0.0
        %2997 = vmatprep.subr.mxu0 0.0
        %2998 = vmatpush2.msra.mxu0 0.0
        %2999 = vmatprep.subr.mxu0 0.0
        %3000 = vmatpush2.msra.mxu0 0.0
        %3001 = vmatprep.subr.mxu0 0.0
        %3002 = vmatpush2.msra.mxu0 0.0
        %3003 = vmatprep.subr.mxu0 0.0
        %3004 = vmatpush2.msra.mxu0 0.0
        %3005 = vmatprep.subr.mxu0 0.0
        %3006 = vmatpush2.msra.mxu0 0.0
        %3007 = vmatprep.subr.mxu0 0.0
        %3008 = vmatpush2.msra.mxu0 0.0
        %3009 = vmatprep.subr.mxu0 0.0
        %3010 = vmatpush2.msra.mxu0 0.0
        %3011 = vmatprep.subr.mxu0 0.0
        %3012 = vmatpush2.msra.mxu0 0.0
        %3013 = vmatprep.subr.mxu0 0.0
        %3014 = vmatpush2.msra.mxu0 0.0
        %3015 = vmatprep.subr.mxu0 0.0
        %3016 = vmatpush2.msra.mxu0 0.0
        %3017 = vmatprep.subr.mxu0 0.0
        %3018 = vmatpush2.msra.mxu0 0.0
        %3019 = vmatprep.subr.mxu0 0.0
        %3020 = vmatpush2.msra.mxu0 0.0
        %3021 = vmatprep.subr.mxu0 0.0
        %3022 = vmatpush2.msra.mxu0 0.0
        %3023 = vmatprep.subr.mxu0 0.0
        %3024 = vmatpush2.msra.mxu0 0.0
        %3025 = vmatprep.mubr.f32.mxu0 0.0
        %3026 = vmatmul.mubr.f32.gmra.mxu0 %v2851
        %v3027 = vpop.f32.mrf.mxu0
        %v3028 = vadd.f32 0.0, %v3027
        %v3029 = vpop.f32.mrf.mxu0
        %3030 = vmatprep.mubr.f32.mxu0 0.0
        %3031 = vmatmul.mubr.f32.gmra.mxu0 %v2854
        %v3032 = vpop.f32.mrf.mxu0
        %v3033 = vadd.f32 0.0, %v3032
        %v3034 = vpop.f32.mrf.mxu0
        %3035 = vmatprep.mubr.f32.mxu0 0.0
        %3036 = vmatmul.mubr.f32.gmra.mxu0 %v2857
        %v3037 = vpop.f32.mrf.mxu0
        %v3038 = vadd.f32 0.0, %v3037
        %v3039 = vpop.f32.mrf.mxu0
        %3040 = vmatprep.mubr.f32.mxu0 0.0
        %3041 = vmatmul.mubr.f32.gmra.mxu0 %v2860
        %v3042 = vpop.f32.mrf.mxu0
        %v3043 = vadd.f32 0.0, %v3042
        %v3044 = vpop.f32.mrf.mxu0
        %3045 = vmatprep.mubr.f32.mxu0 0.0
        %3046 = vmatmul.mubr.f32.gmra.mxu0 %v2863
        %v3047 = vpop.f32.mrf.mxu0
        %v3048 = vadd.f32 0.0, %v3047
        %v3049 = vpop.f32.mrf.mxu0
        %3050 = vmatprep.mubr.f32.mxu0 0.0
        %3051 = vmatmul.mubr.f32.gmra.mxu0 %v2866
        %v3052 = vpop.f32.mrf.mxu0
        %v3053 = vadd.f32 0.0, %v3052
        %v3054 = vpop.f32.mrf.mxu0
        %3055 = vmatprep.mubr.f32.mxu0 0.0
        %3056 = vmatmul.mubr.f32.gmra.mxu0 %v2869
        %v3057 = vpop.f32.mrf.mxu0
        %v3058 = vadd.f32 0.0, %v3057
        %v3059 = vpop.f32.mrf.mxu0
        %3060 = vmatprep.mubr.f32.mxu0 0.0
        %3061 = vmatmul.mubr.f32.gmra.mxu0 %v2872
        %v3062 = vpop.f32.mrf.mxu0
        %v3063 = vadd.f32 0.0, %v3062
        %v3064 = vpop.f32.mrf.mxu0
        %3065 = vmatprep.mubr.f32.mxu0 0.0
        %3066 = vmatmul.mubr.f32.gmra.mxu0 %v2875
        %v3067 = vpop.f32.mrf.mxu0
        %v3068 = vadd.f32 0.0, %v3067
        %v3069 = vpop.f32.mrf.mxu0
        %3070 = vmatprep.mubr.f32.mxu0 0.0
        %3071 = vmatmul.mubr.f32.gmra.mxu0 %v2878
        %v3072 = vpop.f32.mrf.mxu0
        %v3073 = vadd.f32 0.0, %v3072
        %v3074 = vpop.f32.mrf.mxu0
        %3075 = vmatprep.mubr.f32.mxu0 0.0
        %3076 = vmatmul.mubr.f32.gmra.mxu0 %v2881
        %v3077 = vpop.f32.mrf.mxu0
        %v3078 = vadd.f32 0.0, %v3077
        %v3079 = vpop.f32.mrf.mxu0
        %3080 = vmatprep.mubr.f32.mxu0 0.0
        %3081 = vmatmul.mubr.f32.gmra.mxu0 %v2884
        %v3082 = vpop.f32.mrf.mxu0
        %v3083 = vadd.f32 0.0, %v3082
        %v3084 = vpop.f32.mrf.mxu0
        %3085 = vmatprep.mubr.f32.mxu0 0.0
        %3086 = vmatmul.mubr.f32.gmra.mxu0 %v2887
        %v3087 = vpop.f32.mrf.mxu0
        %v3088 = vadd.f32 0.0, %v3087
        %v3089 = vpop.f32.mrf.mxu0
        %3090 = vmatprep.mubr.f32.mxu0 0.0
        %3091 = vmatmul.mubr.f32.gmra.mxu0 %v2890
        %v3092 = vpop.f32.mrf.mxu0
        %v3093 = vadd.f32 0.0, %v3092
        %v3094 = vpop.f32.mrf.mxu0
        %3095 = vmatprep.mubr.f32.mxu0 0.0
        %3096 = vmatmul.mubr.f32.gmra.mxu0 %v2893
        %v3097 = vpop.f32.mrf.mxu0
        %v3098 = vadd.f32 0.0, %v3097
        %v3099 = vpop.f32.mrf.mxu0
        %3100 = vmatprep.mubr.f32.mxu0 0.0
        %3101 = vmatmul.mubr.f32.gmra.mxu0 %v2896
        %v3102 = vpop.f32.mrf.mxu0
        %v3103 = vadd.f32 0.0, %v3102
        %v3104 = vpop.f32.mrf.mxu0
        %3105 = vmatprep.mubr.f32.mxu0 0.0
        %3106 = vmatmul.mubr.f32.gmra.mxu0 %v2899
        %v3107 = vpop.f32.mrf.mxu0
        %v3108 = vadd.f32 0.0, %v3107
        %v3109 = vpop.f32.mrf.mxu0
        %3110 = vmatprep.mubr.f32.mxu0 0.0
        %3111 = vmatmul.mubr.f32.gmra.mxu0 %v2902
        %v3112 = vpop.f32.mrf.mxu0
        %v3113 = vadd.f32 0.0, %v3112
        %v3114 = vpop.f32.mrf.mxu0
        %3115 = vmatprep.mubr.f32.mxu0 0.0
        %3116 = vmatmul.mubr.f32.gmra.mxu0 %v2905
        %v3117 = vpop.f32.mrf.mxu0
        %v3118 = vadd.f32 0.0, %v3117
        %v3119 = vpop.f32.mrf.mxu0
        %3120 = vmatprep.mubr.f32.mxu0 0.0
        %3121 = vmatmul.mubr.f32.gmra.mxu0 %v2908
        %v3122 = vpop.f32.mrf.mxu0
        %v3123 = vadd.f32 0.0, %v3122
        %v3124 = vpop.f32.mrf.mxu0
        %3125 = vmatprep.mubr.f32.mxu0 0.0
        %3126 = vmatmul.mubr.f32.gmra.mxu0 %v2911
        %v3127 = vpop.f32.mrf.mxu0
        %v3128 = vadd.f32 0.0, %v3127
        %v3129 = vpop.f32.mrf.mxu0
        %3130 = vmatprep.mubr.f32.mxu0 0.0
        %3131 = vmatmul.mubr.f32.gmra.mxu0 %v2914
        %v3132 = vpop.f32.mrf.mxu0
        %v3133 = vadd.f32 0.0, %v3132
        %v3134 = vpop.f32.mrf.mxu0
        %3135 = vmatprep.mubr.f32.mxu0 0.0
        %3136 = vmatmul.mubr.f32.gmra.mxu0 %v2917
        %v3137 = vpop.f32.mrf.mxu0
        %v3138 = vadd.f32 0.0, %v3137
        %v3139 = vpop.f32.mrf.mxu0
        %3140 = vmatprep.mubr.f32.mxu0 0.0
        %3141 = vmatmul.mubr.f32.gmra.mxu0 %v2920
        %v3142 = vpop.f32.mrf.mxu0
        %v3143 = vadd.f32 0.0, %v3142
        %v3144 = vpop.f32.mrf.mxu0
        %3145 = vmatprep.mubr.f32.mxu0 0.0
        %3146 = vmatmul.mubr.f32.gmra.mxu0 %v2923
        %v3147 = vpop.f32.mrf.mxu0
        %v3148 = vadd.f32 0.0, %v3147
        %v3149 = vpop.f32.mrf.mxu0
        %3150 = vmatprep.mubr.f32.mxu0 0.0
        %3151 = vmatmul.mubr.f32.gmra.mxu0 %v2926
        %v3152 = vpop.f32.mrf.mxu0
        %v3153 = vadd.f32 0.0, %v3152
        %v3154 = vpop.f32.mrf.mxu0
        %3155 = vmatprep.mubr.f32.mxu0 0.0
        %3156 = vmatmul.mubr.f32.gmra.mxu0 %v2929
        %v3157 = vpop.f32.mrf.mxu0
        %v3158 = vadd.f32 0.0, %v3157
        %v3159 = vpop.f32.mrf.mxu0
        %3160 = vmatprep.mubr.f32.mxu0 0.0
        %3161 = vmatmul.mubr.f32.gmra.mxu0 %v2932
        %v3162 = vpop.f32.mrf.mxu0
        %v3163 = vadd.f32 0.0, %v3162
        %v3164 = vpop.f32.mrf.mxu0
        %3165 = vmatprep.mubr.f32.mxu0 0.0
        %3166 = vmatmul.mubr.f32.gmra.mxu0 %v2935
        %v3167 = vpop.f32.mrf.mxu0
        %v3168 = vadd.f32 0.0, %v3167
        %v3169 = vpop.f32.mrf.mxu0
        %3170 = vmatprep.mubr.f32.mxu0 0.0
        %3171 = vmatmul.mubr.f32.gmra.mxu0 %v2938
        %v3172 = vpop.f32.mrf.mxu0
        %v3173 = vadd.f32 0.0, %v3172
        %v3174 = vpop.f32.mrf.mxu0
        %3175 = vmatprep.mubr.f32.mxu0 0.0
        %3176 = vmatmul.mubr.f32.gmra.mxu0 %v2941
        %v3177 = vpop.f32.mrf.mxu0
        %v3178 = vadd.f32 0.0, %v3177
        %v3179 = vpop.f32.mrf.mxu0
        %3180 = vmatprep.mubr.f32.mxu0 0.0
        %3181 = vmatmul.mubr.f32.gmra.mxu0 %v2944
        %v3182 = vpop.f32.mrf.mxu0
        %v3183 = vadd.f32 0.0, %v3182
        %v3184 = vpop.f32.mrf.mxu0
        %3185 = vmatprep.mubr.f32.mxu0 0.0
        %3186 = vmatmul.mubr.f32.gmra.mxu0 %v2947
        %v3187 = vpop.f32.mrf.mxu0
        %v3188 = vadd.f32 0.0, %v3187
        %v3189 = vpop.f32.mrf.mxu0
        %3190 = vmatprep.mubr.f32.mxu0 0.0
        %3191 = vmatmul.mubr.f32.gmra.mxu0 %v2950
        %v3192 = vpop.f32.mrf.mxu0
        %v3193 = vadd.f32 0.0, %v3192
        %v3194 = vpop.f32.mrf.mxu0
        %3195 = vmatprep.mubr.f32.mxu0 0.0
        %3196 = vmatmul.mubr.f32.gmra.mxu0 %v2953
        %v3197 = vpop.f32.mrf.mxu0
        %v3198 = vadd.f32 0.0, %v3197
        %v3199 = vpop.f32.mrf.mxu0
        %3200 = vmatprep.mubr.f32.mxu0 0.0
        %3201 = vmatmul.mubr.f32.gmra.mxu0 %v2956
        %v3202 = vpop.f32.mrf.mxu0
        %v3203 = vadd.f32 0.0, %v3202
        %v3204 = vpop.f32.mrf.mxu0
        %3205 = vdwg.mxu0
        %v3206 = vadd.f32 %v2776, %v3028
        %v3207 = vadd.f32 %v2777, %v3033
        %v3208 = vadd.f32 %v2778, %v3038
        %v3209 = vadd.f32 %v2779, %v3043
        %v3210 = vadd.f32 %v2780, %v3048
        %v3211 = vadd.f32 %v2781, %v3053
        %v3212 = vadd.f32 %v2782, %v3058
        %v3213 = vadd.f32 %v2783, %v3063
        %v3214 = vadd.f32 %v2784, %v3068
        %v3215 = vadd.f32 %v2785, %v3073
        %v3216 = vadd.f32 %v2786, %v3078
        %v3217 = vadd.f32 %v2787, %v3083
        %v3218 = vadd.f32 %v2788, %v3088
        %v3219 = vadd.f32 %v2789, %v3093
        %v3220 = vadd.f32 %v2790, %v3098
        %v3221 = vadd.f32 %v2791, %v3103
        %v3222 = vadd.f32 %v2792, %v3108
        %v3223 = vadd.f32 %v2793, %v3113
        %v3224 = vadd.f32 %v2794, %v3118
        %v3225 = vadd.f32 %v2795, %v3123
        %v3226 = vadd.f32 %v2796, %v3128
        %v3227 = vadd.f32 %v2797, %v3133
        %v3228 = vadd.f32 %v2798, %v3138
        %v3229 = vadd.f32 %v2799, %v3143
        %v3230 = vadd.f32 %v2800, %v3148
        %v3231 = vadd.f32 %v2801, %v3153
        %v3232 = vadd.f32 %v2802, %v3158
        %v3233 = vadd.f32 %v2803, %v3163
        %v3234 = vadd.f32 %v2804, %v3168
        %v3235 = vadd.f32 %v2805, %v3173
        %v3236 = vadd.f32 %v2806, %v3178
        %v3237 = vadd.f32 %v2807, %v3183
        %v3238 = vadd.f32 %v2808, %v3188
        %v3239 = vadd.f32 %v2809, %v3193
        %v3240 = vadd.f32 %v2810, %v3198
        %v3241 = vadd.f32 %v2811, %v3203
        %v3242 = vld [vmem:[%s302 + $0x25] sm:$0xff]
        %v3243 = vld [vmem:[%s302 + $0x2d] sm:$0xff]
        %v3244 = vld [vmem:[%s302 + $0x35] sm:$0xff]
        %v3245 = vld [vmem:[%s302 + $0x3d] sm:$0xff]
        %v3246 = vld [vmem:[%s302 + $0x45] sm:$0xff]
        %v3247 = vld [vmem:[%s302 + $0x4d] sm:$0xff]
        %v3248 = vld [vmem:[%s302 + $0x55] sm:$0xff]
        %v3249 = vld [vmem:[%s302 + $0x5d] sm:$0xff]
        %v3250 = vld [vmem:[%s302 + $0x65] sm:$0xff]
        %v3251 = vld [vmem:[%s302 + $0x6d] sm:$0xff]
        %v3252 = vld [vmem:[%s302 + $0x75] sm:$0xff]
        %v3253 = vld [vmem:[%s302 + $0x7d] sm:$0xff]
        %v3254 = vld [vmem:[%s302 + $0x85] sm:$0xff]
        %v3255 = vld [vmem:[%s302 + $0x8d] sm:$0xff]
        %v3256 = vld [vmem:[%s302 + $0x95] sm:$0xff]
        %v3257 = vld [vmem:[%s302 + $0x9d] sm:$0xff]
        %v3258 = vld [vmem:[%s302 + $0xa5] sm:$0xff]
        %v3259 = vld [vmem:[%s302 + $0xad] sm:$0xff]
        %v3260 = vld [vmem:[%s302 + $0xb5] sm:$0xff]
        %v3261 = vld [vmem:[%s302 + $0xbd] sm:$0xff]
        %v3262 = vld [vmem:[%s302 + $0xc5] sm:$0xff]
        %v3263 = vld [vmem:[%s302 + $0xcd] sm:$0xff]
        %v3264 = vld [vmem:[%s302 + $0xd5] sm:$0xff]
        %v3265 = vld [vmem:[%s302 + $0xdd] sm:$0xff]
        %v3266 = vld [vmem:[%s302 + $0xe5] sm:$0xff]
        %v3267 = vld [vmem:[%s302 + $0xed] sm:$0xff]
        %v3268 = vld [vmem:[%s302 + $0xf5] sm:$0xff]
        %v3269 = vld [vmem:[%s302 + $0xfd] sm:$0xff]
        %v3270 = vld [vmem:[%s302 + $0x105] sm:$0xff]
        %v3271 = vld [vmem:[%s302 + $0x10d] sm:$0xff]
        %v3272 = vld [vmem:[%s302 + $0x115] sm:$0xff]
        %v3273 = vld [vmem:[%s302 + $0x11d] sm:$0xff]
        %v3274 = vld [vmem:[%s302 + $0x125] sm:$0xff]
        %v3275 = vld [vmem:[%s302 + $0x12d] sm:$0xff]
        %v3276 = vld [vmem:[%s302 + $0x135] sm:$0xff]
        %v3277 = vld [vmem:[%s302 + $0x13d] sm:$0xff]
        %s3278 = scalar_lea.vmem %s2, 28
        %v3279 = vld [vmem:[%s3278] sm:$0xf]
        %v3281 = vsel %vm378, %v3242, 0
        %v3284 = vsel %vm378, %v3243, 0
        %v3287 = vsel %vm378, %v3244, 0
        %v3290 = vsel %vm378, %v3245, 0
        %v3293 = vsel %vm378, %v3246, 0
        %v3296 = vsel %vm378, %v3247, 0
        %v3299 = vsel %vm378, %v3248, 0
        %v3302 = vsel %vm378, %v3249, 0
        %v3305 = vsel %vm378, %v3250, 0
        %v3308 = vsel %vm378, %v3251, 0
        %v3311 = vsel %vm378, %v3252, 0
        %v3314 = vsel %vm378, %v3253, 0
        %v3317 = vsel %vm378, %v3254, 0
        %v3320 = vsel %vm378, %v3255, 0
        %v3323 = vsel %vm378, %v3256, 0
        %v3326 = vsel %vm378, %v3257, 0
        %v3329 = vsel %vm378, %v3258, 0
        %v3332 = vsel %vm378, %v3259, 0
        %v3335 = vsel %vm378, %v3260, 0
        %v3338 = vsel %vm378, %v3261, 0
        %v3341 = vsel %vm378, %v3262, 0
        %v3344 = vsel %vm378, %v3263, 0
        %v3347 = vsel %vm378, %v3264, 0
        %v3350 = vsel %vm378, %v3265, 0
        %v3353 = vsel %vm378, %v3266, 0
        %v3356 = vsel %vm378, %v3267, 0
        %v3359 = vsel %vm378, %v3268, 0
        %v3362 = vsel %vm378, %v3269, 0
        %v3365 = vsel %vm378, %v3270, 0
        %v3368 = vsel %vm378, %v3271, 0
        %v3371 = vsel %vm378, %v3272, 0
        %v3374 = vsel %vm378, %v3273, 0
        %v3377 = vsel %vm378, %v3274, 0
        %v3380 = vsel %vm378, %v3275, 0
        %v3383 = vsel %vm378, %v3276, 0
        %v3386 = vsel %vm378, %v3277, 0
        %v3389 = vsel %vm487, %v3279, 0
        %3391 = vmatprep.subr.mxu0 0.0
        %3392 = vmatpush1.msra.mxu0 0.0
        %3393 = vmatprep.subr.mxu0 0.0
        %3394 = vmatpush1.msra.mxu0 0.0
        %3395 = vmatprep.subr.mxu0 0.0
        %3396 = vmatpush1.msra.mxu0 0.0
        %3397 = vmatprep.subr.mxu0 0.0
        %3398 = vmatpush1.msra.mxu0 0.0
        %3399 = vmatprep.subr.mxu0 0.0
        %3400 = vmatpush1.msra.mxu0 0.0
        %3401 = vmatprep.subr.mxu0 0.0
        %3402 = vmatpush1.msra.mxu0 0.0
        %3403 = vmatprep.subr.mxu0 0.0
        %3404 = vmatpush1.msra.mxu0 0.0
        %3405 = vmatprep.subr.mxu0 0.0
        %3406 = vmatpush1.msra.mxu0 0.0
        %3407 = vmatprep.subr.mxu0 0.0
        %3408 = vmatpush1.msra.mxu0 0.0
        %3409 = vmatprep.subr.mxu0 0.0
        %3410 = vmatpush1.msra.mxu0 0.0
        %3411 = vmatprep.subr.mxu0 0.0
        %3412 = vmatpush1.msra.mxu0 0.0
        %3413 = vmatprep.subr.mxu0 0.0
        %3414 = vmatpush1.msra.mxu0 0.0
        %3415 = vmatprep.subr.mxu0 0.0
        %3416 = vmatpush1.msra.mxu0 0.0
        %3417 = vmatprep.subr.mxu0 0.0
        %3418 = vmatpush1.msra.mxu0 0.0
        %3419 = vmatprep.subr.mxu0 0.0
        %3420 = vmatpush1.msra.mxu0 0.0
        %3421 = vmatprep.subr.mxu0 0.0
        %3422 = vmatpush1.msra.mxu0 %v3389
        %3423 = vmatprep.subr.mxu0 0.0
        %3424 = vmatpush2.msra.mxu0 0.0
        %3425 = vmatprep.subr.mxu0 0.0
        %3426 = vmatpush2.msra.mxu0 0.0
        %3427 = vmatprep.subr.mxu0 0.0
        %3428 = vmatpush2.msra.mxu0 0.0
        %3429 = vmatprep.subr.mxu0 0.0
        %3430 = vmatpush2.msra.mxu0 0.0
        %3431 = vmatprep.subr.mxu0 0.0
        %3432 = vmatpush2.msra.mxu0 0.0
        %3433 = vmatprep.subr.mxu0 0.0
        %3434 = vmatpush2.msra.mxu0 0.0
        %3435 = vmatprep.subr.mxu0 0.0
        %3436 = vmatpush2.msra.mxu0 0.0
        %3437 = vmatprep.subr.mxu0 0.0
        %3438 = vmatpush2.msra.mxu0 0.0
        %3439 = vmatprep.subr.mxu0 0.0
        %3440 = vmatpush2.msra.mxu0 0.0
        %3441 = vmatprep.subr.mxu0 0.0
        %3442 = vmatpush2.msra.mxu0 0.0
        %3443 = vmatprep.subr.mxu0 0.0
        %3444 = vmatpush2.msra.mxu0 0.0
        %3445 = vmatprep.subr.mxu0 0.0
        %3446 = vmatpush2.msra.mxu0 0.0
        %3447 = vmatprep.subr.mxu0 0.0
        %3448 = vmatpush2.msra.mxu0 0.0
        %3449 = vmatprep.subr.mxu0 0.0
        %3450 = vmatpush2.msra.mxu0 0.0
        %3451 = vmatprep.subr.mxu0 0.0
        %3452 = vmatpush2.msra.mxu0 0.0
        %3453 = vmatprep.subr.mxu0 0.0
        %3454 = vmatpush2.msra.mxu0 0.0
        %3455 = vmatprep.mubr.f32.mxu0 0.0
        %3456 = vmatmul.mubr.f32.gmra.mxu0 %v3281
        %v3457 = vpop.f32.mrf.mxu0
        %v3458 = vadd.f32 0.0, %v3457
        %v3459 = vpop.f32.mrf.mxu0
        %3460 = vmatprep.mubr.f32.mxu0 0.0
        %3461 = vmatmul.mubr.f32.gmra.mxu0 %v3284
        %v3462 = vpop.f32.mrf.mxu0
        %v3463 = vadd.f32 0.0, %v3462
        %v3464 = vpop.f32.mrf.mxu0
        %3465 = vmatprep.mubr.f32.mxu0 0.0
        %3466 = vmatmul.mubr.f32.gmra.mxu0 %v3287
        %v3467 = vpop.f32.mrf.mxu0
        %v3468 = vadd.f32 0.0, %v3467
        %v3469 = vpop.f32.mrf.mxu0
        %3470 = vmatprep.mubr.f32.mxu0 0.0
        %3471 = vmatmul.mubr.f32.gmra.mxu0 %v3290
        %v3472 = vpop.f32.mrf.mxu0
        %v3473 = vadd.f32 0.0, %v3472
        %v3474 = vpop.f32.mrf.mxu0
        %3475 = vmatprep.mubr.f32.mxu0 0.0
        %3476 = vmatmul.mubr.f32.gmra.mxu0 %v3293
        %v3477 = vpop.f32.mrf.mxu0
        %v3478 = vadd.f32 0.0, %v3477
        %v3479 = vpop.f32.mrf.mxu0
        %3480 = vmatprep.mubr.f32.mxu0 0.0
        %3481 = vmatmul.mubr.f32.gmra.mxu0 %v3296
        %v3482 = vpop.f32.mrf.mxu0
        %v3483 = vadd.f32 0.0, %v3482
        %v3484 = vpop.f32.mrf.mxu0
        %3485 = vmatprep.mubr.f32.mxu0 0.0
        %3486 = vmatmul.mubr.f32.gmra.mxu0 %v3299
        %v3487 = vpop.f32.mrf.mxu0
        %v3488 = vadd.f32 0.0, %v3487
        %v3489 = vpop.f32.mrf.mxu0
        %3490 = vmatprep.mubr.f32.mxu0 0.0
        %3491 = vmatmul.mubr.f32.gmra.mxu0 %v3302
        %v3492 = vpop.f32.mrf.mxu0
        %v3493 = vadd.f32 0.0, %v3492
        %v3494 = vpop.f32.mrf.mxu0
        %3495 = vmatprep.mubr.f32.mxu0 0.0
        %3496 = vmatmul.mubr.f32.gmra.mxu0 %v3305
        %v3497 = vpop.f32.mrf.mxu0
        %v3498 = vadd.f32 0.0, %v3497
        %v3499 = vpop.f32.mrf.mxu0
        %3500 = vmatprep.mubr.f32.mxu0 0.0
        %3501 = vmatmul.mubr.f32.gmra.mxu0 %v3308
        %v3502 = vpop.f32.mrf.mxu0
        %v3503 = vadd.f32 0.0, %v3502
        %v3504 = vpop.f32.mrf.mxu0
        %3505 = vmatprep.mubr.f32.mxu0 0.0
        %3506 = vmatmul.mubr.f32.gmra.mxu0 %v3311
        %v3507 = vpop.f32.mrf.mxu0
        %v3508 = vadd.f32 0.0, %v3507
        %v3509 = vpop.f32.mrf.mxu0
        %3510 = vmatprep.mubr.f32.mxu0 0.0
        %3511 = vmatmul.mubr.f32.gmra.mxu0 %v3314
        %v3512 = vpop.f32.mrf.mxu0
        %v3513 = vadd.f32 0.0, %v3512
        %v3514 = vpop.f32.mrf.mxu0
        %3515 = vmatprep.mubr.f32.mxu0 0.0
        %3516 = vmatmul.mubr.f32.gmra.mxu0 %v3317
        %v3517 = vpop.f32.mrf.mxu0
        %v3518 = vadd.f32 0.0, %v3517
        %v3519 = vpop.f32.mrf.mxu0
        %3520 = vmatprep.mubr.f32.mxu0 0.0
        %3521 = vmatmul.mubr.f32.gmra.mxu0 %v3320
        %v3522 = vpop.f32.mrf.mxu0
        %v3523 = vadd.f32 0.0, %v3522
        %v3524 = vpop.f32.mrf.mxu0
        %3525 = vmatprep.mubr.f32.mxu0 0.0
        %3526 = vmatmul.mubr.f32.gmra.mxu0 %v3323
        %v3527 = vpop.f32.mrf.mxu0
        %v3528 = vadd.f32 0.0, %v3527
        %v3529 = vpop.f32.mrf.mxu0
        %3530 = vmatprep.mubr.f32.mxu0 0.0
        %3531 = vmatmul.mubr.f32.gmra.mxu0 %v3326
        %v3532 = vpop.f32.mrf.mxu0
        %v3533 = vadd.f32 0.0, %v3532
        %v3534 = vpop.f32.mrf.mxu0
        %3535 = vmatprep.mubr.f32.mxu0 0.0
        %3536 = vmatmul.mubr.f32.gmra.mxu0 %v3329
        %v3537 = vpop.f32.mrf.mxu0
        %v3538 = vadd.f32 0.0, %v3537
        %v3539 = vpop.f32.mrf.mxu0
        %3540 = vmatprep.mubr.f32.mxu0 0.0
        %3541 = vmatmul.mubr.f32.gmra.mxu0 %v3332
        %v3542 = vpop.f32.mrf.mxu0
        %v3543 = vadd.f32 0.0, %v3542
        %v3544 = vpop.f32.mrf.mxu0
        %3545 = vmatprep.mubr.f32.mxu0 0.0
        %3546 = vmatmul.mubr.f32.gmra.mxu0 %v3335
        %v3547 = vpop.f32.mrf.mxu0
        %v3548 = vadd.f32 0.0, %v3547
        %v3549 = vpop.f32.mrf.mxu0
        %3550 = vmatprep.mubr.f32.mxu0 0.0
        %3551 = vmatmul.mubr.f32.gmra.mxu0 %v3338
        %v3552 = vpop.f32.mrf.mxu0
        %v3553 = vadd.f32 0.0, %v3552
        %v3554 = vpop.f32.mrf.mxu0
        %3555 = vmatprep.mubr.f32.mxu0 0.0
        %3556 = vmatmul.mubr.f32.gmra.mxu0 %v3341
        %v3557 = vpop.f32.mrf.mxu0
        %v3558 = vadd.f32 0.0, %v3557
        %v3559 = vpop.f32.mrf.mxu0
        %3560 = vmatprep.mubr.f32.mxu0 0.0
        %3561 = vmatmul.mubr.f32.gmra.mxu0 %v3344
        %v3562 = vpop.f32.mrf.mxu0
        %v3563 = vadd.f32 0.0, %v3562
        %v3564 = vpop.f32.mrf.mxu0
        %3565 = vmatprep.mubr.f32.mxu0 0.0
        %3566 = vmatmul.mubr.f32.gmra.mxu0 %v3347
        %v3567 = vpop.f32.mrf.mxu0
        %v3568 = vadd.f32 0.0, %v3567
        %v3569 = vpop.f32.mrf.mxu0
        %3570 = vmatprep.mubr.f32.mxu0 0.0
        %3571 = vmatmul.mubr.f32.gmra.mxu0 %v3350
        %v3572 = vpop.f32.mrf.mxu0
        %v3573 = vadd.f32 0.0, %v3572
        %v3574 = vpop.f32.mrf.mxu0
        %3575 = vmatprep.mubr.f32.mxu0 0.0
        %3576 = vmatmul.mubr.f32.gmra.mxu0 %v3353
        %v3577 = vpop.f32.mrf.mxu0
        %v3578 = vadd.f32 0.0, %v3577
        %v3579 = vpop.f32.mrf.mxu0
        %3580 = vmatprep.mubr.f32.mxu0 0.0
        %3581 = vmatmul.mubr.f32.gmra.mxu0 %v3356
        %v3582 = vpop.f32.mrf.mxu0
        %v3583 = vadd.f32 0.0, %v3582
        %v3584 = vpop.f32.mrf.mxu0
        %3585 = vmatprep.mubr.f32.mxu0 0.0
        %3586 = vmatmul.mubr.f32.gmra.mxu0 %v3359
        %v3587 = vpop.f32.mrf.mxu0
        %v3588 = vadd.f32 0.0, %v3587
        %v3589 = vpop.f32.mrf.mxu0
        %3590 = vmatprep.mubr.f32.mxu0 0.0
        %3591 = vmatmul.mubr.f32.gmra.mxu0 %v3362
        %v3592 = vpop.f32.mrf.mxu0
        %v3593 = vadd.f32 0.0, %v3592
        %v3594 = vpop.f32.mrf.mxu0
        %3595 = vmatprep.mubr.f32.mxu0 0.0
        %3596 = vmatmul.mubr.f32.gmra.mxu0 %v3365
        %v3597 = vpop.f32.mrf.mxu0
        %v3598 = vadd.f32 0.0, %v3597
        %v3599 = vpop.f32.mrf.mxu0
        %3600 = vmatprep.mubr.f32.mxu0 0.0
        %3601 = vmatmul.mubr.f32.gmra.mxu0 %v3368
        %v3602 = vpop.f32.mrf.mxu0
        %v3603 = vadd.f32 0.0, %v3602
        %v3604 = vpop.f32.mrf.mxu0
        %3605 = vmatprep.mubr.f32.mxu0 0.0
        %3606 = vmatmul.mubr.f32.gmra.mxu0 %v3371
        %v3607 = vpop.f32.mrf.mxu0
        %v3608 = vadd.f32 0.0, %v3607
        %v3609 = vpop.f32.mrf.mxu0
        %3610 = vmatprep.mubr.f32.mxu0 0.0
        %3611 = vmatmul.mubr.f32.gmra.mxu0 %v3374
        %v3612 = vpop.f32.mrf.mxu0
        %v3613 = vadd.f32 0.0, %v3612
        %v3614 = vpop.f32.mrf.mxu0
        %3615 = vmatprep.mubr.f32.mxu0 0.0
        %3616 = vmatmul.mubr.f32.gmra.mxu0 %v3377
        %v3617 = vpop.f32.mrf.mxu0
        %v3618 = vadd.f32 0.0, %v3617
        %v3619 = vpop.f32.mrf.mxu0
        %3620 = vmatprep.mubr.f32.mxu0 0.0
        %3621 = vmatmul.mubr.f32.gmra.mxu0 %v3380
        %v3622 = vpop.f32.mrf.mxu0
        %v3623 = vadd.f32 0.0, %v3622
        %v3624 = vpop.f32.mrf.mxu0
        %3625 = vmatprep.mubr.f32.mxu0 0.0
        %3626 = vmatmul.mubr.f32.gmra.mxu0 %v3383
        %v3627 = vpop.f32.mrf.mxu0
        %v3628 = vadd.f32 0.0, %v3627
        %v3629 = vpop.f32.mrf.mxu0
        %3630 = vmatprep.mubr.f32.mxu0 0.0
        %3631 = vmatmul.mubr.f32.gmra.mxu0 %v3386
        %v3632 = vpop.f32.mrf.mxu0
        %v3633 = vadd.f32 0.0, %v3632
        %v3634 = vpop.f32.mrf.mxu0
        %3635 = vdwg.mxu0
        %v3636 = vadd.f32 %v3206, %v3458
        %v3637 = vadd.f32 %v3207, %v3463
        %v3638 = vadd.f32 %v3208, %v3468
        %v3639 = vadd.f32 %v3209, %v3473
        %v3640 = vadd.f32 %v3210, %v3478
        %v3641 = vadd.f32 %v3211, %v3483
        %v3642 = vadd.f32 %v3212, %v3488
        %v3643 = vadd.f32 %v3213, %v3493
        %v3644 = vadd.f32 %v3214, %v3498
        %v3645 = vadd.f32 %v3215, %v3503
        %v3646 = vadd.f32 %v3216, %v3508
        %v3647 = vadd.f32 %v3217, %v3513
        %v3648 = vadd.f32 %v3218, %v3518
        %v3649 = vadd.f32 %v3219, %v3523
        %v3650 = vadd.f32 %v3220, %v3528
        %v3651 = vadd.f32 %v3221, %v3533
        %v3652 = vadd.f32 %v3222, %v3538
        %v3653 = vadd.f32 %v3223, %v3543
        %v3654 = vadd.f32 %v3224, %v3548
        %v3655 = vadd.f32 %v3225, %v3553
        %v3656 = vadd.f32 %v3226, %v3558
        %v3657 = vadd.f32 %v3227, %v3563
        %v3658 = vadd.f32 %v3228, %v3568
        %v3659 = vadd.f32 %v3229, %v3573
        %v3660 = vadd.f32 %v3230, %v3578
        %v3661 = vadd.f32 %v3231, %v3583
        %v3662 = vadd.f32 %v3232, %v3588
        %v3663 = vadd.f32 %v3233, %v3593
        %v3664 = vadd.f32 %v3234, %v3598
        %v3665 = vadd.f32 %v3235, %v3603
        %v3666 = vadd.f32 %v3236, %v3608
        %v3667 = vadd.f32 %v3237, %v3613
        %v3668 = vadd.f32 %v3238, %v3618
        %v3669 = vadd.f32 %v3239, %v3623
        %v3670 = vadd.f32 %v3240, %v3628
        %v3671 = vadd.f32 %v3241, %v3633
        %v3672 = vld [vmem:[%s302 + $0x26] sm:$0xff]
        %v3673 = vld [vmem:[%s302 + $0x2e] sm:$0xff]
        %v3674 = vld [vmem:[%s302 + $0x36] sm:$0xff]
        %v3675 = vld [vmem:[%s302 + $0x3e] sm:$0xff]
        %v3676 = vld [vmem:[%s302 + $0x46] sm:$0xff]
        %v3677 = vld [vmem:[%s302 + $0x4e] sm:$0xff]
        %v3678 = vld [vmem:[%s302 + $0x56] sm:$0xff]
        %v3679 = vld [vmem:[%s302 + $0x5e] sm:$0xff]
        %v3680 = vld [vmem:[%s302 + $0x66] sm:$0xff]
        %v3681 = vld [vmem:[%s302 + $0x6e] sm:$0xff]
        %v3682 = vld [vmem:[%s302 + $0x76] sm:$0xff]
        %v3683 = vld [vmem:[%s302 + $0x7e] sm:$0xff]
        %v3684 = vld [vmem:[%s302 + $0x86] sm:$0xff]
        %v3685 = vld [vmem:[%s302 + $0x8e] sm:$0xff]
        %v3686 = vld [vmem:[%s302 + $0x96] sm:$0xff]
        %v3687 = vld [vmem:[%s302 + $0x9e] sm:$0xff]
        %v3688 = vld [vmem:[%s302 + $0xa6] sm:$0xff]
        %v3689 = vld [vmem:[%s302 + $0xae] sm:$0xff]
        %v3690 = vld [vmem:[%s302 + $0xb6] sm:$0xff]
        %v3691 = vld [vmem:[%s302 + $0xbe] sm:$0xff]
        %v3692 = vld [vmem:[%s302 + $0xc6] sm:$0xff]
        %v3693 = vld [vmem:[%s302 + $0xce] sm:$0xff]
        %v3694 = vld [vmem:[%s302 + $0xd6] sm:$0xff]
        %v3695 = vld [vmem:[%s302 + $0xde] sm:$0xff]
        %v3696 = vld [vmem:[%s302 + $0xe6] sm:$0xff]
        %v3697 = vld [vmem:[%s302 + $0xee] sm:$0xff]
        %v3698 = vld [vmem:[%s302 + $0xf6] sm:$0xff]
        %v3699 = vld [vmem:[%s302 + $0xfe] sm:$0xff]
        %v3700 = vld [vmem:[%s302 + $0x106] sm:$0xff]
        %v3701 = vld [vmem:[%s302 + $0x10e] sm:$0xff]
        %v3702 = vld [vmem:[%s302 + $0x116] sm:$0xff]
        %v3703 = vld [vmem:[%s302 + $0x11e] sm:$0xff]
        %v3704 = vld [vmem:[%s302 + $0x126] sm:$0xff]
        %v3705 = vld [vmem:[%s302 + $0x12e] sm:$0xff]
        %v3706 = vld [vmem:[%s302 + $0x136] sm:$0xff]
        %v3707 = vld [vmem:[%s302 + $0x13e] sm:$0xff]
        %s3708 = scalar_lea.vmem %s2, 32
        %v3709 = vld [vmem:[%s3708] sm:$0xf]
        %v3711 = vsel %vm378, %v3672, 0
        %v3714 = vsel %vm378, %v3673, 0
        %v3717 = vsel %vm378, %v3674, 0
        %v3720 = vsel %vm378, %v3675, 0
        %v3723 = vsel %vm378, %v3676, 0
        %v3726 = vsel %vm378, %v3677, 0
        %v3729 = vsel %vm378, %v3678, 0
        %v3732 = vsel %vm378, %v3679, 0
        %v3735 = vsel %vm378, %v3680, 0
        %v3738 = vsel %vm378, %v3681, 0
        %v3741 = vsel %vm378, %v3682, 0
        %v3744 = vsel %vm378, %v3683, 0
        %v3747 = vsel %vm378, %v3684, 0
        %v3750 = vsel %vm378, %v3685, 0
        %v3753 = vsel %vm378, %v3686, 0
        %v3756 = vsel %vm378, %v3687, 0
        %v3759 = vsel %vm378, %v3688, 0
        %v3762 = vsel %vm378, %v3689, 0
        %v3765 = vsel %vm378, %v3690, 0
        %v3768 = vsel %vm378, %v3691, 0
        %v3771 = vsel %vm378, %v3692, 0
        %v3774 = vsel %vm378, %v3693, 0
        %v3777 = vsel %vm378, %v3694, 0
        %v3780 = vsel %vm378, %v3695, 0
        %v3783 = vsel %vm378, %v3696, 0
        %v3786 = vsel %vm378, %v3697, 0
        %v3789 = vsel %vm378, %v3698, 0
        %v3792 = vsel %vm378, %v3699, 0
        %v3795 = vsel %vm378, %v3700, 0
        %v3798 = vsel %vm378, %v3701, 0
        %v3801 = vsel %vm378, %v3702, 0
        %v3804 = vsel %vm378, %v3703, 0
        %v3807 = vsel %vm378, %v3704, 0
        %v3810 = vsel %vm378, %v3705, 0
        %v3813 = vsel %vm378, %v3706, 0
        %v3816 = vsel %vm378, %v3707, 0
        %v3819 = vsel %vm487, %v3709, 0
        %3821 = vmatprep.subr.mxu0 0.0
        %3822 = vmatpush1.msra.mxu0 0.0
        %3823 = vmatprep.subr.mxu0 0.0
        %3824 = vmatpush1.msra.mxu0 0.0
        %3825 = vmatprep.subr.mxu0 0.0
        %3826 = vmatpush1.msra.mxu0 0.0
        %3827 = vmatprep.subr.mxu0 0.0
        %3828 = vmatpush1.msra.mxu0 0.0
        %3829 = vmatprep.subr.mxu0 0.0
        %3830 = vmatpush1.msra.mxu0 0.0
        %3831 = vmatprep.subr.mxu0 0.0
        %3832 = vmatpush1.msra.mxu0 0.0
        %3833 = vmatprep.subr.mxu0 0.0
        %3834 = vmatpush1.msra.mxu0 0.0
        %3835 = vmatprep.subr.mxu0 0.0
        %3836 = vmatpush1.msra.mxu0 0.0
        %3837 = vmatprep.subr.mxu0 0.0
        %3838 = vmatpush1.msra.mxu0 0.0
        %3839 = vmatprep.subr.mxu0 0.0
        %3840 = vmatpush1.msra.mxu0 0.0
        %3841 = vmatprep.subr.mxu0 0.0
        %3842 = vmatpush1.msra.mxu0 0.0
        %3843 = vmatprep.subr.mxu0 0.0
        %3844 = vmatpush1.msra.mxu0 0.0
        %3845 = vmatprep.subr.mxu0 0.0
        %3846 = vmatpush1.msra.mxu0 0.0
        %3847 = vmatprep.subr.mxu0 0.0
        %3848 = vmatpush1.msra.mxu0 0.0
        %3849 = vmatprep.subr.mxu0 0.0
        %3850 = vmatpush1.msra.mxu0 0.0
        %3851 = vmatprep.subr.mxu0 0.0
        %3852 = vmatpush1.msra.mxu0 %v3819
        %3853 = vmatprep.subr.mxu0 0.0
        %3854 = vmatpush2.msra.mxu0 0.0
        %3855 = vmatprep.subr.mxu0 0.0
        %3856 = vmatpush2.msra.mxu0 0.0
        %3857 = vmatprep.subr.mxu0 0.0
        %3858 = vmatpush2.msra.mxu0 0.0
        %3859 = vmatprep.subr.mxu0 0.0
        %3860 = vmatpush2.msra.mxu0 0.0
        %3861 = vmatprep.subr.mxu0 0.0
        %3862 = vmatpush2.msra.mxu0 0.0
        %3863 = vmatprep.subr.mxu0 0.0
        %3864 = vmatpush2.msra.mxu0 0.0
        %3865 = vmatprep.subr.mxu0 0.0
        %3866 = vmatpush2.msra.mxu0 0.0
        %3867 = vmatprep.subr.mxu0 0.0
        %3868 = vmatpush2.msra.mxu0 0.0
        %3869 = vmatprep.subr.mxu0 0.0
        %3870 = vmatpush2.msra.mxu0 0.0
        %3871 = vmatprep.subr.mxu0 0.0
        %3872 = vmatpush2.msra.mxu0 0.0
        %3873 = vmatprep.subr.mxu0 0.0
        %3874 = vmatpush2.msra.mxu0 0.0
        %3875 = vmatprep.subr.mxu0 0.0
        %3876 = vmatpush2.msra.mxu0 0.0
        %3877 = vmatprep.subr.mxu0 0.0
        %3878 = vmatpush2.msra.mxu0 0.0
        %3879 = vmatprep.subr.mxu0 0.0
        %3880 = vmatpush2.msra.mxu0 0.0
        %3881 = vmatprep.subr.mxu0 0.0
        %3882 = vmatpush2.msra.mxu0 0.0
        %3883 = vmatprep.subr.mxu0 0.0
        %3884 = vmatpush2.msra.mxu0 0.0
        %3885 = vmatprep.mubr.f32.mxu0 0.0
        %3886 = vmatmul.mubr.f32.gmra.mxu0 %v3711
        %v3887 = vpop.f32.mrf.mxu0
        %v3888 = vadd.f32 0.0, %v3887
        %v3889 = vpop.f32.mrf.mxu0
        %3890 = vmatprep.mubr.f32.mxu0 0.0
        %3891 = vmatmul.mubr.f32.gmra.mxu0 %v3714
        %v3892 = vpop.f32.mrf.mxu0
        %v3893 = vadd.f32 0.0, %v3892
        %v3894 = vpop.f32.mrf.mxu0
        %3895 = vmatprep.mubr.f32.mxu0 0.0
        %3896 = vmatmul.mubr.f32.gmra.mxu0 %v3717
        %v3897 = vpop.f32.mrf.mxu0
        %v3898 = vadd.f32 0.0, %v3897
        %v3899 = vpop.f32.mrf.mxu0
        %3900 = vmatprep.mubr.f32.mxu0 0.0
        %3901 = vmatmul.mubr.f32.gmra.mxu0 %v3720
        %v3902 = vpop.f32.mrf.mxu0
        %v3903 = vadd.f32 0.0, %v3902
        %v3904 = vpop.f32.mrf.mxu0
        %3905 = vmatprep.mubr.f32.mxu0 0.0
        %3906 = vmatmul.mubr.f32.gmra.mxu0 %v3723
        %v3907 = vpop.f32.mrf.mxu0
        %v3908 = vadd.f32 0.0, %v3907
        %v3909 = vpop.f32.mrf.mxu0
        %3910 = vmatprep.mubr.f32.mxu0 0.0
        %3911 = vmatmul.mubr.f32.gmra.mxu0 %v3726
        %v3912 = vpop.f32.mrf.mxu0
        %v3913 = vadd.f32 0.0, %v3912
        %v3914 = vpop.f32.mrf.mxu0
        %3915 = vmatprep.mubr.f32.mxu0 0.0
        %3916 = vmatmul.mubr.f32.gmra.mxu0 %v3729
        %v3917 = vpop.f32.mrf.mxu0
        %v3918 = vadd.f32 0.0, %v3917
        %v3919 = vpop.f32.mrf.mxu0
        %3920 = vmatprep.mubr.f32.mxu0 0.0
        %3921 = vmatmul.mubr.f32.gmra.mxu0 %v3732
        %v3922 = vpop.f32.mrf.mxu0
        %v3923 = vadd.f32 0.0, %v3922
        %v3924 = vpop.f32.mrf.mxu0
        %3925 = vmatprep.mubr.f32.mxu0 0.0
        %3926 = vmatmul.mubr.f32.gmra.mxu0 %v3735
        %v3927 = vpop.f32.mrf.mxu0
        %v3928 = vadd.f32 0.0, %v3927
        %v3929 = vpop.f32.mrf.mxu0
        %3930 = vmatprep.mubr.f32.mxu0 0.0
        %3931 = vmatmul.mubr.f32.gmra.mxu0 %v3738
        %v3932 = vpop.f32.mrf.mxu0
        %v3933 = vadd.f32 0.0, %v3932
        %v3934 = vpop.f32.mrf.mxu0
        %3935 = vmatprep.mubr.f32.mxu0 0.0
        %3936 = vmatmul.mubr.f32.gmra.mxu0 %v3741
        %v3937 = vpop.f32.mrf.mxu0
        %v3938 = vadd.f32 0.0, %v3937
        %v3939 = vpop.f32.mrf.mxu0
        %3940 = vmatprep.mubr.f32.mxu0 0.0
        %3941 = vmatmul.mubr.f32.gmra.mxu0 %v3744
        %v3942 = vpop.f32.mrf.mxu0
        %v3943 = vadd.f32 0.0, %v3942
        %v3944 = vpop.f32.mrf.mxu0
        %3945 = vmatprep.mubr.f32.mxu0 0.0
        %3946 = vmatmul.mubr.f32.gmra.mxu0 %v3747
        %v3947 = vpop.f32.mrf.mxu0
        %v3948 = vadd.f32 0.0, %v3947
        %v3949 = vpop.f32.mrf.mxu0
        %3950 = vmatprep.mubr.f32.mxu0 0.0
        %3951 = vmatmul.mubr.f32.gmra.mxu0 %v3750
        %v3952 = vpop.f32.mrf.mxu0
        %v3953 = vadd.f32 0.0, %v3952
        %v3954 = vpop.f32.mrf.mxu0
        %3955 = vmatprep.mubr.f32.mxu0 0.0
        %3956 = vmatmul.mubr.f32.gmra.mxu0 %v3753
        %v3957 = vpop.f32.mrf.mxu0
        %v3958 = vadd.f32 0.0, %v3957
        %v3959 = vpop.f32.mrf.mxu0
        %3960 = vmatprep.mubr.f32.mxu0 0.0
        %3961 = vmatmul.mubr.f32.gmra.mxu0 %v3756
        %v3962 = vpop.f32.mrf.mxu0
        %v3963 = vadd.f32 0.0, %v3962
        %v3964 = vpop.f32.mrf.mxu0
        %3965 = vmatprep.mubr.f32.mxu0 0.0
        %3966 = vmatmul.mubr.f32.gmra.mxu0 %v3759
        %v3967 = vpop.f32.mrf.mxu0
        %v3968 = vadd.f32 0.0, %v3967
        %v3969 = vpop.f32.mrf.mxu0
        %3970 = vmatprep.mubr.f32.mxu0 0.0
        %3971 = vmatmul.mubr.f32.gmra.mxu0 %v3762
        %v3972 = vpop.f32.mrf.mxu0
        %v3973 = vadd.f32 0.0, %v3972
        %v3974 = vpop.f32.mrf.mxu0
        %3975 = vmatprep.mubr.f32.mxu0 0.0
        %3976 = vmatmul.mubr.f32.gmra.mxu0 %v3765
        %v3977 = vpop.f32.mrf.mxu0
        %v3978 = vadd.f32 0.0, %v3977
        %v3979 = vpop.f32.mrf.mxu0
        %3980 = vmatprep.mubr.f32.mxu0 0.0
        %3981 = vmatmul.mubr.f32.gmra.mxu0 %v3768
        %v3982 = vpop.f32.mrf.mxu0
        %v3983 = vadd.f32 0.0, %v3982
        %v3984 = vpop.f32.mrf.mxu0
        %3985 = vmatprep.mubr.f32.mxu0 0.0
        %3986 = vmatmul.mubr.f32.gmra.mxu0 %v3771
        %v3987 = vpop.f32.mrf.mxu0
        %v3988 = vadd.f32 0.0, %v3987
        %v3989 = vpop.f32.mrf.mxu0
        %3990 = vmatprep.mubr.f32.mxu0 0.0
        %3991 = vmatmul.mubr.f32.gmra.mxu0 %v3774
        %v3992 = vpop.f32.mrf.mxu0
        %v3993 = vadd.f32 0.0, %v3992
        %v3994 = vpop.f32.mrf.mxu0
        %3995 = vmatprep.mubr.f32.mxu0 0.0
        %3996 = vmatmul.mubr.f32.gmra.mxu0 %v3777
        %v3997 = vpop.f32.mrf.mxu0
        %v3998 = vadd.f32 0.0, %v3997
        %v3999 = vpop.f32.mrf.mxu0
        %4000 = vmatprep.mubr.f32.mxu0 0.0
        %4001 = vmatmul.mubr.f32.gmra.mxu0 %v3780
        %v4002 = vpop.f32.mrf.mxu0
        %v4003 = vadd.f32 0.0, %v4002
        %v4004 = vpop.f32.mrf.mxu0
        %4005 = vmatprep.mubr.f32.mxu0 0.0
        %4006 = vmatmul.mubr.f32.gmra.mxu0 %v3783
        %v4007 = vpop.f32.mrf.mxu0
        %v4008 = vadd.f32 0.0, %v4007
        %v4009 = vpop.f32.mrf.mxu0
        %4010 = vmatprep.mubr.f32.mxu0 0.0
        %4011 = vmatmul.mubr.f32.gmra.mxu0 %v3786
        %v4012 = vpop.f32.mrf.mxu0
        %v4013 = vadd.f32 0.0, %v4012
        %v4014 = vpop.f32.mrf.mxu0
        %4015 = vmatprep.mubr.f32.mxu0 0.0
        %4016 = vmatmul.mubr.f32.gmra.mxu0 %v3789
        %v4017 = vpop.f32.mrf.mxu0
        %v4018 = vadd.f32 0.0, %v4017
        %v4019 = vpop.f32.mrf.mxu0
        %4020 = vmatprep.mubr.f32.mxu0 0.0
        %4021 = vmatmul.mubr.f32.gmra.mxu0 %v3792
        %v4022 = vpop.f32.mrf.mxu0
        %v4023 = vadd.f32 0.0, %v4022
        %v4024 = vpop.f32.mrf.mxu0
        %4025 = vmatprep.mubr.f32.mxu0 0.0
        %4026 = vmatmul.mubr.f32.gmra.mxu0 %v3795
        %v4027 = vpop.f32.mrf.mxu0
        %v4028 = vadd.f32 0.0, %v4027
        %v4029 = vpop.f32.mrf.mxu0
        %4030 = vmatprep.mubr.f32.mxu0 0.0
        %4031 = vmatmul.mubr.f32.gmra.mxu0 %v3798
        %v4032 = vpop.f32.mrf.mxu0
        %v4033 = vadd.f32 0.0, %v4032
        %v4034 = vpop.f32.mrf.mxu0
        %4035 = vmatprep.mubr.f32.mxu0 0.0
        %4036 = vmatmul.mubr.f32.gmra.mxu0 %v3801
        %v4037 = vpop.f32.mrf.mxu0
        %v4038 = vadd.f32 0.0, %v4037
        %v4039 = vpop.f32.mrf.mxu0
        %4040 = vmatprep.mubr.f32.mxu0 0.0
        %4041 = vmatmul.mubr.f32.gmra.mxu0 %v3804
        %v4042 = vpop.f32.mrf.mxu0
        %v4043 = vadd.f32 0.0, %v4042
        %v4044 = vpop.f32.mrf.mxu0
        %4045 = vmatprep.mubr.f32.mxu0 0.0
        %4046 = vmatmul.mubr.f32.gmra.mxu0 %v3807
        %v4047 = vpop.f32.mrf.mxu0
        %v4048 = vadd.f32 0.0, %v4047
        %v4049 = vpop.f32.mrf.mxu0
        %4050 = vmatprep.mubr.f32.mxu0 0.0
        %4051 = vmatmul.mubr.f32.gmra.mxu0 %v3810
        %v4052 = vpop.f32.mrf.mxu0
        %v4053 = vadd.f32 0.0, %v4052
        %v4054 = vpop.f32.mrf.mxu0
        %4055 = vmatprep.mubr.f32.mxu0 0.0
        %4056 = vmatmul.mubr.f32.gmra.mxu0 %v3813
        %v4057 = vpop.f32.mrf.mxu0
        %v4058 = vadd.f32 0.0, %v4057
        %v4059 = vpop.f32.mrf.mxu0
        %4060 = vmatprep.mubr.f32.mxu0 0.0
        %4061 = vmatmul.mubr.f32.gmra.mxu0 %v3816
        %v4062 = vpop.f32.mrf.mxu0
        %v4063 = vadd.f32 0.0, %v4062
        %v4064 = vpop.f32.mrf.mxu0
        %4065 = vdwg.mxu0
        %v4066 = vadd.f32 %v3636, %v3888
        %v4067 = vadd.f32 %v3637, %v3893
        %v4068 = vadd.f32 %v3638, %v3898
        %v4069 = vadd.f32 %v3639, %v3903
        %v4070 = vadd.f32 %v3640, %v3908
        %v4071 = vadd.f32 %v3641, %v3913
        %v4072 = vadd.f32 %v3642, %v3918
        %v4073 = vadd.f32 %v3643, %v3923
        %v4074 = vadd.f32 %v3644, %v3928
        %v4075 = vadd.f32 %v3645, %v3933
        %v4076 = vadd.f32 %v3646, %v3938
        %v4077 = vadd.f32 %v3647, %v3943
        %v4078 = vadd.f32 %v3648, %v3948
        %v4079 = vadd.f32 %v3649, %v3953
        %v4080 = vadd.f32 %v3650, %v3958
        %v4081 = vadd.f32 %v3651, %v3963
        %v4082 = vadd.f32 %v3652, %v3968
        %v4083 = vadd.f32 %v3653, %v3973
        %v4084 = vadd.f32 %v3654, %v3978
        %v4085 = vadd.f32 %v3655, %v3983
        %v4086 = vadd.f32 %v3656, %v3988
        %v4087 = vadd.f32 %v3657, %v3993
        %v4088 = vadd.f32 %v3658, %v3998
        %v4089 = vadd.f32 %v3659, %v4003
        %v4090 = vadd.f32 %v3660, %v4008
        %v4091 = vadd.f32 %v3661, %v4013
        %v4092 = vadd.f32 %v3662, %v4018
        %v4093 = vadd.f32 %v3663, %v4023
        %v4094 = vadd.f32 %v3664, %v4028
        %v4095 = vadd.f32 %v3665, %v4033
        %v4096 = vadd.f32 %v3666, %v4038
        %v4097 = vadd.f32 %v3667, %v4043
        %v4098 = vadd.f32 %v3668, %v4048
        %v4099 = vadd.f32 %v3669, %v4053
        %v4100 = vadd.f32 %v3670, %v4058
        %v4101 = vadd.f32 %v3671, %v4063
        %v4102 = vld [vmem:[%s3] sm:$0x1]
        %v4104 = vlaneseq
        %v4105 = vshrl.u32 %v4104, 7
        %v4106 = vsub.s32 0, %v4105
        %v4107 = vrot.slane %v4102, %v4106
        %v4109 = vadd.f32 %v4066, %v4107
        %v4110 = vadd.f32 %v4067, %v4107
        %v4111 = vadd.f32 %v4068, %v4107
        %v4112 = vadd.f32 %v4069, %v4107
        %v4113 = vadd.f32 %v4070, %v4107
        %v4114 = vadd.f32 %v4071, %v4107
        %v4115 = vadd.f32 %v4072, %v4107
        %v4116 = vadd.f32 %v4073, %v4107
        %v4117 = vadd.f32 %v4074, %v4107
        %v4118 = vadd.f32 %v4075, %v4107
        %v4119 = vadd.f32 %v4076, %v4107
        %v4120 = vadd.f32 %v4077, %v4107
        %v4121 = vadd.f32 %v4078, %v4107
        %v4122 = vadd.f32 %v4079, %v4107
        %v4123 = vadd.f32 %v4080, %v4107
        %v4124 = vadd.f32 %v4081, %v4107
        %v4125 = vadd.f32 %v4082, %v4107
        %v4126 = vadd.f32 %v4083, %v4107
        %v4127 = vadd.f32 %v4084, %v4107
        %v4128 = vadd.f32 %v4085, %v4107
        %v4129 = vadd.f32 %v4086, %v4107
        %v4130 = vadd.f32 %v4087, %v4107
        %v4131 = vadd.f32 %v4088, %v4107
        %v4132 = vadd.f32 %v4089, %v4107
        %v4133 = vadd.f32 %v4090, %v4107
        %v4134 = vadd.f32 %v4091, %v4107
        %v4135 = vadd.f32 %v4092, %v4107
        %v4136 = vadd.f32 %v4093, %v4107
        %v4137 = vadd.f32 %v4094, %v4107
        %v4138 = vadd.f32 %v4095, %v4107
        %v4139 = vadd.f32 %v4096, %v4107
        %v4140 = vadd.f32 %v4097, %v4107
        %v4141 = vadd.f32 %v4098, %v4107
        %v4142 = vadd.f32 %v4099, %v4107
        %v4143 = vadd.f32 %v4100, %v4107
        %v4144 = vadd.f32 %v4101, %v4107
        %v4145 = vmax.f32 %v4109, 0.0
        %v4146 = vmax.f32 %v4110, 0.0
        %v4147 = vmax.f32 %v4111, 0.0
        %v4148 = vmax.f32 %v4112, 0.0
        %v4149 = vmax.f32 %v4113, 0.0
        %v4150 = vmax.f32 %v4114, 0.0
        %v4151 = vmax.f32 %v4115, 0.0
        %v4152 = vmax.f32 %v4116, 0.0
        %v4153 = vmax.f32 %v4117, 0.0
        %v4154 = vmax.f32 %v4118, 0.0
        %v4155 = vmax.f32 %v4119, 0.0
        %v4156 = vmax.f32 %v4120, 0.0
        %v4157 = vmax.f32 %v4121, 0.0
        %v4158 = vmax.f32 %v4122, 0.0
        %v4159 = vmax.f32 %v4123, 0.0
        %v4160 = vmax.f32 %v4124, 0.0
        %v4161 = vmax.f32 %v4125, 0.0
        %v4162 = vmax.f32 %v4126, 0.0
        %v4163 = vmax.f32 %v4127, 0.0
        %v4164 = vmax.f32 %v4128, 0.0
        %v4165 = vmax.f32 %v4129, 0.0
        %v4166 = vmax.f32 %v4130, 0.0
        %v4167 = vmax.f32 %v4131, 0.0
        %v4168 = vmax.f32 %v4132, 0.0
        %v4169 = vmax.f32 %v4133, 0.0
        %v4170 = vmax.f32 %v4134, 0.0
        %v4171 = vmax.f32 %v4135, 0.0
        %v4172 = vmax.f32 %v4136, 0.0
        %v4173 = vmax.f32 %v4137, 0.0
        %v4174 = vmax.f32 %v4138, 0.0
        %v4175 = vmax.f32 %v4139, 0.0
        %v4176 = vmax.f32 %v4140, 0.0
        %v4177 = vmax.f32 %v4141, 0.0
        %v4178 = vmax.f32 %v4142, 0.0
        %v4179 = vmax.f32 %v4143, 0.0
        %v4180 = vmax.f32 %v4144, 0.0
        %v4181 = vld [vmem:[%s1] sm:$0x7]
        %v4183 = vlaneseq
        %v4184 = vshrl.u32 %v4183, 7
        %v4185 = vsub.s32 0, %v4184
        %v4186 = vrot.slane %v4181, %v4185
        %v4187 = vlaneseq
        %v4188 = vshrl.u32 %v4187, 7
        %v4189 = vsub.s32 1, %v4188
        %v4190 = vrot.slane %v4181, %v4189
        %v4191 = vlaneseq
        %v4192 = vshrl.u32 %v4191, 7
        %v4193 = vsub.s32 2, %v4192
        %v4194 = vrot.slane %v4181, %v4193
        %vm4197 = vcmask 261120
        %v4198 = vsel %vm4197, %v4194, 0
        %4200 = vmatprep.subr.mxu0 0.0
        %4201 = vmatpush1.msra.mxu0 %v4160
        %4202 = vmatprep.subr.mxu0 0.0
        %4203 = vmatpush1.msra.mxu0 %v4159
        %4204 = vmatprep.subr.mxu0 0.0
        %4205 = vmatpush1.msra.mxu0 %v4158
        %4206 = vmatprep.subr.mxu0 0.0
        %4207 = vmatpush1.msra.mxu0 %v4157
        %4208 = vmatprep.subr.mxu0 0.0
        %4209 = vmatpush1.msra.mxu0 %v4156
        %4210 = vmatprep.subr.mxu0 0.0
        %4211 = vmatpush1.msra.mxu0 %v4155
        %4212 = vmatprep.subr.mxu0 0.0
        %4213 = vmatpush1.msra.mxu0 %v4154
        %4214 = vmatprep.subr.mxu0 0.0
        %4215 = vmatpush1.msra.mxu0 %v4153
        %4216 = vmatprep.subr.mxu0 0.0
        %4217 = vmatpush1.msra.mxu0 %v4152
        %4218 = vmatprep.subr.mxu0 0.0
        %4219 = vmatpush1.msra.mxu0 %v4151
        %4220 = vmatprep.subr.mxu0 0.0
        %4221 = vmatpush1.msra.mxu0 %v4150
        %4222 = vmatprep.subr.mxu0 0.0
        %4223 = vmatpush1.msra.mxu0 %v4149
        %4224 = vmatprep.subr.mxu0 0.0
        %4225 = vmatpush1.msra.mxu0 %v4148
        %4226 = vmatprep.subr.mxu0 0.0
        %4227 = vmatpush1.msra.mxu0 %v4147
        %4228 = vmatprep.subr.mxu0 0.0
        %4229 = vmatpush1.msra.mxu0 %v4146
        %4230 = vmatprep.subr.mxu0 0.0
        %4231 = vmatpush1.msra.mxu0 %v4145
        %4232 = vmatprep.subr.mxu0 0.0
        %4233 = vmatpush2.msra.mxu0 %v4176
        %4234 = vmatprep.subr.mxu0 0.0
        %4235 = vmatpush2.msra.mxu0 %v4175
        %4236 = vmatprep.subr.mxu0 0.0
        %4237 = vmatpush2.msra.mxu0 %v4174
        %4238 = vmatprep.subr.mxu0 0.0
        %4239 = vmatpush2.msra.mxu0 %v4173
        %4240 = vmatprep.subr.mxu0 0.0
        %4241 = vmatpush2.msra.mxu0 %v4172
        %4242 = vmatprep.subr.mxu0 0.0
        %4243 = vmatpush2.msra.mxu0 %v4171
        %4244 = vmatprep.subr.mxu0 0.0
        %4245 = vmatpush2.msra.mxu0 %v4170
        %4246 = vmatprep.subr.mxu0 0.0
        %4247 = vmatpush2.msra.mxu0 %v4169
        %4248 = vmatprep.subr.mxu0 0.0
        %4249 = vmatpush2.msra.mxu0 %v4168
        %4250 = vmatprep.subr.mxu0 0.0
        %4251 = vmatpush2.msra.mxu0 %v4167
        %4252 = vmatprep.subr.mxu0 0.0
        %4253 = vmatpush2.msra.mxu0 %v4166
        %4254 = vmatprep.subr.mxu0 0.0
        %4255 = vmatpush2.msra.mxu0 %v4165
        %4256 = vmatprep.subr.mxu0 0.0
        %4257 = vmatpush2.msra.mxu0 %v4164
        %4258 = vmatprep.subr.mxu0 0.0
        %4259 = vmatpush2.msra.mxu0 %v4163
        %4260 = vmatprep.subr.mxu0 0.0
        %4261 = vmatpush2.msra.mxu0 %v4162
        %4262 = vmatprep.subr.mxu0 0.0
        %4263 = vmatpush2.msra.mxu0 %v4161
        %4264 = vmatprep.mubr.f32.mxu0 %v4190
        %4265 = vmatmul.mubr.f32.gmra.mxu0 %v4186
        %v4266 = vpop.f32.mrf.mxu0
        %v4267 = vadd.f32 0.0, %v4266
        %v4268 = vpop.f32.mrf.mxu0
        %4269 = vdwg.mxu0
        %4270 = vmatprep.subr.mxu0 0.0
        %4271 = vmatpush1.msra.mxu0 0.0
        %4272 = vmatprep.subr.mxu0 0.0
        %4273 = vmatpush1.msra.mxu0 0.0
        %4274 = vmatprep.subr.mxu0 0.0
        %4275 = vmatpush1.msra.mxu0 0.0
        %4276 = vmatprep.subr.mxu0 0.0
        %4277 = vmatpush1.msra.mxu0 0.0
        %4278 = vmatprep.subr.mxu0 0.0
        %4279 = vmatpush1.msra.mxu0 0.0
        %4280 = vmatprep.subr.mxu0 0.0
        %4281 = vmatpush1.msra.mxu0 0.0
        %4282 = vmatprep.subr.mxu0 0.0
        %4283 = vmatpush1.msra.mxu0 0.0
        %4284 = vmatprep.subr.mxu0 0.0
        %4285 = vmatpush1.msra.mxu0 0.0
        %4286 = vmatprep.subr.mxu0 0.0
        %4287 = vmatpush1.msra.mxu0 0.0
        %4288 = vmatprep.subr.mxu0 0.0
        %4289 = vmatpush1.msra.mxu0 0.0
        %4290 = vmatprep.subr.mxu0 0.0
        %4291 = vmatpush1.msra.mxu0 0.0
        %4292 = vmatprep.subr.mxu0 0.0
        %4293 = vmatpush1.msra.mxu0 0.0
        %4294 = vmatprep.subr.mxu0 0.0
        %4295 = vmatpush1.msra.mxu0 %v4180
        %4296 = vmatprep.subr.mxu0 0.0
        %4297 = vmatpush1.msra.mxu0 %v4179
        %4298 = vmatprep.subr.mxu0 0.0
        %4299 = vmatpush1.msra.mxu0 %v4178
        %4300 = vmatprep.subr.mxu0 0.0
        %4301 = vmatpush1.msra.mxu0 %v4177
        %4302 = vmatprep.subr.mxu0 0.0
        %4303 = vmatpush2.msra.mxu0 0.0
        %4304 = vmatprep.subr.mxu0 0.0
        %4305 = vmatpush2.msra.mxu0 0.0
        %4306 = vmatprep.subr.mxu0 0.0
        %4307 = vmatpush2.msra.mxu0 0.0
        %4308 = vmatprep.subr.mxu0 0.0
        %4309 = vmatpush2.msra.mxu0 0.0
        %4310 = vmatprep.subr.mxu0 0.0
        %4311 = vmatpush2.msra.mxu0 0.0
        %4312 = vmatprep.subr.mxu0 0.0
        %4313 = vmatpush2.msra.mxu0 0.0
        %4314 = vmatprep.subr.mxu0 0.0
        %4315 = vmatpush2.msra.mxu0 0.0
        %4316 = vmatprep.subr.mxu0 0.0
        %4317 = vmatpush2.msra.mxu0 0.0
        %4318 = vmatprep.subr.mxu0 0.0
        %4319 = vmatpush2.msra.mxu0 0.0
        %4320 = vmatprep.subr.mxu0 0.0
        %4321 = vmatpush2.msra.mxu0 0.0
        %4322 = vmatprep.subr.mxu0 0.0
        %4323 = vmatpush2.msra.mxu0 0.0
        %4324 = vmatprep.subr.mxu0 0.0
        %4325 = vmatpush2.msra.mxu0 0.0
        %4326 = vmatprep.subr.mxu0 0.0
        %4327 = vmatpush2.msra.mxu0 0.0
        %4328 = vmatprep.subr.mxu0 0.0
        %4329 = vmatpush2.msra.mxu0 0.0
        %4330 = vmatprep.subr.mxu0 0.0
        %4331 = vmatpush2.msra.mxu0 0.0
        %4332 = vmatprep.subr.mxu0 0.0
        %4333 = vmatpush2.msra.mxu0 0.0
        %4334 = vmatprep.mubr.f32.mxu0 0.0
        %4335 = vmatmul.mubr.f32.gmra.mxu0 %v4198
        %v4336 = vpop.f32.mrf.mxu0
        %v4337 = vadd.f32 %v4267, %v4336
        %v4338 = vpop.f32.mrf.mxu0
        %4339 = vdwg.mxu0
        %v4340 = vld [vmem:[%s4] sm:$0xff]
        %v4341 = vld [vmem:[%s4 + $0x8] sm:$0xff]
        %v4342 = vld [vmem:[%s4 + $0x10] sm:$0xff]
        %v4343 = vld [vmem:[%s4 + $0x18] sm:$0xff]
        %v4344 = vld [vmem:[%s5] sm:$0x1]
        %v4346 = vsel %vm4197, %v4337, 0
        %4348 = vmatprep.subr.mxu0 0.0
        %4349 = vmatpush1.msra.mxu0 0.0
        %4350 = vmatprep.subr.mxu0 0.0
        %4351 = vmatpush1.msra.mxu0 0.0
        %4352 = vmatprep.subr.mxu0 0.0
        %4353 = vmatpush1.msra.mxu0 0.0
        %4354 = vmatprep.subr.mxu0 0.0
        %4355 = vmatpush1.msra.mxu0 0.0
        %4356 = vmatprep.subr.mxu0 0.0
        %4357 = vmatpush1.msra.mxu0 0.0
        %4358 = vmatprep.subr.mxu0 0.0
        %4359 = vmatpush1.msra.mxu0 0.0
        %4360 = vmatprep.subr.mxu0 0.0
        %4361 = vmatpush1.msra.mxu0 0.0
        %4362 = vmatprep.subr.mxu0 0.0
        %4363 = vmatpush1.msra.mxu0 0.0
        %4364 = vmatprep.subr.mxu0 0.0
        %4365 = vmatpush1.msra.mxu0 0.0
        %4366 = vmatprep.subr.mxu0 0.0
        %4367 = vmatpush1.msra.mxu0 0.0
        %4368 = vmatprep.subr.mxu0 0.0
        %4369 = vmatpush1.msra.mxu0 0.0
        %4370 = vmatprep.subr.mxu0 0.0
        %4371 = vmatpush1.msra.mxu0 0.0
        %4372 = vmatprep.subr.mxu0 0.0
        %4373 = vmatpush1.msra.mxu0 %v4343
        %4374 = vmatprep.subr.mxu0 0.0
        %4375 = vmatpush1.msra.mxu0 %v4342
        %4376 = vmatprep.subr.mxu0 0.0
        %4377 = vmatpush1.msra.mxu0 %v4341
        %4378 = vmatprep.subr.mxu0 0.0
        %4379 = vmatpush1.msra.mxu0 %v4340
        %4380 = vmatprep.subr.mxu0 0.0
        %4381 = vmatpush2.msra.mxu0 0.0
        %4382 = vmatprep.subr.mxu0 0.0
        %4383 = vmatpush2.msra.mxu0 0.0
        %4384 = vmatprep.subr.mxu0 0.0
        %4385 = vmatpush2.msra.mxu0 0.0
        %4386 = vmatprep.subr.mxu0 0.0
        %4387 = vmatpush2.msra.mxu0 0.0
        %4388 = vmatprep.subr.mxu0 0.0
        %4389 = vmatpush2.msra.mxu0 0.0
        %4390 = vmatprep.subr.mxu0 0.0
        %4391 = vmatpush2.msra.mxu0 0.0
        %4392 = vmatprep.subr.mxu0 0.0
        %4393 = vmatpush2.msra.mxu0 0.0
        %4394 = vmatprep.subr.mxu0 0.0
        %4395 = vmatpush2.msra.mxu0 0.0
        %4396 = vmatprep.subr.mxu0 0.0
        %4397 = vmatpush2.msra.mxu0 0.0
        %4398 = vmatprep.subr.mxu0 0.0
        %4399 = vmatpush2.msra.mxu0 0.0
        %4400 = vmatprep.subr.mxu0 0.0
        %4401 = vmatpush2.msra.mxu0 0.0
        %4402 = vmatprep.subr.mxu0 0.0
        %4403 = vmatpush2.msra.mxu0 0.0
        %4404 = vmatprep.subr.mxu0 0.0
        %4405 = vmatpush2.msra.mxu0 0.0
        %4406 = vmatprep.subr.mxu0 0.0
        %4407 = vmatpush2.msra.mxu0 0.0
        %4408 = vmatprep.subr.mxu0 0.0
        %4409 = vmatpush2.msra.mxu0 0.0
        %4410 = vmatprep.subr.mxu0 0.0
        %4411 = vmatpush2.msra.mxu0 0.0
        %4412 = vmatprep.mubr.f32.mxu0 0.0
        %4413 = vmatmul.mubr.f32.gmra.mxu0 %v4346
        %v4414 = vpop.f32.mrf.mxu0
        %v4415 = vadd.f32 %v4344, %v4414
        %v4416 = vpop.f32.mrf.mxu0
        %4417 = vdwg.mxu0
        %v4418 = vld [vmem:[%s6] sm:$0xff]
        %v4419 = vld [vmem:[%s6 + $0x8] sm:$0xff]
        %v4420 = vld [vmem:[%s7] sm:$0x1]
        %vm4421 = vcmask 130048
        %v4423 = vsel %vm4421, %v4415, 0
        %4425 = vmatprep.subr.mxu0 0.0
        %4426 = vmatpush1.msra.mxu0 0.0
        %4427 = vmatprep.subr.mxu0 0.0
        %4428 = vmatpush1.msra.mxu0 0.0
        %4429 = vmatprep.subr.mxu0 0.0
        %4430 = vmatpush1.msra.mxu0 0.0
        %4431 = vmatprep.subr.mxu0 0.0
        %4432 = vmatpush1.msra.mxu0 0.0
        %4433 = vmatprep.subr.mxu0 0.0
        %4434 = vmatpush1.msra.mxu0 0.0
        %4435 = vmatprep.subr.mxu0 0.0
        %4436 = vmatpush1.msra.mxu0 0.0
        %4437 = vmatprep.subr.mxu0 0.0
        %4438 = vmatpush1.msra.mxu0 0.0
        %4439 = vmatprep.subr.mxu0 0.0
        %4440 = vmatpush1.msra.mxu0 0.0
        %4441 = vmatprep.subr.mxu0 0.0
        %4442 = vmatpush1.msra.mxu0 0.0
        %4443 = vmatprep.subr.mxu0 0.0
        %4444 = vmatpush1.msra.mxu0 0.0
        %4445 = vmatprep.subr.mxu0 0.0
        %4446 = vmatpush1.msra.mxu0 0.0
        %4447 = vmatprep.subr.mxu0 0.0
        %4448 = vmatpush1.msra.mxu0 0.0
        %4449 = vmatprep.subr.mxu0 0.0
        %4450 = vmatpush1.msra.mxu0 0.0
        %4451 = vmatprep.subr.mxu0 0.0
        %4452 = vmatpush1.msra.mxu0 0.0
        %4453 = vmatprep.subr.mxu0 0.0
        %4454 = vmatpush1.msra.mxu0 %v4419
        %4455 = vmatprep.subr.mxu0 0.0
        %4456 = vmatpush1.msra.mxu0 %v4418
        %4457 = vmatprep.subr.mxu0 0.0
        %4458 = vmatpush2.msra.mxu0 0.0
        %4459 = vmatprep.subr.mxu0 0.0
        %4460 = vmatpush2.msra.mxu0 0.0
        %4461 = vmatprep.subr.mxu0 0.0
        %4462 = vmatpush2.msra.mxu0 0.0
        %4463 = vmatprep.subr.mxu0 0.0
        %4464 = vmatpush2.msra.mxu0 0.0
        %4465 = vmatprep.subr.mxu0 0.0
        %4466 = vmatpush2.msra.mxu0 0.0
        %4467 = vmatprep.subr.mxu0 0.0
        %4468 = vmatpush2.msra.mxu0 0.0
        %4469 = vmatprep.subr.mxu0 0.0
        %4470 = vmatpush2.msra.mxu0 0.0
        %4471 = vmatprep.subr.mxu0 0.0
        %4472 = vmatpush2.msra.mxu0 0.0
        %4473 = vmatprep.subr.mxu0 0.0
        %4474 = vmatpush2.msra.mxu0 0.0
        %4475 = vmatprep.subr.mxu0 0.0
        %4476 = vmatpush2.msra.mxu0 0.0
        %4477 = vmatprep.subr.mxu0 0.0
        %4478 = vmatpush2.msra.mxu0 0.0
        %4479 = vmatprep.subr.mxu0 0.0
        %4480 = vmatpush2.msra.mxu0 0.0
        %4481 = vmatprep.subr.mxu0 0.0
        %4482 = vmatpush2.msra.mxu0 0.0
        %4483 = vmatprep.subr.mxu0 0.0
        %4484 = vmatpush2.msra.mxu0 0.0
        %4485 = vmatprep.subr.mxu0 0.0
        %4486 = vmatpush2.msra.mxu0 0.0
        %4487 = vmatprep.subr.mxu0 0.0
        %4488 = vmatpush2.msra.mxu0 0.0
        %4489 = vmatprep.mubr.f32.mxu0 0.0
        %4490 = vmatmul.mubr.f32.gmra.mxu0 %v4423
        %v4491 = vpop.f32.mrf.mxu0
        %v4492 = vadd.f32 %v4420, %v4491
        %v4493 = vpop.f32.mrf.mxu0
        %4494 = vdwg.mxu0
        %4495 = vst [vmem:[%s297] sm:$0x1] %v4492
        %s4496 = sand.u32 %s203, 1
        %s4497 = scalar_lea.sflag [#allocation3], %s4496
        %s4498 = sand.u32 %s203, 1
        %s4499 = scalar_lea.vmem [#allocation2], %s4498
        // Predicated region
        $region53: #{patch_classifier_forward.1} parent=51 // pred_check
          %p4500 = pneg %p213
        $region54: #{patch_classifier_forward.1} parent=51 // pred_check_branch
          %4502 = sbr.rel (%p4500) target = $region56
        $region55: #{patch_classifier_forward.1} parent=51 // pred_region
          %s4504 = ssub.s32 16, 16
          %4505 = vsyncadd %s4497, %s4504
          %s4506 = smul.addr %s22, 16
          %s4507 = scalar_lea.hbm %s8, %s4506
          %s4509 = sshll.u32 %s4499, 4
          %s4510 = int_to_ptr.vmem [resolvable:$true] %s4509
          %4512 = dma.vmem_to_hbm [thread:$0]  %s4510, 16, %s4507, %s4497
        $region56: #{patch_classifier_forward.1} parent=51 // pred_fallthru
          _
      $region52: #{patch_classifier_forward.1} parent=5 // pred_fallthru
        _
      %p4513 = scmp.le.s32.totalorder 2, %s17
      // Predicated region
      $region57: #{patch_classifier_forward.1} parent=5 // pred_check
        %p4514 = pneg %p4513
      $region58: #{patch_classifier_forward.1} parent=5 // pred_check_branch
        %4516 = sbr.rel (%p4514) target = $region60
      $region59: #{patch_classifier_forward.1} parent=5 // pred_region
        %s4517 = ssub.s32 %s17, 2
        // Predicated region
        $region61: #{patch_classifier_forward.1} parent=59 // pred_check
          %p4518 = pneg %p219
        $region62: #{patch_classifier_forward.1} parent=59 // pred_check_branch
          %4520 = sbr.rel (%p4518) target = $region64
        $region63: #{patch_classifier_forward.1} parent=59 // pred_region
          %s4521 = sand.u32 %s204, 1
          %s4522 = scalar_lea.sflag [#allocation3], %s4521
          %s4523 = sand.u32 %s204, 1
          %s4524 = scalar_lea.vmem [#allocation2], %s4523
          %4525 = dma.done %s4522, 16
        $region64: #{patch_classifier_forward.1} parent=59 // pred_fallthru
          _
      $region60: #{patch_classifier_forward.1} parent=5 // pred_fallthru
        _
    $region6: #{patch_classifier_forward.1} parent=1 // loop_footer
      %s21 = sadd.s32 1, %s17
    $region7: #{patch_classifier_forward.1} parent=1 // loop_footer_branch
      %16 = sbr.rel target = $region3
    $region8: #{patch_classifier_forward.1} parent=1 // loop_exit
      _
    %4526 = vsyncpa [#allocation3], 1
    %s4527 = scalar_lea.sflag [#allocation3], 1
    %4528 = vsyncpa %s4527, 1

</llo_original>
